<compile_context>
chip_gen: v6e
topology: v6e:2x2x1
jax: 0.10.0
libtpu: 0.0.40
codegen_flags: <defaults>
</compile_context>

<pallas_src>
import functools

import jax
import jax.numpy as jnp
from jax import lax
from jax.experimental import pallas as pl
from jax.experimental.pallas import tpu as pltpu


def _round_up(x, m):
    return (x + m - 1) // m * m


# --------------------------------------------------------------------------- #
# Fast path: stride == 1, odd K (the configuration adv_gan actually uses)
# --------------------------------------------------------------------------- #
def _upconv_kernel(x_ref, w_ref, b_ref, *rest, K, pad, s, H, W, Ws, HWo,
                   head, Cin, Cout, nb, use_up_mm):
    """Fused nearest-upsample + same-padding conv (stride 1), nb batch elems.

    x_ref  : (nb, Cin, H*W)  (or (nb, Cin, H, W) on the large-image branch)
    w_ref  : (Cout, K*K*Cin)  im2col-ordered conv weights
    b_ref  : (Cout, 1)        bias
    r_ref  : (H*W, Hs*Ws)     0/1 fused nearest-upsample matrix (when s > 1)
    o_ref  : (nb, Cout, HWo)  output, HWo = Hout*Wout flattened on lanes
    pad_ref: (nb*Cin, L)      flat upsampled image + zero margins (conv padding)
    col_ref: (K*K*Cin, nb*HWo) im2col staging block for the single fused matmul
    """
    if s > 1:
        r_ref, o_ref, pad_ref, col_ref = rest
    else:
        o_ref, pad_ref, col_ref = rest
        r_ref = None
    f32 = jnp.float32
    L = pad_ref.shape[1]

    # (1) zero only the padding margins -- the interior is fully rewritten
    #     below, so a full-buffer memset would be pure wasted vst work.
    pad_ref[:, :head] = jnp.zeros((nb * Cin, head), f32)
    pad_ref[:, head + HWo:] = jnp.zeros((nb * Cin, L - head - HWo), f32)

    # (2) width-border masks: only K-1 distinct ones exist -> hoist them.
    lane = lax.broadcasted_iota(jnp.int32, (1, HWo), 1) % Ws
    masks = {kw: (lane >= pad - kw) & (lane < Ws + pad - kw)
             for kw in range(K) if kw != pad}

    for n in range(nb):
        # (3) nearest-neighbor upsample -> one lane-dense, 128-aligned store.
        if s == 1:
            up = x_ref[n].astype(f32)                                 # (Cin, H*W)
        elif use_up_mm:
            up = jnp.dot(x_ref[n].astype(f32), r_ref[...],
                         preferred_element_type=f32)                  # (Cin, Hs*Ws)
        else:
            # TODO(synk): large-image branch (rep matrix too big) -- width
            # upsample via matmul, one s*Ws-wide store per source row.
            xw = jnp.dot(x_ref[n].astype(f32).reshape(Cin * H, W), r_ref[...],
                         preferred_element_type=f32).reshape(Cin, H, Ws)
            for r in range(H):
                row = jnp.concatenate([xw[:, r, :]] * s, axis=-1)
                off = head + r * s * Ws
                pad_ref[n * Cin:(n + 1) * Cin, off:off + s * Ws] = row
            up = None
        if up is not None:
            pad_ref[n * Cin:(n + 1) * Cin, head:head + HWo] = up

        # (4) im2col: stack the K*K masked tap slices along sublanes.
        for kh in range(K):
            for kw in range(K):
                start = head + (kh - pad) * Ws + (kw - pad)
                patch = pad_ref[n * Cin:(n + 1) * Cin, start:start + HWo]
                if kw in masks:
                    patch = jnp.where(masks[kw], patch, 0.0)
                kk = kh * K + kw
                col_ref[kk * Cin:(kk + 1) * Cin, n * HWo:(n + 1) * HWo] = patch

    # (5) single fused matmul for all taps and all folded batch elements.
    acc = jnp.dot(w_ref[...].astype(f32), col_ref[...],
                  preferred_element_type=f32) + b_ref[...].astype(f32)

    # (6) lane-dense output stores (HWo is a multiple of 128 at the hot size).
    for n in range(nb):
        o_ref[n] = acc[:, n * HWo:(n + 1) * HWo].astype(o_ref.dtype)


def _upsample_conv_fast(x, weight, bias, *, K, s):
    N, Cin, H, W = x.shape
    Cout = weight.shape[0]
    pad = K // 2
    Hs, Ws = H * s, W * s
    HWi, HWo = H * W, Hs * Ws
    head = _round_up(pad * Ws + pad, 128)               # aligned interior start
    L = _round_up(head + HWo + pad * Ws + pad, 128)
    KKC = K * K * Cin

    # fused 0/1 upsample matrix only while it stays small (hot config: 1 MiB)
    use_up_mm = s > 1 and HWi * HWo * 4 <= (4 << 20)

    # fold the whole batch into one grid step when the footprint is small
    step_bytes = 4 * (Cin * (L + HWi) + KKC * HWo + 2 * Cout * HWo)
    nb = N if N * step_bytes <= (8 << 20) else 1
    grid = (N // nb,)

    # weights in im2col order: (Cout, Cin, K, K) -> (Cout, (kh*K+kw)*Cin + ci)
    w2 = jnp.transpose(weight, (0, 2, 3, 1)).reshape(Cout, KKC)
    b = bias.reshape(Cout, 1).astype(jnp.float32)

    if s == 1 or use_up_mm:
        x_in = x.reshape(N, Cin, HWi)                    # free contiguous reshape
        x_spec = pl.BlockSpec((nb, Cin, HWi), lambda g: (g, 0, 0))
    else:
        x_in = x
        x_spec = pl.BlockSpec((nb, Cin, H, W), lambda g: (g, 0, 0, 0))

    operands = [x_in, w2, b]
    in_specs = [x_spec,
                pl.BlockSpec((Cout, KKC), lambda g: (0, 0)),
                pl.BlockSpec((Cout, 1), lambda g: (0, 0))]
    if s > 1:
        if use_up_mm:
            o = jnp.arange(HWo)
            src = (o // Ws) // s * W + (o % Ws) // s
            rep = (src[None, :] == jnp.arange(HWi)[:, None]).astype(jnp.float32)
            in_specs.append(pl.BlockSpec((HWi, HWo), lambda g: (0, 0)))
        else:
            rep = (jnp.arange(Ws)[None, :] // s ==
                   jnp.arange(W)[:, None]).astype(jnp.float32)
            in_specs.append(pl.BlockSpec((W, Ws), lambda g: (0, 0)))
        operands.append(rep)

    kernel = functools.partial(
        _upconv_kernel, K=K, pad=pad, s=s, H=H, W=W, Ws=Ws, HWo=HWo,
        head=head, Cin=Cin, Cout=Cout, nb=nb, use_up_mm=use_up_mm)

    out = pl.pallas_call(
        kernel,
        out_shape=jax.ShapeDtypeStruct((N, Cout, HWo), x.dtype),
        grid_spec=pltpu.PrefetchScalarGridSpec(
            num_scalar_prefetch=0,
            grid=grid,
            in_specs=in_specs,
            out_specs=pl.BlockSpec((nb, Cout, HWo), lambda g: (g, 0, 0)),
            scratch_shapes=[pltpu.VMEM((nb * Cin, L), jnp.float32),
                            pltpu.VMEM((KKC, nb * HWo), jnp.float32)],
        ),
        compiler_params=pltpu.CompilerParams(dimension_semantics=("parallel",)),
    )(*operands)

    # free contiguous reshape: (N, Cout, Hout*Wout) -> NCHW
    return out.reshape(N, Cout, Hs, Ws)


# --------------------------------------------------------------------------- #
# Fallback path: stride != 1, even K, or very large images (not the hot config)
# --------------------------------------------------------------------------- #
def _conv_kernel_general(x_ref, w_ref, b_ref, o_ref, *, K, stride, Hout, Wout,
                         Cin, Cout):
    # TODO(synk): unoptimized fallback; the adv_gan generator only instantiates
    # this layer with stride=1 and odd K at small spatial sizes.
    x = x_ref[...]
    h_span = (Hout - 1) * stride + 1
    w_span = (Wout - 1) * stride + 1
    acc = jnp.zeros((Hout * Wout, Cout), jnp.float32)
    for kh in range(K):
        for kw in range(K):
            patch = x[kh:kh + h_span:stride, kw:kw + w_span:stride, :]
            acc = acc + jnp.dot(patch.reshape(Hout * Wout, Cin), w_ref[kh, kw],
                                preferred_element_type=jnp.float32)
    acc = acc + b_ref[...]
    o_ref[...] = acc.reshape(Hout, Wout, Cout).astype(o_ref.dtype)


def _upsample_conv_general(x_nchw, weight, bias, *, K, stride, s):
    N, Cin, H, W = x_nchw.shape
    Cout = weight.shape[0]
    pad = K // 2
    x = jnp.transpose(x_nchw, (0, 2, 3, 1))
    if s > 1:
        x = jnp.repeat(jnp.repeat(x, s, axis=1), s, axis=2)
        H, W = H * s, W * s
    x = jnp.pad(x, ((0, 0), (pad, pad), (pad, pad), (0, 0)))
    Hp, Wp = H + 2 * pad, W + 2 * pad
    Hout = (Hp - K) // stride + 1
    Wout = (Wp - K) // stride + 1
    w = jnp.transpose(weight, (2, 3, 1, 0))
    b = bias.reshape(1, Cout)
    kernel = functools.partial(_conv_kernel_general, K=K, stride=stride,
                               Hout=Hout, Wout=Wout, Cin=Cin, Cout=Cout)
    out_nhwc = pl.pallas_call(
        kernel,
        out_shape=jax.ShapeDtypeStruct((N, Hout, Wout, Cout), x_nchw.dtype),
        grid_spec=pltpu.PrefetchScalarGridSpec(
            num_scalar_prefetch=0,
            grid=(N,),
            in_specs=[
                pl.BlockSpec((None, Hp, Wp, Cin), lambda n: (n, 0, 0, 0)),
                pl.BlockSpec((K, K, Cin, Cout), lambda n: (0, 0, 0, 0)),
                pl.BlockSpec((1, Cout), lambda n: (0, 0)),
            ],
            out_specs=pl.BlockSpec((None, Hout, Wout, Cout), lambda n: (n, 0, 0, 0)),
        ),
        compiler_params=pltpu.CompilerParams(dimension_semantics=("parallel",)),
    )(x, w, b)
    return jnp.transpose(out_nhwc, (0, 3, 1, 2))


# --------------------------------------------------------------------------- #
# Public entry point (matches UpsampleConvLayer.forward semantics)
# --------------------------------------------------------------------------- #
def upsample_conv_layer(x_nchw, weight, bias, *, kernel_size, stride, upsample=None):
    """x_nchw: (N, Cin, H, W); weight: (Cout, Cin, K, K); bias: (Cout,)."""
    s = int(upsample) if upsample else 1
    N, Cin, H, W = x_nchw.shape
    small = (H * W) * (H * W * s * s) * 4 <= (4 << 20) or s == 1
    if stride == 1 and kernel_size % 2 == 1 and small:
        return _upsample_conv_fast(x_nchw, weight, bias, K=kernel_size, s=s)
    return _upsample_conv_general(x_nchw, weight, bias, K=kernel_size,
                                  stride=stride, s=s)


def _reference(x_nchw, weight, bias, *, kernel_size, stride, upsample=None):
    x = x_nchw
    if upsample:
        s = int(upsample)
        x = jnp.repeat(jnp.repeat(x, s, axis=2), s, axis=3)
    pad = kernel_size // 2
    out = jax.lax.conv_general_dilated(
        x, weight,
        window_strides=(stride, stride),
        padding=((pad, pad), (pad, pad)),
        dimension_numbers=("NCHW", "OIHW", "NCHW"),
    )
    return out + bias.reshape(1, -1, 1, 1)


if __name__ == "__main__":
    # Module config: UpsampleConvLayer(in_channels=4, out_channels=8,
    #                                  kernel_size=3, stride=1, upsample=2)
    in_channels, out_channels, kernel_size, stride, upsample = 4, 8, 3, 1, 2

    key = jax.random.PRNGKey(0)
    kx, kw, kb = jax.random.split(key, 3)

    fan_in = in_channels * kernel_size * kernel_size
    bound = 1.0 / (fan_in ** 0.5)
    weight = jax.random.uniform(
        kw, (out_channels, in_channels, kernel_size, kernel_size),
        minval=-bound, maxval=bound, dtype=jnp.float32)
    bias = jax.random.uniform(
        kb, (out_channels,), minval=-bound, maxval=bound, dtype=jnp.float32)

    # Input: NCHW, batch=2, channels=4, spatial=16x16
    x = jax.random.normal(kx, (2, in_channels, 16, 16), dtype=jnp.float32)

    out = upsample_conv_layer(
        x, weight, bias, kernel_size=kernel_size, stride=stride, upsample=upsample)
    out = jax.block_until_ready(out)

    ref = _reference(
        x, weight, bias, kernel_size=kernel_size, stride=stride, upsample=upsample)
    assert out.shape == (2, out_channels, 32, 32), out.shape
    assert jnp.allclose(out, ref, atol=1e-4, rtol=1e-4), "mismatch vs lax.conv reference"

    print("KERNEL_OK")
</pallas_src>

<mosaic_0001>
module attributes {stable_mosaic.version = 11 : i64} {
  func.func @_upconv_kernel(%arg0: i32, %arg1: memref<2x4x256xf32, #tpu.memory_space<vmem>>, %arg2: memref<8x36xf32, #tpu.memory_space<vmem>>, %arg3: memref<8x1xf32, #tpu.memory_space<vmem>>, %arg4: memref<256x1024xf32, #tpu.memory_space<vmem>>, %arg5: memref<2x8x1024xf32, #tpu.memory_space<vmem>>, %arg6: memref<8x1280xf32, #tpu.memory_space<vmem>>, %arg7: memref<36x2048xf32, #tpu.memory_space<vmem>>) attributes {dimension_semantics = [#tpu.dimension_semantics<parallel>], iteration_bounds = array<i64: 1>, scalar_prefetch = 0 : i64, scratch_operands = 2 : i64, tpu.core_type = #tpu.core_type<tc>, window_params = [{transform_indices = @transform_0, window_bounds = array<i64: 2, 4, 256>}, {pipeline_mode = #tpu.pipeline_mode<synchronous>, transform_indices = @transform_1, window_bounds = array<i64: 8, 36>}, {pipeline_mode = #tpu.pipeline_mode<synchronous>, transform_indices = @transform_2, window_bounds = array<i64: 8, 1>}, {pipeline_mode = #tpu.pipeline_mode<synchronous>, transform_indices = @transform_3, window_bounds = array<i64: 256, 1024>}, {transform_indices = @transform_4, window_bounds = array<i64: 2, 8, 1024>}]} {
    %cst = arith.constant 0.000000e+00 : f32
    %0 = vector.broadcast %cst : f32 to vector<8x128xf32>
    %c0 = arith.constant 0 : index
    %c0_0 = arith.constant 0 : index
    %1 = vector.load %arg6[%c0, %c0_0] : memref<8x1280xf32, #tpu.memory_space<vmem>>, vector<8x128xf32>
    tpu.vector_store %arg6[%c0, %c0_0], %0 {strides = array<i32>} : memref<8x1280xf32, #tpu.memory_space<vmem>>, vector<8x128xf32>,
    %cst_1 = arith.constant 0.000000e+00 : f32
    %2 = vector.broadcast %cst_1 : f32 to vector<8x128xf32>
    %c0_2 = arith.constant 0 : index
    %c1152 = arith.constant 1152 : index
    %3 = vector.load %arg6[%c0_2, %c1152] : memref<8x1280xf32, #tpu.memory_space<vmem>>, vector<8x128xf32>
    tpu.vector_store %arg6[%c0_2, %c1152], %2 {strides = array<i32>} : memref<8x1280xf32, #tpu.memory_space<vmem>>, vector<8x128xf32>,
    %4 = tpu.iota {dimensions = array<i32: 1>} : vector<1x1024xi32>
    %c32_i32 = arith.constant 32 : i32
    %c0_i32 = arith.constant 0 : i32
    %5 = arith.cmpi eq, %c32_i32, %c0_i32 : i32
    %c1_i32 = arith.constant 1 : i32
    %6 = arith.select %5, %c1_i32, %c32_i32 : i32
    %7 = vector.broadcast %6 : i32 to vector<1x1024xi32>
    %8 = arith.remsi %4, %7 : vector<1x1024xi32>
    %c0_i32_3 = arith.constant 0 : i32
    %9 = vector.broadcast %c0_i32_3 : i32 to vector<1x1024xi32>
    %10 = arith.cmpi ne, %8, %9 : vector<1x1024xi32>
    %c0_i32_4 = arith.constant 0 : i32
    %11 = vector.broadcast %c0_i32_4 : i32 to vector<1x1024xi32>
    %12 = arith.cmpi slt, %8, %11 : vector<1x1024xi32>
    %c0_i32_5 = arith.constant 0 : i32
    %13 = arith.cmpi slt, %6, %c0_i32_5 : i32
    %14 = vector.broadcast %13 : i1 to vector<1x1024xi1>
    %15 = vector.broadcast %14 : vector<1x1024xi1> to vector<1x1024xi1>
    %16 = arith.xori %12, %15 : vector<1x1024xi1>
    %17 = arith.andi %16, %10 : vector<1x1024xi1>
    %18 = vector.broadcast %6 : i32 to vector<1x1024xi32>
    %19 = arith.addi %8, %18 : vector<1x1024xi32>
    %20 = arith.select %17, %19, %8 : vector<1x1024xi1>, vector<1x1024xi32>
    %c1_i32_6 = arith.constant 1 : i32
    %21 = vector.broadcast %c1_i32_6 : i32 to vector<1x1024xi32>
    %22 = arith.cmpi sge, %20, %21 : vector<1x1024xi32>
    %c33_i32 = arith.constant 33 : i32
    %23 = vector.broadcast %c33_i32 : i32 to vector<1x1024xi32>
    %24 = arith.cmpi slt, %20, %23 : vector<1x1024xi32>
    %25 = arith.andi %22, %24 : vector<1x1024xi1>
    %c-1_i32 = arith.constant -1 : i32
    %26 = vector.broadcast %c-1_i32 : i32 to vector<1x1024xi32>
    %27 = arith.cmpi sge, %20, %26 : vector<1x1024xi32>
    %c31_i32 = arith.constant 31 : i32
    %28 = vector.broadcast %c31_i32 : i32 to vector<1x1024xi32>
    %29 = arith.cmpi slt, %20, %28 : vector<1x1024xi32>
    %30 = arith.andi %27, %29 : vector<1x1024xi1>
    %c0_7 = arith.constant 0 : index
    %c0_8 = arith.constant 0 : index
    %c0_9 = arith.constant 0 : index
    %31 = vector.load %arg1[%c0_7, %c0_8, %c0_9] : memref<2x4x256xf32, #tpu.memory_space<vmem>>, vector<1x4x256xf32>
    %32 = vector.shape_cast %31 : vector<1x4x256xf32> to vector<4x256xf32>
    %c0_10 = arith.constant 0 : index
    %c0_11 = arith.constant 0 : index
    %33 = vector.load %arg4[%c0_10, %c0_11] : memref<256x1024xf32, #tpu.memory_space<vmem>>, vector<256x1024xf32>
    %cst_12 = arith.constant dense<0.000000e+00> : vector<4x1024xf32>
    %34 = tpu.matmul %32, %33, %cst_12 {dimension_numbers = #tpu.dot_dimension_numbers<[1], [0], [0], [1], [0, 0, 1, 1], [], []>} : vector<4x256xf32>, vector<256x1024xf32>, vector<4x1024xf32> -> vector<4x1024xf32>
    %c0_13 = arith.constant 0 : index
    %c128 = arith.constant 128 : index
    %35 = vector.load %arg6[%c0_13, %c128] : memref<8x1280xf32, #tpu.memory_space<vmem>>, vector<4x1024xf32>
    tpu.vector_store %arg6[%c0_13, %c128], %34 {strides = array<i32>} : memref<8x1280xf32, #tpu.memory_space<vmem>>, vector<4x1024xf32>,
    %c0_14 = arith.constant 0 : index
    %c95 = arith.constant 95 : index
    %36 = vector.load %arg6[%c0_14, %c95] : memref<8x1280xf32, #tpu.memory_space<vmem>>, vector<4x1024xf32>
    %cst_15 = arith.constant 0.000000e+00 : f32
    %37 = vector.shape_cast %25 : vector<1x1024xi1> to vector<1x1024xi1>
    %38 = vector.broadcast %37 : vector<1x1024xi1> to vector<4x1024xi1>
    %39 = vector.broadcast %cst_15 : f32 to vector<4x1024xf32>
    %40 = arith.select %38, %36, %39 : vector<4x1024xi1>, vector<4x1024xf32>
    %c0_16 = arith.constant 0 : index
    %c0_17 = arith.constant 0 : index
    %41 = vector.load %arg7[%c0_16, %c0_17] : memref<36x2048xf32, #tpu.memory_space<vmem>>, vector<4x1024xf32>
    tpu.vector_store %arg7[%c0_16, %c0_17], %40 {strides = array<i32>} : memref<36x2048xf32, #tpu.memory_space<vmem>>, vector<4x1024xf32>,
    %c0_18 = arith.constant 0 : index
    %c96 = arith.constant 96 : index
    %42 = vector.load %arg6[%c0_18, %c96] : memref<8x1280xf32, #tpu.memory_space<vmem>>, vector<4x1024xf32>
    %c4 = arith.constant 4 : index
    %c0_19 = arith.constant 0 : index
    %43 = vector.load %arg7[%c4, %c0_19] : memref<36x2048xf32, #tpu.memory_space<vmem>>, vector<4x1024xf32>
    tpu.vector_store %arg7[%c4, %c0_19], %42 {strides = array<i32>} : memref<36x2048xf32, #tpu.memory_space<vmem>>, vector<4x1024xf32>,
    %c0_20 = arith.constant 0 : index
    %c97 = arith.constant 97 : index
    %44 = vector.load %arg6[%c0_20, %c97] : memref<8x1280xf32, #tpu.memory_space<vmem>>, vector<4x1024xf32>
    %cst_21 = arith.constant 0.000000e+00 : f32
    %45 = vector.shape_cast %30 : vector<1x1024xi1> to vector<1x1024xi1>
    %46 = vector.broadcast %45 : vector<1x1024xi1> to vector<4x1024xi1>
    %47 = vector.broadcast %cst_21 : f32 to vector<4x1024xf32>
    %48 = arith.select %46, %44, %47 : vector<4x1024xi1>, vector<4x1024xf32>
    %c8 = arith.constant 8 : index
    %c0_22 = arith.constant 0 : index
    %49 = vector.load %arg7[%c8, %c0_22] : memref<36x2048xf32, #tpu.memory_space<vmem>>, vector<4x1024xf32>
    tpu.vector_store %arg7[%c8, %c0_22], %48 {strides = array<i32>} : memref<36x2048xf32, #tpu.memory_space<vmem>>, vector<4x1024xf32>,
    %c0_23 = arith.constant 0 : index
    %c127 = arith.constant 127 : index
    %50 = vector.load %arg6[%c0_23, %c127] : memref<8x1280xf32, #tpu.memory_space<vmem>>, vector<4x1024xf32>
    %cst_24 = arith.constant 0.000000e+00 : f32
    %51 = vector.shape_cast %25 : vector<1x1024xi1> to vector<1x1024xi1>
    %52 = vector.broadcast %51 : vector<1x1024xi1> to vector<4x1024xi1>
    %53 = vector.broadcast %cst_24 : f32 to vector<4x1024xf32>
    %54 = arith.select %52, %50, %53 : vector<4x1024xi1>, vector<4x1024xf32>
    %c12 = arith.constant 12 : index
    %c0_25 = arith.constant 0 : index
    %55 = vector.load %arg7[%c12, %c0_25] : memref<36x2048xf32, #tpu.memory_space<vmem>>, vector<4x1024xf32>
    tpu.vector_store %arg7[%c12, %c0_25], %54 {strides = array<i32>} : memref<36x2048xf32, #tpu.memory_space<vmem>>, vector<4x1024xf32>,
    %c0_26 = arith.constant 0 : index
    %c128_27 = arith.constant 128 : index
    %56 = vector.load %arg6[%c0_26, %c128_27] : memref<8x1280xf32, #tpu.memory_space<vmem>>, vector<4x1024xf32>
    %c16 = arith.constant 16 : index
    %c0_28 = arith.constant 0 : index
    %57 = vector.load %arg7[%c16, %c0_28] : memref<36x2048xf32, #tpu.memory_space<vmem>>, vector<4x1024xf32>
    tpu.vector_store %arg7[%c16, %c0_28], %56 {strides = array<i32>} : memref<36x2048xf32, #tpu.memory_space<vmem>>, vector<4x1024xf32>,
    %c0_29 = arith.constant 0 : index
    %c129 = arith.constant 129 : index
    %58 = vector.load %arg6[%c0_29, %c129] : memref<8x1280xf32, #tpu.memory_space<vmem>>, vector<4x1024xf32>
    %cst_30 = arith.constant 0.000000e+00 : f32
    %59 = vector.shape_cast %30 : vector<1x1024xi1> to vector<1x1024xi1>
    %60 = vector.broadcast %59 : vector<1x1024xi1> to vector<4x1024xi1>
    %61 = vector.broadcast %cst_30 : f32 to vector<4x1024xf32>
    %62 = arith.select %60, %58, %61 : vector<4x1024xi1>, vector<4x1024xf32>
    %c20 = arith.constant 20 : index
    %c0_31 = arith.constant 0 : index
    %63 = vector.load %arg7[%c20, %c0_31] : memref<36x2048xf32, #tpu.memory_space<vmem>>, vector<4x1024xf32>
    tpu.vector_store %arg7[%c20, %c0_31], %62 {strides = array<i32>} : memref<36x2048xf32, #tpu.memory_space<vmem>>, vector<4x1024xf32>,
    %c0_32 = arith.constant 0 : index
    %c159 = arith.constant 159 : index
    %64 = vector.load %arg6[%c0_32, %c159] : memref<8x1280xf32, #tpu.memory_space<vmem>>, vector<4x1024xf32>
    %cst_33 = arith.constant 0.000000e+00 : f32
    %65 = vector.shape_cast %25 : vector<1x1024xi1> to vector<1x1024xi1>
    %66 = vector.broadcast %65 : vector<1x1024xi1> to vector<4x1024xi1>
    %67 = vector.broadcast %cst_33 : f32 to vector<4x1024xf32>
    %68 = arith.select %66, %64, %67 : vector<4x1024xi1>, vector<4x1024xf32>
    %c24 = arith.constant 24 : index
    %c0_34 = arith.constant 0 : index
    %69 = vector.load %arg7[%c24, %c0_34] : memref<36x2048xf32, #tpu.memory_space<vmem>>, vector<4x1024xf32>
    tpu.vector_store %arg7[%c24, %c0_34], %68 {strides = array<i32>} : memref<36x2048xf32, #tpu.memory_space<vmem>>, vector<4x1024xf32>,
    %c0_35 = arith.constant 0 : index
    %c160 = arith.constant 160 : index
    %70 = vector.load %arg6[%c0_35, %c160] : memref<8x1280xf32, #tpu.memory_space<vmem>>, vector<4x1024xf32>
    %c28 = arith.constant 28 : index
    %c0_36 = arith.constant 0 : index
    %71 = vector.load %arg7[%c28, %c0_36] : memref<36x2048xf32, #tpu.memory_space<vmem>>, vector<4x1024xf32>
    tpu.vector_store %arg7[%c28, %c0_36], %70 {strides = array<i32>} : memref<36x2048xf32, #tpu.memory_space<vmem>>, vector<4x1024xf32>,
    %c0_37 = arith.constant 0 : index
    %c161 = arith.constant 161 : index
    %72 = vector.load %arg6[%c0_37, %c161] : memref<8x1280xf32, #tpu.memory_space<vmem>>, vector<4x1024xf32>
    %cst_38 = arith.constant 0.000000e+00 : f32
    %73 = vector.shape_cast %30 : vector<1x1024xi1> to vector<1x1024xi1>
    %74 = vector.broadcast %73 : vector<1x1024xi1> to vector<4x1024xi1>
    %75 = vector.broadcast %cst_38 : f32 to vector<4x1024xf32>
    %76 = arith.select %74, %72, %75 : vector<4x1024xi1>, vector<4x1024xf32>
    %c32 = arith.constant 32 : index
    %c0_39 = arith.constant 0 : index
    %77 = vector.load %arg7[%c32, %c0_39] : memref<36x2048xf32, #tpu.memory_space<vmem>>, vector<4x1024xf32>
    tpu.vector_store %arg7[%c32, %c0_39], %76 {strides = array<i32>} : memref<36x2048xf32, #tpu.memory_space<vmem>>, vector<4x1024xf32>,
    %c1 = arith.constant 1 : index
    %c0_40 = arith.constant 0 : index
    %c0_41 = arith.constant 0 : index
    %78 = vector.load %arg1[%c1, %c0_40, %c0_41] : memref<2x4x256xf32, #tpu.memory_space<vmem>>, vector<1x4x256xf32>
    %79 = vector.shape_cast %78 : vector<1x4x256xf32> to vector<4x256xf32>
    %c0_42 = arith.constant 0 : index
    %c0_43 = arith.constant 0 : index
    %80 = vector.load %arg4[%c0_42, %c0_43] : memref<256x1024xf32, #tpu.memory_space<vmem>>, vector<256x1024xf32>
    %cst_44 = arith.constant dense<0.000000e+00> : vector<4x1024xf32>
    %81 = tpu.matmul %79, %80, %cst_44 {dimension_numbers = #tpu.dot_dimension_numbers<[1], [0], [0], [1], [0, 0, 1, 1], [], []>} : vector<4x256xf32>, vector<256x1024xf32>, vector<4x1024xf32> -> vector<4x1024xf32>
    %c4_45 = arith.constant 4 : index
    %c128_46 = arith.constant 128 : index
    %82 = vector.load %arg6[%c4_45, %c128_46] : memref<8x1280xf32, #tpu.memory_space<vmem>>, vector<4x1024xf32>
    tpu.vector_store %arg6[%c4_45, %c128_46], %81 {strides = array<i32>} : memref<8x1280xf32, #tpu.memory_space<vmem>>, vector<4x1024xf32>,
    %c4_47 = arith.constant 4 : index
    %c95_48 = arith.constant 95 : index
    %83 = vector.load %arg6[%c4_47, %c95_48] : memref<8x1280xf32, #tpu.memory_space<vmem>>, vector<4x1024xf32>
    %cst_49 = arith.constant 0.000000e+00 : f32
    %84 = vector.shape_cast %25 : vector<1x1024xi1> to vector<1x1024xi1>
    %85 = vector.broadcast %84 : vector<1x1024xi1> to vector<4x1024xi1>
    %86 = vector.broadcast %cst_49 : f32 to vector<4x1024xf32>
    %87 = arith.select %85, %83, %86 : vector<4x1024xi1>, vector<4x1024xf32>
    %c0_50 = arith.constant 0 : index
    %c1024 = arith.constant 1024 : index
    %88 = vector.load %arg7[%c0_50, %c1024] : memref<36x2048xf32, #tpu.memory_space<vmem>>, vector<4x1024xf32>
    tpu.vector_store %arg7[%c0_50, %c1024], %87 {strides = array<i32>} : memref<36x2048xf32, #tpu.memory_space<vmem>>, vector<4x1024xf32>,
    %c4_51 = arith.constant 4 : index
    %c96_52 = arith.constant 96 : index
    %89 = vector.load %arg6[%c4_51, %c96_52] : memref<8x1280xf32, #tpu.memory_space<vmem>>, vector<4x1024xf32>
    %c4_53 = arith.constant 4 : index
    %c1024_54 = arith.constant 1024 : index
    %90 = vector.load %arg7[%c4_53, %c1024_54] : memref<36x2048xf32, #tpu.memory_space<vmem>>, vector<4x1024xf32>
    tpu.vector_store %arg7[%c4_53, %c1024_54], %89 {strides = array<i32>} : memref<36x2048xf32, #tpu.memory_space<vmem>>, vector<4x1024xf32>,
    %c4_55 = arith.constant 4 : index
    %c97_56 = arith.constant 97 : index
    %91 = vector.load %arg6[%c4_55, %c97_56] : memref<8x1280xf32, #tpu.memory_space<vmem>>, vector<4x1024xf32>
    %cst_57 = arith.constant 0.000000e+00 : f32
    %92 = vector.shape_cast %30 : vector<1x1024xi1> to vector<1x1024xi1>
    %93 = vector.broadcast %92 : vector<1x1024xi1> to vector<4x1024xi1>
    %94 = vector.broadcast %cst_57 : f32 to vector<4x1024xf32>
    %95 = arith.select %93, %91, %94 : vector<4x1024xi1>, vector<4x1024xf32>
    %c8_58 = arith.constant 8 : index
    %c1024_59 = arith.constant 1024 : index
    %96 = vector.load %arg7[%c8_58, %c1024_59] : memref<36x2048xf32, #tpu.memory_space<vmem>>, vector<4x1024xf32>
    tpu.vector_store %arg7[%c8_58, %c1024_59], %95 {strides = array<i32>} : memref<36x2048xf32, #tpu.memory_space<vmem>>, vector<4x1024xf32>,
    %c4_60 = arith.constant 4 : index
    %c127_61 = arith.constant 127 : index
    %97 = vector.load %arg6[%c4_60, %c127_61] : memref<8x1280xf32, #tpu.memory_space<vmem>>, vector<4x1024xf32>
    %cst_62 = arith.constant 0.000000e+00 : f32
    %98 = vector.shape_cast %25 : vector<1x1024xi1> to vector<1x1024xi1>
    %99 = vector.broadcast %98 : vector<1x1024xi1> to vector<4x1024xi1>
    %100 = vector.broadcast %cst_62 : f32 to vector<4x1024xf32>
    %101 = arith.select %99, %97, %100 : vector<4x1024xi1>, vector<4x1024xf32>
    %c12_63 = arith.constant 12 : index
    %c1024_64 = arith.constant 1024 : index
    %102 = vector.load %arg7[%c12_63, %c1024_64] : memref<36x2048xf32, #tpu.memory_space<vmem>>, vector<4x1024xf32>
    tpu.vector_store %arg7[%c12_63, %c1024_64], %101 {strides = array<i32>} : memref<36x2048xf32, #tpu.memory_space<vmem>>, vector<4x1024xf32>,
    %c4_65 = arith.constant 4 : index
    %c128_66 = arith.constant 128 : index
    %103 = vector.load %arg6[%c4_65, %c128_66] : memref<8x1280xf32, #tpu.memory_space<vmem>>, vector<4x1024xf32>
    %c16_67 = arith.constant 16 : index
    %c1024_68 = arith.constant 1024 : index
    %104 = vector.load %arg7[%c16_67, %c1024_68] : memref<36x2048xf32, #tpu.memory_space<vmem>>, vector<4x1024xf32>
    tpu.vector_store %arg7[%c16_67, %c1024_68], %103 {strides = array<i32>} : memref<36x2048xf32, #tpu.memory_space<vmem>>, vector<4x1024xf32>,
    %c4_69 = arith.constant 4 : index
    %c129_70 = arith.constant 129 : index
    %105 = vector.load %arg6[%c4_69, %c129_70] : memref<8x1280xf32, #tpu.memory_space<vmem>>, vector<4x1024xf32>
    %cst_71 = arith.constant 0.000000e+00 : f32
    %106 = vector.shape_cast %30 : vector<1x1024xi1> to vector<1x1024xi1>
    %107 = vector.broadcast %106 : vector<1x1024xi1> to vector<4x1024xi1>
    %108 = vector.broadcast %cst_71 : f32 to vector<4x1024xf32>
    %109 = arith.select %107, %105, %108 : vector<4x1024xi1>, vector<4x1024xf32>
    %c20_72 = arith.constant 20 : index
    %c1024_73 = arith.constant 1024 : index
    %110 = vector.load %arg7[%c20_72, %c1024_73] : memref<36x2048xf32, #tpu.memory_space<vmem>>, vector<4x1024xf32>
    tpu.vector_store %arg7[%c20_72, %c1024_73], %109 {strides = array<i32>} : memref<36x2048xf32, #tpu.memory_space<vmem>>, vector<4x1024xf32>,
    %c4_74 = arith.constant 4 : index
    %c159_75 = arith.constant 159 : index
    %111 = vector.load %arg6[%c4_74, %c159_75] : memref<8x1280xf32, #tpu.memory_space<vmem>>, vector<4x1024xf32>
    %cst_76 = arith.constant 0.000000e+00 : f32
    %112 = vector.shape_cast %25 : vector<1x1024xi1> to vector<1x1024xi1>
    %113 = vector.broadcast %112 : vector<1x1024xi1> to vector<4x1024xi1>
    %114 = vector.broadcast %cst_76 : f32 to vector<4x1024xf32>
    %115 = arith.select %113, %111, %114 : vector<4x1024xi1>, vector<4x1024xf32>
    %c24_77 = arith.constant 24 : index
    %c1024_78 = arith.constant 1024 : index
    %116 = vector.load %arg7[%c24_77, %c1024_78] : memref<36x2048xf32, #tpu.memory_space<vmem>>, vector<4x1024xf32>
    tpu.vector_store %arg7[%c24_77, %c1024_78], %115 {strides = array<i32>} : memref<36x2048xf32, #tpu.memory_space<vmem>>, vector<4x1024xf32>,
    %c4_79 = arith.constant 4 : index
    %c160_80 = arith.constant 160 : index
    %117 = vector.load %arg6[%c4_79, %c160_80] : memref<8x1280xf32, #tpu.memory_space<vmem>>, vector<4x1024xf32>
    %c28_81 = arith.constant 28 : index
    %c1024_82 = arith.constant 1024 : index
    %118 = vector.load %arg7[%c28_81, %c1024_82] : memref<36x2048xf32, #tpu.memory_space<vmem>>, vector<4x1024xf32>
    tpu.vector_store %arg7[%c28_81, %c1024_82], %117 {strides = array<i32>} : memref<36x2048xf32, #tpu.memory_space<vmem>>, vector<4x1024xf32>,
    %c4_83 = arith.constant 4 : index
    %c161_84 = arith.constant 161 : index
    %119 = vector.load %arg6[%c4_83, %c161_84] : memref<8x1280xf32, #tpu.memory_space<vmem>>, vector<4x1024xf32>
    %cst_85 = arith.constant 0.000000e+00 : f32
    %120 = vector.shape_cast %30 : vector<1x1024xi1> to vector<1x1024xi1>
    %121 = vector.broadcast %120 : vector<1x1024xi1> to vector<4x1024xi1>
    %122 = vector.broadcast %cst_85 : f32 to vector<4x1024xf32>
    %123 = arith.select %121, %119, %122 : vector<4x1024xi1>, vector<4x1024xf32>
    %c32_86 = arith.constant 32 : index
    %c1024_87 = arith.constant 1024 : index
    %124 = vector.load %arg7[%c32_86, %c1024_87] : memref<36x2048xf32, #tpu.memory_space<vmem>>, vector<4x1024xf32>
    tpu.vector_store %arg7[%c32_86, %c1024_87], %123 {strides = array<i32>} : memref<36x2048xf32, #tpu.memory_space<vmem>>, vector<4x1024xf32>,
    %c0_88 = arith.constant 0 : index
    %c0_89 = arith.constant 0 : index
    %125 = vector.load %arg2[%c0_88, %c0_89] : memref<8x36xf32, #tpu.memory_space<vmem>>, vector<8x36xf32>
    %c0_90 = arith.constant 0 : index
    %c0_91 = arith.constant 0 : index
    %126 = vector.load %arg7[%c0_90, %c0_91] : memref<36x2048xf32, #tpu.memory_space<vmem>>, vector<36x2048xf32>
    %cst_92 = arith.constant dense<0.000000e+00> : vector<8x2048xf32>
    %127 = tpu.matmul %125, %126, %cst_92 {dimension_numbers = #tpu.dot_dimension_numbers<[1], [0], [0], [1], [0, 0, 1, 1], [], []>} : vector<8x36xf32>, vector<36x2048xf32>, vector<8x2048xf32> -> vector<8x2048xf32>
    %c0_93 = arith.constant 0 : index
    %c0_94 = arith.constant 0 : index
    %128 = vector.load %arg3[%c0_93, %c0_94] : memref<8x1xf32, #tpu.memory_space<vmem>>, vector<8x1xf32>
    %129 = vector.broadcast %128 : vector<8x1xf32> to vector<8x2048xf32>
    %130 = arith.addf %127, %129 : vector<8x2048xf32>
    %131 = vector.extract_strided_slice %130 {offsets = [0, 0], sizes = [8, 1024], strides = [1, 1]} : vector<8x2048xf32> to vector<8x1024xf32>
    %c0_95 = arith.constant 0 : index
    %c0_96 = arith.constant 0 : index
    %c0_97 = arith.constant 0 : index
    %132 = vector.load %arg5[%c0_95, %c0_96, %c0_97] : memref<2x8x1024xf32, #tpu.memory_space<vmem>>, vector<1x8x1024xf32>
    %133 = vector.shape_cast %132 : vector<1x8x1024xf32> to vector<8x1024xf32>
    %134 = vector.shape_cast %131 : vector<8x1024xf32> to vector<1x8x1024xf32>
    tpu.vector_store %arg5[%c0_95, %c0_96, %c0_97], %134 {strides = array<i32>} : memref<2x8x1024xf32, #tpu.memory_space<vmem>>, vector<1x8x1024xf32>,
    %135 = vector.extract_strided_slice %130 {offsets = [0, 1024], sizes = [8, 1024], strides = [1, 1]} : vector<8x2048xf32> to vector<8x1024xf32>
    %c1_98 = arith.constant 1 : index
    %c0_99 = arith.constant 0 : index
    %c0_100 = arith.constant 0 : index
    %136 = vector.load %arg5[%c1_98, %c0_99, %c0_100] : memref<2x8x1024xf32, #tpu.memory_space<vmem>>, vector<1x8x1024xf32>
    %137 = vector.shape_cast %136 : vector<1x8x1024xf32> to vector<8x1024xf32>
    %138 = vector.shape_cast %135 : vector<8x1024xf32> to vector<1x8x1024xf32>
    tpu.vector_store %arg5[%c1_98, %c0_99, %c0_100], %138 {strides = array<i32>} : memref<2x8x1024xf32, #tpu.memory_space<vmem>>, vector<1x8x1024xf32>,
    return
  }
  func.func @transform_0(%arg0: i32) -> (i32, i32, i32) {
    %c0_i32 = arith.constant 0 : i32
    %c0_i32_0 = arith.constant 0 : i32
    %c0_i32_1 = arith.constant 0 : i32
    return %arg0, %c0_i32, %c0_i32_0 : i32, i32, i32
  }
  func.func @transform_1(%arg0: i32) -> (i32, i32) {
    %c0_i32 = arith.constant 0 : i32
    %c0_i32_0 = arith.constant 0 : i32
    %c0_i32_1 = arith.constant 0 : i32
    return %c0_i32, %c0_i32_0 : i32, i32
  }
  func.func @transform_2(%arg0: i32) -> (i32, i32) {
    %c0_i32 = arith.constant 0 : i32
    %c0_i32_0 = arith.constant 0 : i32
    %c0_i32_1 = arith.constant 0 : i32
    return %c0_i32, %c0_i32_0 : i32, i32
  }
  func.func @transform_3(%arg0: i32) -> (i32, i32) {
    %c0_i32 = arith.constant 0 : i32
    %c0_i32_0 = arith.constant 0 : i32
    %c0_i32_1 = arith.constant 0 : i32
    return %c0_i32, %c0_i32_0 : i32, i32
  }
  func.func @transform_4(%arg0: i32) -> (i32, i32, i32) {
    %c0_i32 = arith.constant 0 : i32
    %c0_i32_0 = arith.constant 0 : i32
    %c0_i32_1 = arith.constant 0 : i32
    return %arg0, %c0_i32, %c0_i32_0 : i32, i32, i32
  }
}

</mosaic_0001>

<llo_original>
// kernel: tpu_custom_call.1
$region0: #{tpu_custom_call.1}
  #allocation0 [shape = 'u32[]', space=smem, size = 0x4, offset = 0x4, fixed_abs, tag = 'smem constant byte address 0x4 - core index']
  #allocation1 [shape = 'u32[144,128]{1,0:T(1,128)}', space=vmem, size = 0x12000, scoped, tag = 'internal scratch']
  #allocation2 [shape = 'f32[8,1280]{1,0:T(8,128)}', space=vmem, size = 0xa000, scoped, tag = 'scratch operand']
  #allocation3 [shape = 'f32[36,2048]{1,0:T(8,128)}', space=vmem, size = 0x50000, scoped, tag = 'scratch operand']
  %s0 = inlined_call_operand.hbm [shape: f32[2,4,256], index: 0, kind: input, shape index: {}]
  %s1 = inlined_call_operand.vmem [shape: f32[8,36], index: 1, kind: input, shape index: {}]
  %s2 = inlined_call_operand.vmem [shape: f32[8,1], index: 2, kind: input, shape index: {}]
  %s3 = inlined_call_operand.hbm [shape: f32[256,1024], index: 3, kind: input, shape index: {}]
  %s4 = inlined_call_operand.hbm [shape: f32[2,8,1024], index: 4, kind: output, shape index: {}]
  %s5 = sld [smem:[#allocation0]]
  $region34: #{tpu_custom_call.1} parent=0
    _
  %s7 = ssub.s32 1, %s5
  %s8 = scalar_select 0, %s7, %s5
  $region1: #{tpu_custom_call.1} parent=0
    #allocation4 [shape = 'u8[8192]{0}', space=vmem, size = 0x2000, scoped, tag = 'input window, operand 0, single buffered']
    #allocation5 [shape = 's32[1]{0}', space=sflag, size = 0x4, scoped, tag = 'scoped memory for tpu_custom_call.1']
    #allocation6 [shape = 's32[1]{0}', space=sflag, size = 0x4, scoped, tag = 'scoped memory for tpu_custom_call.1']
    #allocation7 [shape = 'u8[1048576]{0}', space=vmem, size = 0x100000, scoped, tag = 'input window, operand 3, single buffered']
    #allocation8 [shape = 's32[1]{0}', space=sflag, size = 0x4, scoped, tag = 'scoped memory for tpu_custom_call.1']
    #allocation9 [shape = 'u8[65536]{0}', space=vmem, size = 0x10000, scoped, tag = 'output window, operand 0, single buffered']
    %9 = vsyncpa [#allocation5], 0
    %10 = vsyncpa [#allocation8], 0
    %11 = vsyncpa [#allocation6], 0
    // Predicated region
    $region2: #{tpu_custom_call.1} parent=1 // pred_check
      _
    $region3: #{tpu_custom_call.1} parent=1 // pred_check_branch
      %13 = sbr.rel (0) target = $region5
    $region4: #{tpu_custom_call.1} parent=1 // pred_region
      %s15 = ssub.s32 256, 256
      %16 = vsyncadd [#allocation5], %s15
      %s17 = sshll.u32 [#allocation4], 4
      %s18 = int_to_ptr.vmem [resolvable:$true] %s17
      %23 = dma.hbm_to_vmem [thread:$0]  %s0, 256, %s18, [#allocation5], 128, 128, 8
    $region5: #{tpu_custom_call.1} parent=1 // pred_fallthru
      _
    // Predicated region
    $region6: #{tpu_custom_call.1} parent=1 // pred_check
      _
    $region7: #{tpu_custom_call.1} parent=1 // pred_check_branch
      %25 = sbr.rel (0) target = $region9
    $region8: #{tpu_custom_call.1} parent=1 // pred_region
      _
    $region9: #{tpu_custom_call.1} parent=1 // pred_fallthru
      _
    // Predicated region
    $region10: #{tpu_custom_call.1} parent=1 // pred_check
      _
    $region11: #{tpu_custom_call.1} parent=1 // pred_check_branch
      %27 = sbr.rel (0) target = $region13
    $region12: #{tpu_custom_call.1} parent=1 // pred_region
      _
    $region13: #{tpu_custom_call.1} parent=1 // pred_fallthru
      _
    // Predicated region
    $region14: #{tpu_custom_call.1} parent=1 // pred_check
      _
    $region15: #{tpu_custom_call.1} parent=1 // pred_check_branch
      %29 = sbr.rel (0) target = $region17
    $region16: #{tpu_custom_call.1} parent=1 // pred_region
      %s31 = ssub.s32 32768, 32768
      %32 = vsyncadd [#allocation8], %s31
      %s33 = sshll.u32 [#allocation7], 4
      %s34 = int_to_ptr.vmem [resolvable:$true] %s33
      %39 = dma.hbm_to_vmem [thread:$0]  %s3, 32768, %s34, [#allocation8], 1024, 1024, 64
    $region17: #{tpu_custom_call.1} parent=1 // pred_fallthru
      _
    // Predicated region
    $region18: #{tpu_custom_call.1} parent=1 // pred_check
      _
    $region19: #{tpu_custom_call.1} parent=1 // pred_check_branch
      %41 = sbr.rel (0) target = $region21
    $region20: #{tpu_custom_call.1} parent=1 // pred_region
      %42 = dma.done [#allocation5], 256
    $region21: #{tpu_custom_call.1} parent=1 // pred_fallthru
      _
    // Predicated region
    $region22: #{tpu_custom_call.1} parent=1 // pred_check
      _
    $region23: #{tpu_custom_call.1} parent=1 // pred_check_branch
      %44 = sbr.rel (0) target = $region25
    $region24: #{tpu_custom_call.1} parent=1 // pred_region
      %45 = dma.done [#allocation8], 32768
    $region25: #{tpu_custom_call.1} parent=1 // pred_fallthru
      _
    %46 = vst [vmem:[#allocation2] sm:$0xff] 0.0
    %47 = vst [vmem:[#allocation2 + $0x48] sm:$0xff] 0.0
    %v48 = vlaneseq
    %v49 = vand.u32 %v48, 127
    %v50 = vadd.s32 %v49, 128
    %v51 = vadd.s32 %v49, 256
    %v52 = vadd.s32 %v49, 384
    %v53 = vadd.s32 %v49, 512
    %v54 = vadd.s32 %v49, 640
    %v55 = vadd.s32 %v49, 768
    %v56 = vadd.s32 %v49, 896
    %vm57 = vcmp.lt.s32.totalorder %v49, 0
    %v58 = vsub.s32 0, %v49
    %v59 = vsel %vm57, %v58, %v49
    %v60 = vshrl.u32 %v59, 5
    %v61 = vand.u32 %v59, 31
    %v62 = vsub.s32 0, %v61
    %v63 = vsel %vm57, %v62, %v61
    %vm64 = vcmp.lt.s32.totalorder %v50, 0
    %v65 = vsub.s32 0, %v50
    %v66 = vsel %vm64, %v65, %v50
    %v67 = vshrl.u32 %v66, 5
    %v68 = vand.u32 %v66, 31
    %v69 = vsub.s32 0, %v68
    %v70 = vsel %vm64, %v69, %v68
    %vm71 = vcmp.lt.s32.totalorder %v51, 0
    %v72 = vsub.s32 0, %v51
    %v73 = vsel %vm71, %v72, %v51
    %v74 = vshrl.u32 %v73, 5
    %v75 = vand.u32 %v73, 31
    %v76 = vsub.s32 0, %v75
    %v77 = vsel %vm71, %v76, %v75
    %vm78 = vcmp.lt.s32.totalorder %v52, 0
    %v79 = vsub.s32 0, %v52
    %v80 = vsel %vm78, %v79, %v52
    %v81 = vshrl.u32 %v80, 5
    %v82 = vand.u32 %v80, 31
    %v83 = vsub.s32 0, %v82
    %v84 = vsel %vm78, %v83, %v82
    %vm85 = vcmp.lt.s32.totalorder %v53, 0
    %v86 = vsub.s32 0, %v53
    %v87 = vsel %vm85, %v86, %v53
    %v88 = vshrl.u32 %v87, 5
    %v89 = vand.u32 %v87, 31
    %v90 = vsub.s32 0, %v89
    %v91 = vsel %vm85, %v90, %v89
    %vm92 = vcmp.lt.s32.totalorder %v54, 0
    %v93 = vsub.s32 0, %v54
    %v94 = vsel %vm92, %v93, %v54
    %v95 = vshrl.u32 %v94, 5
    %v96 = vand.u32 %v94, 31
    %v97 = vsub.s32 0, %v96
    %v98 = vsel %vm92, %v97, %v96
    %vm99 = vcmp.lt.s32.totalorder %v55, 0
    %v100 = vsub.s32 0, %v55
    %v101 = vsel %vm99, %v100, %v55
    %v102 = vshrl.u32 %v101, 5
    %v103 = vand.u32 %v101, 31
    %v104 = vsub.s32 0, %v103
    %v105 = vsel %vm99, %v104, %v103
    %vm106 = vcmp.lt.s32.totalorder %v56, 0
    %v107 = vsub.s32 0, %v56
    %v108 = vsel %vm106, %v107, %v56
    %v109 = vshrl.u32 %v108, 5
    %v110 = vand.u32 %v108, 31
    %v111 = vsub.s32 0, %v110
    %v112 = vsel %vm106, %v111, %v110
    %vm113 = vcmp.ne.s32.totalorder %v63, 0
    %vm114 = vcmp.ne.s32.totalorder %v70, 0
    %vm115 = vcmp.ne.s32.totalorder %v77, 0
    %vm116 = vcmp.ne.s32.totalorder %v84, 0
    %vm117 = vcmp.ne.s32.totalorder %v91, 0
    %vm118 = vcmp.ne.s32.totalorder %v98, 0
    %vm119 = vcmp.ne.s32.totalorder %v105, 0
    %vm120 = vcmp.ne.s32.totalorder %v112, 0
    %vm121 = vcmp.lt.s32.totalorder %v63, 0
    %vm122 = vcmp.lt.s32.totalorder %v70, 0
    %vm123 = vcmp.lt.s32.totalorder %v77, 0
    %vm124 = vcmp.lt.s32.totalorder %v84, 0
    %vm125 = vcmp.lt.s32.totalorder %v91, 0
    %vm126 = vcmp.lt.s32.totalorder %v98, 0
    %vm127 = vcmp.lt.s32.totalorder %v105, 0
    %vm128 = vcmp.lt.s32.totalorder %v112, 0
    %vm129 = vmand %vm121, %vm113
    %vm130 = vmand %vm122, %vm114
    %vm131 = vmand %vm123, %vm115
    %vm132 = vmand %vm124, %vm116
    %vm133 = vmand %vm125, %vm117
    %vm134 = vmand %vm126, %vm118
    %vm135 = vmand %vm127, %vm119
    %vm136 = vmand %vm128, %vm120
    %v137 = vadd.s32 %v63, 32
    %v138 = vadd.s32 %v70, 32
    %v139 = vadd.s32 %v77, 32
    %v140 = vadd.s32 %v84, 32
    %v141 = vadd.s32 %v91, 32
    %v142 = vadd.s32 %v98, 32
    %v143 = vadd.s32 %v105, 32
    %v144 = vadd.s32 %v112, 32
    %v145 = vsel %vm129, %v137, %v63
    %v146 = vsel %vm130, %v138, %v70
    %v147 = vsel %vm131, %v139, %v77
    %v148 = vsel %vm132, %v140, %v84
    %v149 = vsel %vm133, %v141, %v91
    %v150 = vsel %vm134, %v142, %v98
    %v151 = vsel %vm135, %v143, %v105
    %v152 = vsel %vm136, %v144, %v112
    %vm153 = vcmp.ge.s32.totalorder %v145, 1
    %vm154 = vcmp.ge.s32.totalorder %v146, 1
    %vm155 = vcmp.ge.s32.totalorder %v147, 1
    %vm156 = vcmp.ge.s32.totalorder %v148, 1
    %vm157 = vcmp.ge.s32.totalorder %v149, 1
    %vm158 = vcmp.ge.s32.totalorder %v150, 1
    %vm159 = vcmp.ge.s32.totalorder %v151, 1
    %vm160 = vcmp.ge.s32.totalorder %v152, 1
    %vm161 = vcmp.lt.s32.totalorder %v145, 33
    %vm162 = vcmp.lt.s32.totalorder %v146, 33
    %vm163 = vcmp.lt.s32.totalorder %v147, 33
    %vm164 = vcmp.lt.s32.totalorder %v148, 33
    %vm165 = vcmp.lt.s32.totalorder %v149, 33
    %vm166 = vcmp.lt.s32.totalorder %v150, 33
    %vm167 = vcmp.lt.s32.totalorder %v151, 33
    %vm168 = vcmp.lt.s32.totalorder %v152, 33
    %vm169 = vmand %vm153, %vm161
    %vm170 = vmand %vm154, %vm162
    %vm171 = vmand %vm155, %vm163
    %vm172 = vmand %vm156, %vm164
    %vm173 = vmand %vm157, %vm165
    %vm174 = vmand %vm158, %vm166
    %vm175 = vmand %vm159, %vm167
    %vm176 = vmand %vm160, %vm168
    %vm177 = vcmp.ge.s32.totalorder %v145, 4294967295
    %vm178 = vcmp.ge.s32.totalorder %v146, 4294967295
    %vm179 = vcmp.ge.s32.totalorder %v147, 4294967295
    %vm180 = vcmp.ge.s32.totalorder %v148, 4294967295
    %vm181 = vcmp.ge.s32.totalorder %v149, 4294967295
    %vm182 = vcmp.ge.s32.totalorder %v150, 4294967295
    %vm183 = vcmp.ge.s32.totalorder %v151, 4294967295
    %vm184 = vcmp.ge.s32.totalorder %v152, 4294967295
    %vm185 = vcmp.lt.s32.totalorder %v145, 31
    %vm186 = vcmp.lt.s32.totalorder %v146, 31
    %vm187 = vcmp.lt.s32.totalorder %v147, 31
    %vm188 = vcmp.lt.s32.totalorder %v148, 31
    %vm189 = vcmp.lt.s32.totalorder %v149, 31
    %vm190 = vcmp.lt.s32.totalorder %v150, 31
    %vm191 = vcmp.lt.s32.totalorder %v151, 31
    %vm192 = vcmp.lt.s32.totalorder %v152, 31
    %vm193 = vmand %vm177, %vm185
    %vm194 = vmand %vm178, %vm186
    %vm195 = vmand %vm179, %vm187
    %vm196 = vmand %vm180, %vm188
    %vm197 = vmand %vm181, %vm189
    %vm198 = vmand %vm182, %vm190
    %vm199 = vmand %vm183, %vm191
    %vm200 = vmand %vm184, %vm192
    %v201 = vld [vmem:[#allocation4] sm:$0xff]
    %v202 = vld [vmem:[#allocation7] sm:$0xff]
    %v203 = vld [vmem:[#allocation7 + $0x8] sm:$0xff]
    %v204 = vld [vmem:[#allocation7 + $0x10] sm:$0xff]
    %v205 = vld [vmem:[#allocation7 + $0x18] sm:$0xff]
    %v206 = vld [vmem:[#allocation7 + $0x20] sm:$0xff]
    %v207 = vld [vmem:[#allocation7 + $0x28] sm:$0xff]
    %v208 = vld [vmem:[#allocation7 + $0x30] sm:$0xff]
    %v209 = vld [vmem:[#allocation7 + $0x38] sm:$0xff]
    %v210 = vld [vmem:[#allocation7 + $0x40] sm:$0xff]
    %v211 = vld [vmem:[#allocation7 + $0x48] sm:$0xff]
    %v212 = vld [vmem:[#allocation7 + $0x50] sm:$0xff]
    %v213 = vld [vmem:[#allocation7 + $0x58] sm:$0xff]
    %v214 = vld [vmem:[#allocation7 + $0x60] sm:$0xff]
    %v215 = vld [vmem:[#allocation7 + $0x68] sm:$0xff]
    %v216 = vld [vmem:[#allocation7 + $0x70] sm:$0xff]
    %v217 = vld [vmem:[#allocation7 + $0x78] sm:$0xff]
    %v218 = vld [vmem:[#allocation7 + $0x80] sm:$0xff]
    %v219 = vld [vmem:[#allocation7 + $0x88] sm:$0xff]
    %v220 = vld [vmem:[#allocation7 + $0x90] sm:$0xff]
    %v221 = vld [vmem:[#allocation7 + $0x98] sm:$0xff]
    %v222 = vld [vmem:[#allocation7 + $0xa0] sm:$0xff]
    %v223 = vld [vmem:[#allocation7 + $0xa8] sm:$0xff]
    %v224 = vld [vmem:[#allocation7 + $0xb0] sm:$0xff]
    %v225 = vld [vmem:[#allocation7 + $0xb8] sm:$0xff]
    %v226 = vld [vmem:[#allocation7 + $0xc0] sm:$0xff]
    %v227 = vld [vmem:[#allocation7 + $0xc8] sm:$0xff]
    %v228 = vld [vmem:[#allocation7 + $0xd0] sm:$0xff]
    %v229 = vld [vmem:[#allocation7 + $0xd8] sm:$0xff]
    %v230 = vld [vmem:[#allocation7 + $0xe0] sm:$0xff]
    %v231 = vld [vmem:[#allocation7 + $0xe8] sm:$0xff]
    %v232 = vld [vmem:[#allocation7 + $0xf0] sm:$0xff]
    %v233 = vld [vmem:[#allocation7 + $0xf8] sm:$0xff]
    %v234 = vld [vmem:[#allocation7 + $0x100] sm:$0xff]
    %v235 = vld [vmem:[#allocation7 + $0x108] sm:$0xff]
    %v236 = vld [vmem:[#allocation7 + $0x110] sm:$0xff]
    %v237 = vld [vmem:[#allocation7 + $0x118] sm:$0xff]
    %v238 = vld [vmem:[#allocation7 + $0x120] sm:$0xff]
    %v239 = vld [vmem:[#allocation7 + $0x128] sm:$0xff]
    %v240 = vld [vmem:[#allocation7 + $0x130] sm:$0xff]
    %v241 = vld [vmem:[#allocation7 + $0x138] sm:$0xff]
    %v242 = vld [vmem:[#allocation7 + $0x140] sm:$0xff]
    %v243 = vld [vmem:[#allocation7 + $0x148] sm:$0xff]
    %v244 = vld [vmem:[#allocation7 + $0x150] sm:$0xff]
    %v245 = vld [vmem:[#allocation7 + $0x158] sm:$0xff]
    %v246 = vld [vmem:[#allocation7 + $0x160] sm:$0xff]
    %v247 = vld [vmem:[#allocation7 + $0x168] sm:$0xff]
    %v248 = vld [vmem:[#allocation7 + $0x170] sm:$0xff]
    %v249 = vld [vmem:[#allocation7 + $0x178] sm:$0xff]
    %v250 = vld [vmem:[#allocation7 + $0x180] sm:$0xff]
    %v251 = vld [vmem:[#allocation7 + $0x188] sm:$0xff]
    %v252 = vld [vmem:[#allocation7 + $0x190] sm:$0xff]
    %v253 = vld [vmem:[#allocation7 + $0x198] sm:$0xff]
    %v254 = vld [vmem:[#allocation7 + $0x1a0] sm:$0xff]
    %v255 = vld [vmem:[#allocation7 + $0x1a8] sm:$0xff]
    %v256 = vld [vmem:[#allocation7 + $0x1b0] sm:$0xff]
    %v257 = vld [vmem:[#allocation7 + $0x1b8] sm:$0xff]
    %v258 = vld [vmem:[#allocation7 + $0x1c0] sm:$0xff]
    %v259 = vld [vmem:[#allocation7 + $0x1c8] sm:$0xff]
    %v260 = vld [vmem:[#allocation7 + $0x1d0] sm:$0xff]
    %v261 = vld [vmem:[#allocation7 + $0x1d8] sm:$0xff]
    %v262 = vld [vmem:[#allocation7 + $0x1e0] sm:$0xff]
    %v263 = vld [vmem:[#allocation7 + $0x1e8] sm:$0xff]
    %v264 = vld [vmem:[#allocation7 + $0x1f0] sm:$0xff]
    %v265 = vld [vmem:[#allocation7 + $0x1f8] sm:$0xff]
    %v266 = vld [vmem:[#allocation7 + $0x200] sm:$0xff]
    %v267 = vld [vmem:[#allocation7 + $0x208] sm:$0xff]
    %v268 = vld [vmem:[#allocation7 + $0x210] sm:$0xff]
    %v269 = vld [vmem:[#allocation7 + $0x218] sm:$0xff]
    %v270 = vld [vmem:[#allocation7 + $0x220] sm:$0xff]
    %v271 = vld [vmem:[#allocation7 + $0x228] sm:$0xff]
    %v272 = vld [vmem:[#allocation7 + $0x230] sm:$0xff]
    %v273 = vld [vmem:[#allocation7 + $0x238] sm:$0xff]
    %v274 = vld [vmem:[#allocation7 + $0x240] sm:$0xff]
    %v275 = vld [vmem:[#allocation7 + $0x248] sm:$0xff]
    %v276 = vld [vmem:[#allocation7 + $0x250] sm:$0xff]
    %v277 = vld [vmem:[#allocation7 + $0x258] sm:$0xff]
    %v278 = vld [vmem:[#allocation7 + $0x260] sm:$0xff]
    %v279 = vld [vmem:[#allocation7 + $0x268] sm:$0xff]
    %v280 = vld [vmem:[#allocation7 + $0x270] sm:$0xff]
    %v281 = vld [vmem:[#allocation7 + $0x278] sm:$0xff]
    %v282 = vld [vmem:[#allocation7 + $0x280] sm:$0xff]
    %v283 = vld [vmem:[#allocation7 + $0x288] sm:$0xff]
    %v284 = vld [vmem:[#allocation7 + $0x290] sm:$0xff]
    %v285 = vld [vmem:[#allocation7 + $0x298] sm:$0xff]
    %v286 = vld [vmem:[#allocation7 + $0x2a0] sm:$0xff]
    %v287 = vld [vmem:[#allocation7 + $0x2a8] sm:$0xff]
    %v288 = vld [vmem:[#allocation7 + $0x2b0] sm:$0xff]
    %v289 = vld [vmem:[#allocation7 + $0x2b8] sm:$0xff]
    %v290 = vld [vmem:[#allocation7 + $0x2c0] sm:$0xff]
    %v291 = vld [vmem:[#allocation7 + $0x2c8] sm:$0xff]
    %v292 = vld [vmem:[#allocation7 + $0x2d0] sm:$0xff]
    %v293 = vld [vmem:[#allocation7 + $0x2d8] sm:$0xff]
    %v294 = vld [vmem:[#allocation7 + $0x2e0] sm:$0xff]
    %v295 = vld [vmem:[#allocation7 + $0x2e8] sm:$0xff]
    %v296 = vld [vmem:[#allocation7 + $0x2f0] sm:$0xff]
    %v297 = vld [vmem:[#allocation7 + $0x2f8] sm:$0xff]
    %v298 = vld [vmem:[#allocation7 + $0x300] sm:$0xff]
    %v299 = vld [vmem:[#allocation7 + $0x308] sm:$0xff]
    %v300 = vld [vmem:[#allocation7 + $0x310] sm:$0xff]
    %v301 = vld [vmem:[#allocation7 + $0x318] sm:$0xff]
    %v302 = vld [vmem:[#allocation7 + $0x320] sm:$0xff]
    %v303 = vld [vmem:[#allocation7 + $0x328] sm:$0xff]
    %v304 = vld [vmem:[#allocation7 + $0x330] sm:$0xff]
    %v305 = vld [vmem:[#allocation7 + $0x338] sm:$0xff]
    %v306 = vld [vmem:[#allocation7 + $0x340] sm:$0xff]
    %v307 = vld [vmem:[#allocation7 + $0x348] sm:$0xff]
    %v308 = vld [vmem:[#allocation7 + $0x350] sm:$0xff]
    %v309 = vld [vmem:[#allocation7 + $0x358] sm:$0xff]
    %v310 = vld [vmem:[#allocation7 + $0x360] sm:$0xff]
    %v311 = vld [vmem:[#allocation7 + $0x368] sm:$0xff]
    %v312 = vld [vmem:[#allocation7 + $0x370] sm:$0xff]
    %v313 = vld [vmem:[#allocation7 + $0x378] sm:$0xff]
    %v314 = vld [vmem:[#allocation7 + $0x380] sm:$0xff]
    %v315 = vld [vmem:[#allocation7 + $0x388] sm:$0xff]
    %v316 = vld [vmem:[#allocation7 + $0x390] sm:$0xff]
    %v317 = vld [vmem:[#allocation7 + $0x398] sm:$0xff]
    %v318 = vld [vmem:[#allocation7 + $0x3a0] sm:$0xff]
    %v319 = vld [vmem:[#allocation7 + $0x3a8] sm:$0xff]
    %v320 = vld [vmem:[#allocation7 + $0x3b0] sm:$0xff]
    %v321 = vld [vmem:[#allocation7 + $0x3b8] sm:$0xff]
    %v322 = vld [vmem:[#allocation7 + $0x3c0] sm:$0xff]
    %v323 = vld [vmem:[#allocation7 + $0x3c8] sm:$0xff]
    %v324 = vld [vmem:[#allocation7 + $0x3d0] sm:$0xff]
    %v325 = vld [vmem:[#allocation7 + $0x3d8] sm:$0xff]
    %v326 = vld [vmem:[#allocation7 + $0x3e0] sm:$0xff]
    %v327 = vld [vmem:[#allocation7 + $0x3e8] sm:$0xff]
    %v328 = vld [vmem:[#allocation7 + $0x3f0] sm:$0xff]
    %v329 = vld [vmem:[#allocation7 + $0x3f8] sm:$0xff]
    %v330 = vld [vmem:[#allocation7 + $0x400] sm:$0xff]
    %v331 = vld [vmem:[#allocation7 + $0x408] sm:$0xff]
    %v332 = vld [vmem:[#allocation7 + $0x410] sm:$0xff]
    %v333 = vld [vmem:[#allocation7 + $0x418] sm:$0xff]
    %v334 = vld [vmem:[#allocation7 + $0x420] sm:$0xff]
    %v335 = vld [vmem:[#allocation7 + $0x428] sm:$0xff]
    %v336 = vld [vmem:[#allocation7 + $0x430] sm:$0xff]
    %v337 = vld [vmem:[#allocation7 + $0x438] sm:$0xff]
    %v338 = vld [vmem:[#allocation7 + $0x440] sm:$0xff]
    %v339 = vld [vmem:[#allocation7 + $0x448] sm:$0xff]
    %v340 = vld [vmem:[#allocation7 + $0x450] sm:$0xff]
    %v341 = vld [vmem:[#allocation7 + $0x458] sm:$0xff]
    %v342 = vld [vmem:[#allocation7 + $0x460] sm:$0xff]
    %v343 = vld [vmem:[#allocation7 + $0x468] sm:$0xff]
    %v344 = vld [vmem:[#allocation7 + $0x470] sm:$0xff]
    %v345 = vld [vmem:[#allocation7 + $0x478] sm:$0xff]
    %v346 = vld [vmem:[#allocation7 + $0x480] sm:$0xff]
    %v347 = vld [vmem:[#allocation7 + $0x488] sm:$0xff]
    %v348 = vld [vmem:[#allocation7 + $0x490] sm:$0xff]
    %v349 = vld [vmem:[#allocation7 + $0x498] sm:$0xff]
    %v350 = vld [vmem:[#allocation7 + $0x4a0] sm:$0xff]
    %v351 = vld [vmem:[#allocation7 + $0x4a8] sm:$0xff]
    %v352 = vld [vmem:[#allocation7 + $0x4b0] sm:$0xff]
    %v353 = vld [vmem:[#allocation7 + $0x4b8] sm:$0xff]
    %v354 = vld [vmem:[#allocation7 + $0x4c0] sm:$0xff]
    %v355 = vld [vmem:[#allocation7 + $0x4c8] sm:$0xff]
    %v356 = vld [vmem:[#allocation7 + $0x4d0] sm:$0xff]
    %v357 = vld [vmem:[#allocation7 + $0x4d8] sm:$0xff]
    %v358 = vld [vmem:[#allocation7 + $0x4e0] sm:$0xff]
    %v359 = vld [vmem:[#allocation7 + $0x4e8] sm:$0xff]
    %v360 = vld [vmem:[#allocation7 + $0x4f0] sm:$0xff]
    %v361 = vld [vmem:[#allocation7 + $0x4f8] sm:$0xff]
    %v362 = vld [vmem:[#allocation7 + $0x500] sm:$0xff]
    %v363 = vld [vmem:[#allocation7 + $0x508] sm:$0xff]
    %v364 = vld [vmem:[#allocation7 + $0x510] sm:$0xff]
    %v365 = vld [vmem:[#allocation7 + $0x518] sm:$0xff]
    %v366 = vld [vmem:[#allocation7 + $0x520] sm:$0xff]
    %v367 = vld [vmem:[#allocation7 + $0x528] sm:$0xff]
    %v368 = vld [vmem:[#allocation7 + $0x530] sm:$0xff]
    %v369 = vld [vmem:[#allocation7 + $0x538] sm:$0xff]
    %v370 = vld [vmem:[#allocation7 + $0x540] sm:$0xff]
    %v371 = vld [vmem:[#allocation7 + $0x548] sm:$0xff]
    %v372 = vld [vmem:[#allocation7 + $0x550] sm:$0xff]
    %v373 = vld [vmem:[#allocation7 + $0x558] sm:$0xff]
    %v374 = vld [vmem:[#allocation7 + $0x560] sm:$0xff]
    %v375 = vld [vmem:[#allocation7 + $0x568] sm:$0xff]
    %v376 = vld [vmem:[#allocation7 + $0x570] sm:$0xff]
    %v377 = vld [vmem:[#allocation7 + $0x578] sm:$0xff]
    %v378 = vld [vmem:[#allocation7 + $0x580] sm:$0xff]
    %v379 = vld [vmem:[#allocation7 + $0x588] sm:$0xff]
    %v380 = vld [vmem:[#allocation7 + $0x590] sm:$0xff]
    %v381 = vld [vmem:[#allocation7 + $0x598] sm:$0xff]
    %v382 = vld [vmem:[#allocation7 + $0x5a0] sm:$0xff]
    %v383 = vld [vmem:[#allocation7 + $0x5a8] sm:$0xff]
    %v384 = vld [vmem:[#allocation7 + $0x5b0] sm:$0xff]
    %v385 = vld [vmem:[#allocation7 + $0x5b8] sm:$0xff]
    %v386 = vld [vmem:[#allocation7 + $0x5c0] sm:$0xff]
    %v387 = vld [vmem:[#allocation7 + $0x5c8] sm:$0xff]
    %v388 = vld [vmem:[#allocation7 + $0x5d0] sm:$0xff]
    %v389 = vld [vmem:[#allocation7 + $0x5d8] sm:$0xff]
    %v390 = vld [vmem:[#allocation7 + $0x5e0] sm:$0xff]
    %v391 = vld [vmem:[#allocation7 + $0x5e8] sm:$0xff]
    %v392 = vld [vmem:[#allocation7 + $0x5f0] sm:$0xff]
    %v393 = vld [vmem:[#allocation7 + $0x5f8] sm:$0xff]
    %v394 = vld [vmem:[#allocation7 + $0x600] sm:$0xff]
    %v395 = vld [vmem:[#allocation7 + $0x608] sm:$0xff]
    %v396 = vld [vmem:[#allocation7 + $0x610] sm:$0xff]
    %v397 = vld [vmem:[#allocation7 + $0x618] sm:$0xff]
    %v398 = vld [vmem:[#allocation7 + $0x620] sm:$0xff]
    %v399 = vld [vmem:[#allocation7 + $0x628] sm:$0xff]
    %v400 = vld [vmem:[#allocation7 + $0x630] sm:$0xff]
    %v401 = vld [vmem:[#allocation7 + $0x638] sm:$0xff]
    %v402 = vld [vmem:[#allocation7 + $0x640] sm:$0xff]
    %v403 = vld [vmem:[#allocation7 + $0x648] sm:$0xff]
    %v404 = vld [vmem:[#allocation7 + $0x650] sm:$0xff]
    %v405 = vld [vmem:[#allocation7 + $0x658] sm:$0xff]
    %v406 = vld [vmem:[#allocation7 + $0x660] sm:$0xff]
    %v407 = vld [vmem:[#allocation7 + $0x668] sm:$0xff]
    %v408 = vld [vmem:[#allocation7 + $0x670] sm:$0xff]
    %v409 = vld [vmem:[#allocation7 + $0x678] sm:$0xff]
    %v410 = vld [vmem:[#allocation7 + $0x680] sm:$0xff]
    %v411 = vld [vmem:[#allocation7 + $0x688] sm:$0xff]
    %v412 = vld [vmem:[#allocation7 + $0x690] sm:$0xff]
    %v413 = vld [vmem:[#allocation7 + $0x698] sm:$0xff]
    %v414 = vld [vmem:[#allocation7 + $0x6a0] sm:$0xff]
    %v415 = vld [vmem:[#allocation7 + $0x6a8] sm:$0xff]
    %v416 = vld [vmem:[#allocation7 + $0x6b0] sm:$0xff]
    %v417 = vld [vmem:[#allocation7 + $0x6b8] sm:$0xff]
    %v418 = vld [vmem:[#allocation7 + $0x6c0] sm:$0xff]
    %v419 = vld [vmem:[#allocation7 + $0x6c8] sm:$0xff]
    %v420 = vld [vmem:[#allocation7 + $0x6d0] sm:$0xff]
    %v421 = vld [vmem:[#allocation7 + $0x6d8] sm:$0xff]
    %v422 = vld [vmem:[#allocation7 + $0x6e0] sm:$0xff]
    %v423 = vld [vmem:[#allocation7 + $0x6e8] sm:$0xff]
    %v424 = vld [vmem:[#allocation7 + $0x6f0] sm:$0xff]
    %v425 = vld [vmem:[#allocation7 + $0x6f8] sm:$0xff]
    %v426 = vld [vmem:[#allocation7 + $0x700] sm:$0xff]
    %v427 = vld [vmem:[#allocation7 + $0x708] sm:$0xff]
    %v428 = vld [vmem:[#allocation7 + $0x710] sm:$0xff]
    %v429 = vld [vmem:[#allocation7 + $0x718] sm:$0xff]
    %v430 = vld [vmem:[#allocation7 + $0x720] sm:$0xff]
    %v431 = vld [vmem:[#allocation7 + $0x728] sm:$0xff]
    %v432 = vld [vmem:[#allocation7 + $0x730] sm:$0xff]
    %v433 = vld [vmem:[#allocation7 + $0x738] sm:$0xff]
    %v434 = vld [vmem:[#allocation7 + $0x740] sm:$0xff]
    %v435 = vld [vmem:[#allocation7 + $0x748] sm:$0xff]
    %v436 = vld [vmem:[#allocation7 + $0x750] sm:$0xff]
    %v437 = vld [vmem:[#allocation7 + $0x758] sm:$0xff]
    %v438 = vld [vmem:[#allocation7 + $0x760] sm:$0xff]
    %v439 = vld [vmem:[#allocation7 + $0x768] sm:$0xff]
    %v440 = vld [vmem:[#allocation7 + $0x770] sm:$0xff]
    %v441 = vld [vmem:[#allocation7 + $0x778] sm:$0xff]
    %v442 = vld [vmem:[#allocation7 + $0x780] sm:$0xff]
    %v443 = vld [vmem:[#allocation7 + $0x788] sm:$0xff]
    %v444 = vld [vmem:[#allocation7 + $0x790] sm:$0xff]
    %v445 = vld [vmem:[#allocation7 + $0x798] sm:$0xff]
    %v446 = vld [vmem:[#allocation7 + $0x7a0] sm:$0xff]
    %v447 = vld [vmem:[#allocation7 + $0x7a8] sm:$0xff]
    %v448 = vld [vmem:[#allocation7 + $0x7b0] sm:$0xff]
    %v449 = vld [vmem:[#allocation7 + $0x7b8] sm:$0xff]
    %v450 = vld [vmem:[#allocation7 + $0x7c0] sm:$0xff]
    %v451 = vld [vmem:[#allocation7 + $0x7c8] sm:$0xff]
    %v452 = vld [vmem:[#allocation7 + $0x7d0] sm:$0xff]
    %v453 = vld [vmem:[#allocation7 + $0x7d8] sm:$0xff]
    %v454 = vld [vmem:[#allocation7 + $0x7e0] sm:$0xff]
    %v455 = vld [vmem:[#allocation7 + $0x7e8] sm:$0xff]
    %v456 = vld [vmem:[#allocation7 + $0x7f0] sm:$0xff]
    %v457 = vld [vmem:[#allocation7 + $0x7f8] sm:$0xff]
    %v459 = vcombine.high %v201, %v201
    %461 = vmatprep.subr.mxu0 %v323
    %462 = vmatpush1.msra.mxu0 %v322
    %463 = vmatprep.subr.mxu0 %v315
    %464 = vmatpush1.msra.mxu0 %v314
    %465 = vmatprep.subr.mxu0 %v307
    %466 = vmatpush1.msra.mxu0 %v306
    %467 = vmatprep.subr.mxu0 %v299
    %468 = vmatpush1.msra.mxu0 %v298
    %469 = vmatprep.subr.mxu0 %v291
    %470 = vmatpush1.msra.mxu0 %v290
    %471 = vmatprep.subr.mxu0 %v283
    %472 = vmatpush1.msra.mxu0 %v282
    %473 = vmatprep.subr.mxu0 %v275
    %474 = vmatpush1.msra.mxu0 %v274
    %475 = vmatprep.subr.mxu0 %v267
    %476 = vmatpush1.msra.mxu0 %v266
    %477 = vmatprep.subr.mxu0 %v259
    %478 = vmatpush1.msra.mxu0 %v258
    %479 = vmatprep.subr.mxu0 %v251
    %480 = vmatpush1.msra.mxu0 %v250
    %481 = vmatprep.subr.mxu0 %v243
    %482 = vmatpush1.msra.mxu0 %v242
    %483 = vmatprep.subr.mxu0 %v235
    %484 = vmatpush1.msra.mxu0 %v234
    %485 = vmatprep.subr.mxu0 %v227
    %486 = vmatpush1.msra.mxu0 %v226
    %487 = vmatprep.subr.mxu0 %v219
    %488 = vmatpush1.msra.mxu0 %v218
    %489 = vmatprep.subr.mxu0 %v211
    %490 = vmatpush1.msra.mxu0 %v210
    %491 = vmatprep.subr.mxu0 %v203
    %492 = vmatpush1.msra.mxu0 %v202
    %493 = vmatprep.subr.mxu0 %v451
    %494 = vmatpush2.msra.mxu0 %v450
    %495 = vmatprep.subr.mxu0 %v443
    %496 = vmatpush2.msra.mxu0 %v442
    %497 = vmatprep.subr.mxu0 %v435
    %498 = vmatpush2.msra.mxu0 %v434
    %499 = vmatprep.subr.mxu0 %v427
    %500 = vmatpush2.msra.mxu0 %v426
    %501 = vmatprep.subr.mxu0 %v419
    %502 = vmatpush2.msra.mxu0 %v418
    %503 = vmatprep.subr.mxu0 %v411
    %504 = vmatpush2.msra.mxu0 %v410
    %505 = vmatprep.subr.mxu0 %v403
    %506 = vmatpush2.msra.mxu0 %v402
    %507 = vmatprep.subr.mxu0 %v395
    %508 = vmatpush2.msra.mxu0 %v394
    %509 = vmatprep.subr.mxu0 %v387
    %510 = vmatpush2.msra.mxu0 %v386
    %511 = vmatprep.subr.mxu0 %v379
    %512 = vmatpush2.msra.mxu0 %v378
    %513 = vmatprep.subr.mxu0 %v371
    %514 = vmatpush2.msra.mxu0 %v370
    %515 = vmatprep.subr.mxu0 %v363
    %516 = vmatpush2.msra.mxu0 %v362
    %517 = vmatprep.subr.mxu0 %v355
    %518 = vmatpush2.msra.mxu0 %v354
    %519 = vmatprep.subr.mxu0 %v347
    %520 = vmatpush2.msra.mxu0 %v346
    %521 = vmatprep.subr.mxu0 %v339
    %522 = vmatpush2.msra.mxu0 %v338
    %523 = vmatprep.subr.mxu0 %v331
    %524 = vmatpush2.msra.mxu0 %v330
    %525 = vmatprep.mubr.f32.mxu0 %v459
    %526 = vmatmul.mubr.f32.gmra.mxu0 %v201
    %v527 = vpop.f32.mrf.mxu0
    %v528 = vadd.f32 0.0, %v527
    %v529 = vpop.f32.mrf.mxu0
    %v530 = vadd.f32 0.0, %v529
    %531 = vdwg.mxu0
    %532 = vmatprep.subr.mxu0 %v325
    %533 = vmatpush1.msra.mxu0 %v324
    %534 = vmatprep.subr.mxu0 %v317
    %535 = vmatpush1.msra.mxu0 %v316
    %536 = vmatprep.subr.mxu0 %v309
    %537 = vmatpush1.msra.mxu0 %v308
    %538 = vmatprep.subr.mxu0 %v301
    %539 = vmatpush1.msra.mxu0 %v300
    %540 = vmatprep.subr.mxu0 %v293
    %541 = vmatpush1.msra.mxu0 %v292
    %542 = vmatprep.subr.mxu0 %v285
    %543 = vmatpush1.msra.mxu0 %v284
    %544 = vmatprep.subr.mxu0 %v277
    %545 = vmatpush1.msra.mxu0 %v276
    %546 = vmatprep.subr.mxu0 %v269
    %547 = vmatpush1.msra.mxu0 %v268
    %548 = vmatprep.subr.mxu0 %v261
    %549 = vmatpush1.msra.mxu0 %v260
    %550 = vmatprep.subr.mxu0 %v253
    %551 = vmatpush1.msra.mxu0 %v252
    %552 = vmatprep.subr.mxu0 %v245
    %553 = vmatpush1.msra.mxu0 %v244
    %554 = vmatprep.subr.mxu0 %v237
    %555 = vmatpush1.msra.mxu0 %v236
    %556 = vmatprep.subr.mxu0 %v229
    %557 = vmatpush1.msra.mxu0 %v228
    %558 = vmatprep.subr.mxu0 %v221
    %559 = vmatpush1.msra.mxu0 %v220
    %560 = vmatprep.subr.mxu0 %v213
    %561 = vmatpush1.msra.mxu0 %v212
    %562 = vmatprep.subr.mxu0 %v205
    %563 = vmatpush1.msra.mxu0 %v204
    %564 = vmatprep.subr.mxu0 %v453
    %565 = vmatpush2.msra.mxu0 %v452
    %566 = vmatprep.subr.mxu0 %v445
    %567 = vmatpush2.msra.mxu0 %v444
    %568 = vmatprep.subr.mxu0 %v437
    %569 = vmatpush2.msra.mxu0 %v436
    %570 = vmatprep.subr.mxu0 %v429
    %571 = vmatpush2.msra.mxu0 %v428
    %572 = vmatprep.subr.mxu0 %v421
    %573 = vmatpush2.msra.mxu0 %v420
    %574 = vmatprep.subr.mxu0 %v413
    %575 = vmatpush2.msra.mxu0 %v412
    %576 = vmatprep.subr.mxu0 %v405
    %577 = vmatpush2.msra.mxu0 %v404
    %578 = vmatprep.subr.mxu0 %v397
    %579 = vmatpush2.msra.mxu0 %v396
    %580 = vmatprep.subr.mxu0 %v389
    %581 = vmatpush2.msra.mxu0 %v388
    %582 = vmatprep.subr.mxu0 %v381
    %583 = vmatpush2.msra.mxu0 %v380
    %584 = vmatprep.subr.mxu0 %v373
    %585 = vmatpush2.msra.mxu0 %v372
    %586 = vmatprep.subr.mxu0 %v365
    %587 = vmatpush2.msra.mxu0 %v364
    %588 = vmatprep.subr.mxu0 %v357
    %589 = vmatpush2.msra.mxu0 %v356
    %590 = vmatprep.subr.mxu0 %v349
    %591 = vmatpush2.msra.mxu0 %v348
    %592 = vmatprep.subr.mxu0 %v341
    %593 = vmatpush2.msra.mxu0 %v340
    %594 = vmatprep.subr.mxu0 %v333
    %595 = vmatpush2.msra.mxu0 %v332
    %596 = vmatprep.mubr.f32.mxu0 %v459
    %597 = vmatmul.mubr.f32.gmra.mxu0 %v201
    %v598 = vpop.f32.mrf.mxu0
    %v599 = vadd.f32 0.0, %v598
    %v600 = vpop.f32.mrf.mxu0
    %v601 = vadd.f32 0.0, %v600
    %602 = vdwg.mxu0
    %603 = vmatprep.subr.mxu0 %v327
    %604 = vmatpush1.msra.mxu0 %v326
    %605 = vmatprep.subr.mxu0 %v319
    %606 = vmatpush1.msra.mxu0 %v318
    %607 = vmatprep.subr.mxu0 %v311
    %608 = vmatpush1.msra.mxu0 %v310
    %609 = vmatprep.subr.mxu0 %v303
    %610 = vmatpush1.msra.mxu0 %v302
    %611 = vmatprep.subr.mxu0 %v295
    %612 = vmatpush1.msra.mxu0 %v294
    %613 = vmatprep.subr.mxu0 %v287
    %614 = vmatpush1.msra.mxu0 %v286
    %615 = vmatprep.subr.mxu0 %v279
    %616 = vmatpush1.msra.mxu0 %v278
    %617 = vmatprep.subr.mxu0 %v271
    %618 = vmatpush1.msra.mxu0 %v270
    %619 = vmatprep.subr.mxu0 %v263
    %620 = vmatpush1.msra.mxu0 %v262
    %621 = vmatprep.subr.mxu0 %v255
    %622 = vmatpush1.msra.mxu0 %v254
    %623 = vmatprep.subr.mxu0 %v247
    %624 = vmatpush1.msra.mxu0 %v246
    %625 = vmatprep.subr.mxu0 %v239
    %626 = vmatpush1.msra.mxu0 %v238
    %627 = vmatprep.subr.mxu0 %v231
    %628 = vmatpush1.msra.mxu0 %v230
    %629 = vmatprep.subr.mxu0 %v223
    %630 = vmatpush1.msra.mxu0 %v222
    %631 = vmatprep.subr.mxu0 %v215
    %632 = vmatpush1.msra.mxu0 %v214
    %633 = vmatprep.subr.mxu0 %v207
    %634 = vmatpush1.msra.mxu0 %v206
    %635 = vmatprep.subr.mxu0 %v455
    %636 = vmatpush2.msra.mxu0 %v454
    %637 = vmatprep.subr.mxu0 %v447
    %638 = vmatpush2.msra.mxu0 %v446
    %639 = vmatprep.subr.mxu0 %v439
    %640 = vmatpush2.msra.mxu0 %v438
    %641 = vmatprep.subr.mxu0 %v431
    %642 = vmatpush2.msra.mxu0 %v430
    %643 = vmatprep.subr.mxu0 %v423
    %644 = vmatpush2.msra.mxu0 %v422
    %645 = vmatprep.subr.mxu0 %v415
    %646 = vmatpush2.msra.mxu0 %v414
    %647 = vmatprep.subr.mxu0 %v407
    %648 = vmatpush2.msra.mxu0 %v406
    %649 = vmatprep.subr.mxu0 %v399
    %650 = vmatpush2.msra.mxu0 %v398
    %651 = vmatprep.subr.mxu0 %v391
    %652 = vmatpush2.msra.mxu0 %v390
    %653 = vmatprep.subr.mxu0 %v383
    %654 = vmatpush2.msra.mxu0 %v382
    %655 = vmatprep.subr.mxu0 %v375
    %656 = vmatpush2.msra.mxu0 %v374
    %657 = vmatprep.subr.mxu0 %v367
    %658 = vmatpush2.msra.mxu0 %v366
    %659 = vmatprep.subr.mxu0 %v359
    %660 = vmatpush2.msra.mxu0 %v358
    %661 = vmatprep.subr.mxu0 %v351
    %662 = vmatpush2.msra.mxu0 %v350
    %663 = vmatprep.subr.mxu0 %v343
    %664 = vmatpush2.msra.mxu0 %v342
    %665 = vmatprep.subr.mxu0 %v335
    %666 = vmatpush2.msra.mxu0 %v334
    %667 = vmatprep.mubr.f32.mxu0 %v459
    %668 = vmatmul.mubr.f32.gmra.mxu0 %v201
    %v669 = vpop.f32.mrf.mxu0
    %v670 = vadd.f32 0.0, %v669
    %v671 = vpop.f32.mrf.mxu0
    %v672 = vadd.f32 0.0, %v671
    %673 = vdwg.mxu0
    %674 = vmatprep.subr.mxu0 %v329
    %675 = vmatpush1.msra.mxu0 %v328
    %676 = vmatprep.subr.mxu0 %v321
    %677 = vmatpush1.msra.mxu0 %v320
    %678 = vmatprep.subr.mxu0 %v313
    %679 = vmatpush1.msra.mxu0 %v312
    %680 = vmatprep.subr.mxu0 %v305
    %681 = vmatpush1.msra.mxu0 %v304
    %682 = vmatprep.subr.mxu0 %v297
    %683 = vmatpush1.msra.mxu0 %v296
    %684 = vmatprep.subr.mxu0 %v289
    %685 = vmatpush1.msra.mxu0 %v288
    %686 = vmatprep.subr.mxu0 %v281
    %687 = vmatpush1.msra.mxu0 %v280
    %688 = vmatprep.subr.mxu0 %v273
    %689 = vmatpush1.msra.mxu0 %v272
    %690 = vmatprep.subr.mxu0 %v265
    %691 = vmatpush1.msra.mxu0 %v264
    %692 = vmatprep.subr.mxu0 %v257
    %693 = vmatpush1.msra.mxu0 %v256
    %694 = vmatprep.subr.mxu0 %v249
    %695 = vmatpush1.msra.mxu0 %v248
    %696 = vmatprep.subr.mxu0 %v241
    %697 = vmatpush1.msra.mxu0 %v240
    %698 = vmatprep.subr.mxu0 %v233
    %699 = vmatpush1.msra.mxu0 %v232
    %700 = vmatprep.subr.mxu0 %v225
    %701 = vmatpush1.msra.mxu0 %v224
    %702 = vmatprep.subr.mxu0 %v217
    %703 = vmatpush1.msra.mxu0 %v216
    %704 = vmatprep.subr.mxu0 %v209
    %705 = vmatpush1.msra.mxu0 %v208
    %706 = vmatprep.subr.mxu0 %v457
    %707 = vmatpush2.msra.mxu0 %v456
    %708 = vmatprep.subr.mxu0 %v449
    %709 = vmatpush2.msra.mxu0 %v448
    %710 = vmatprep.subr.mxu0 %v441
    %711 = vmatpush2.msra.mxu0 %v440
    %712 = vmatprep.subr.mxu0 %v433
    %713 = vmatpush2.msra.mxu0 %v432
    %714 = vmatprep.subr.mxu0 %v425
    %715 = vmatpush2.msra.mxu0 %v424
    %716 = vmatprep.subr.mxu0 %v417
    %717 = vmatpush2.msra.mxu0 %v416
    %718 = vmatprep.subr.mxu0 %v409
    %719 = vmatpush2.msra.mxu0 %v408
    %720 = vmatprep.subr.mxu0 %v401
    %721 = vmatpush2.msra.mxu0 %v400
    %722 = vmatprep.subr.mxu0 %v393
    %723 = vmatpush2.msra.mxu0 %v392
    %724 = vmatprep.subr.mxu0 %v385
    %725 = vmatpush2.msra.mxu0 %v384
    %726 = vmatprep.subr.mxu0 %v377
    %727 = vmatpush2.msra.mxu0 %v376
    %728 = vmatprep.subr.mxu0 %v369
    %729 = vmatpush2.msra.mxu0 %v368
    %730 = vmatprep.subr.mxu0 %v361
    %731 = vmatpush2.msra.mxu0 %v360
    %732 = vmatprep.subr.mxu0 %v353
    %733 = vmatpush2.msra.mxu0 %v352
    %734 = vmatprep.subr.mxu0 %v345
    %735 = vmatpush2.msra.mxu0 %v344
    %736 = vmatprep.subr.mxu0 %v337
    %737 = vmatpush2.msra.mxu0 %v336
    %738 = vmatprep.mubr.f32.mxu0 %v459
    %739 = vmatmul.mubr.f32.gmra.mxu0 %v201
    %v740 = vpop.f32.mrf.mxu0
    %v741 = vadd.f32 0.0, %v740
    %v742 = vpop.f32.mrf.mxu0
    %v743 = vadd.f32 0.0, %v742
    %744 = vdwg.mxu0
    %745 = vst [vmem:[#allocation2 + $0x8] sm:$0xf] %v528
    %746 = vst [vmem:[#allocation2 + $0x10] sm:$0xf] %v530
    %747 = vst [vmem:[#allocation2 + $0x18] sm:$0xf] %v599
    %748 = vst [vmem:[#allocation2 + $0x20] sm:$0xf] %v601
    %749 = vst [vmem:[#allocation2 + $0x28] sm:$0xf] %v670
    %750 = vst [vmem:[#allocation2 + $0x30] sm:$0xf] %v672
    %751 = vst [vmem:[#allocation2 + $0x38] sm:$0xf] %v741
    %752 = vst [vmem:[#allocation2 + $0x40] sm:$0xf] %v743
    %v753 = vld [vmem:[#allocation2] sm:$0xf]
    %v754 = vld [vmem:[#allocation2 + $0x8] sm:$0xf]
    %v755 = vld [vmem:[#allocation2 + $0x10] sm:$0xf]
    %v756 = vld [vmem:[#allocation2 + $0x18] sm:$0xf]
    %v757 = vld [vmem:[#allocation2 + $0x20] sm:$0xf]
    %v758 = vld [vmem:[#allocation2 + $0x28] sm:$0xf]
    %v759 = vld [vmem:[#allocation2 + $0x30] sm:$0xf]
    %v760 = vld [vmem:[#allocation2 + $0x38] sm:$0xf]
    %v761 = vld [vmem:[#allocation2 + $0x40] sm:$0xf]
    %v762 = vsel %vm169, 1, 0
    %v763 = vsel %vm170, 1, 0
    %v764 = vsel %vm171, 1, 0
    %v765 = vsel %vm172, 1, 0
    %v766 = vsel %vm173, 1, 0
    %v767 = vsel %vm174, 1, 0
    %v768 = vsel %vm175, 1, 0
    %v769 = vsel %vm176, 1, 0
    %vm770 = vcmp.eq.s32.totalorder %v762, 1
    %vm771 = vcmp.eq.s32.totalorder %v763, 1
    %vm772 = vcmp.eq.s32.totalorder %v764, 1
    %vm773 = vcmp.eq.s32.totalorder %v765, 1
    %vm774 = vcmp.eq.s32.totalorder %v766, 1
    %vm775 = vcmp.eq.s32.totalorder %v767, 1
    %vm776 = vcmp.eq.s32.totalorder %v768, 1
    %vm777 = vcmp.eq.s32.totalorder %v769, 1
    %787 = vrot.lane.b32.xlu0 %v753, 33
    %v788 = vpop.permute.xlu0 %787
    %789 = vrot.lane.b32.xlu0 %v754, 33
    %v790 = vpop.permute.xlu0 %789
    %791 = vrot.lane.b32.xlu0 %v755, 33
    %v792 = vpop.permute.xlu0 %791
    %793 = vrot.lane.b32.xlu0 %v756, 33
    %v794 = vpop.permute.xlu0 %793
    %795 = vrot.lane.b32.xlu0 %v757, 33
    %v796 = vpop.permute.xlu0 %795
    %797 = vrot.lane.b32.xlu0 %v758, 33
    %v798 = vpop.permute.xlu0 %797
    %799 = vrot.lane.b32.xlu0 %v759, 33
    %v800 = vpop.permute.xlu0 %799
    %801 = vrot.lane.b32.xlu0 %v760, 33
    %v802 = vpop.permute.xlu0 %801
    %803 = vrot.lane.b32.xlu0 %v761, 33
    %v804 = vpop.permute.xlu0 %803
    %vm805 = vcmask 269312
    %v806 = vsel %vm805, %v788, %v790
    %v807 = vsel %vm805, %v790, %v792
    %v808 = vsel %vm805, %v792, %v794
    %v809 = vsel %vm805, %v794, %v796
    %v810 = vsel %vm805, %v796, %v798
    %v811 = vsel %vm805, %v798, %v800
    %v812 = vsel %vm805, %v800, %v802
    %v813 = vsel %vm805, %v802, %v804
    %v822 = vsel %vm770, %v806, 0.0
    %v823 = vsel %vm771, %v807, 0.0
    %v824 = vsel %vm772, %v808, 0.0
    %v825 = vsel %vm773, %v809, 0.0
    %v826 = vsel %vm774, %v810, 0.0
    %v827 = vsel %vm775, %v811, 0.0
    %v828 = vsel %vm776, %v812, 0.0
    %v829 = vsel %vm777, %v813, 0.0
    %830 = vst [vmem:[#allocation3] sm:$0xf] %v822
    %831 = vst [vmem:[#allocation3 + $0x8] sm:$0xf] %v823
    %832 = vst [vmem:[#allocation3 + $0x10] sm:$0xf] %v824
    %833 = vst [vmem:[#allocation3 + $0x18] sm:$0xf] %v825
    %834 = vst [vmem:[#allocation3 + $0x20] sm:$0xf] %v826
    %835 = vst [vmem:[#allocation3 + $0x28] sm:$0xf] %v827
    %836 = vst [vmem:[#allocation3 + $0x30] sm:$0xf] %v828
    %837 = vst [vmem:[#allocation3 + $0x38] sm:$0xf] %v829
    %v838 = vld [vmem:[#allocation2] sm:$0xf]
    %v839 = vld [vmem:[#allocation2 + $0x8] sm:$0xf]
    %v840 = vld [vmem:[#allocation2 + $0x10] sm:$0xf]
    %v841 = vld [vmem:[#allocation2 + $0x18] sm:$0xf]
    %v842 = vld [vmem:[#allocation2 + $0x20] sm:$0xf]
    %v843 = vld [vmem:[#allocation2 + $0x28] sm:$0xf]
    %v844 = vld [vmem:[#allocation2 + $0x30] sm:$0xf]
    %v845 = vld [vmem:[#allocation2 + $0x38] sm:$0xf]
    %v846 = vld [vmem:[#allocation2 + $0x40] sm:$0xf]
    %v856 = vrot.slane %v838, 4
    %v857 = vrot.slane %v839, 4
    %v858 = vrot.slane %v840, 4
    %v859 = vrot.slane %v841, 4
    %v860 = vrot.slane %v842, 4
    %v861 = vrot.slane %v843, 4
    %v862 = vrot.slane %v844, 4
    %v863 = vrot.slane %v845, 4
    %v864 = vrot.slane %v846, 4
    %865 = vrot.lane.b32.xlu0 %v856, 32
    %v866 = vpop.permute.xlu0 %865
    %867 = vrot.lane.b32.xlu0 %v857, 32
    %v868 = vpop.permute.xlu0 %867
    %869 = vrot.lane.b32.xlu0 %v858, 32
    %v870 = vpop.permute.xlu0 %869
    %871 = vrot.lane.b32.xlu0 %v859, 32
    %v872 = vpop.permute.xlu0 %871
    %873 = vrot.lane.b32.xlu0 %v860, 32
    %v874 = vpop.permute.xlu0 %873
    %875 = vrot.lane.b32.xlu0 %v861, 32
    %v876 = vpop.permute.xlu0 %875
    %877 = vrot.lane.b32.xlu0 %v862, 32
    %v878 = vpop.permute.xlu0 %877
    %879 = vrot.lane.b32.xlu0 %v863, 32
    %v880 = vpop.permute.xlu0 %879
    %881 = vrot.lane.b32.xlu0 %v864, 32
    %v882 = vpop.permute.xlu0 %881
    %vm883 = vcmask 261120
    %v884 = vsel %vm883, %v866, %v868
    %v885 = vsel %vm883, %v868, %v870
    %v886 = vsel %vm883, %v870, %v872
    %v887 = vsel %vm883, %v872, %v874
    %v888 = vsel %vm883, %v874, %v876
    %v889 = vsel %vm883, %v876, %v878
    %v890 = vsel %vm883, %v878, %v880
    %v891 = vsel %vm883, %v880, %v882
    %900 = vst [vmem:[#allocation3] sm:$0xf0] %v884
    %901 = vst [vmem:[#allocation3 + $0x8] sm:$0xf0] %v885
    %902 = vst [vmem:[#allocation3 + $0x10] sm:$0xf0] %v886
    %903 = vst [vmem:[#allocation3 + $0x18] sm:$0xf0] %v887
    %904 = vst [vmem:[#allocation3 + $0x20] sm:$0xf0] %v888
    %905 = vst [vmem:[#allocation3 + $0x28] sm:$0xf0] %v889
    %906 = vst [vmem:[#allocation3 + $0x30] sm:$0xf0] %v890
    %907 = vst [vmem:[#allocation3 + $0x38] sm:$0xf0] %v891
    %v908 = vld [vmem:[#allocation2] sm:$0xf]
    %v909 = vld [vmem:[#allocation2 + $0x8] sm:$0xf]
    %v910 = vld [vmem:[#allocation2 + $0x10] sm:$0xf]
    %v911 = vld [vmem:[#allocation2 + $0x18] sm:$0xf]
    %v912 = vld [vmem:[#allocation2 + $0x20] sm:$0xf]
    %v913 = vld [vmem:[#allocation2 + $0x28] sm:$0xf]
    %v914 = vld [vmem:[#allocation2 + $0x30] sm:$0xf]
    %v915 = vld [vmem:[#allocation2 + $0x38] sm:$0xf]
    %v916 = vld [vmem:[#allocation2 + $0x40] sm:$0xf]
    %v917 = vsel %vm193, 1, 0
    %v918 = vsel %vm194, 1, 0
    %v919 = vsel %vm195, 1, 0
    %v920 = vsel %vm196, 1, 0
    %v921 = vsel %vm197, 1, 0
    %v922 = vsel %vm198, 1, 0
    %v923 = vsel %vm199, 1, 0
    %v924 = vsel %vm200, 1, 0
    %vm925 = vcmp.eq.s32.totalorder %v917, 1
    %vm926 = vcmp.eq.s32.totalorder %v918, 1
    %vm927 = vcmp.eq.s32.totalorder %v919, 1
    %vm928 = vcmp.eq.s32.totalorder %v920, 1
    %vm929 = vcmp.eq.s32.totalorder %v921, 1
    %vm930 = vcmp.eq.s32.totalorder %v922, 1
    %vm931 = vcmp.eq.s32.totalorder %v923, 1
    %vm932 = vcmp.eq.s32.totalorder %v924, 1
    %942 = vrot.lane.b32.xlu0 %v908, 31
    %v943 = vpop.permute.xlu0 %942
    %944 = vrot.lane.b32.xlu0 %v909, 31
    %v945 = vpop.permute.xlu0 %944
    %946 = vrot.lane.b32.xlu0 %v910, 31
    %v947 = vpop.permute.xlu0 %946
    %948 = vrot.lane.b32.xlu0 %v911, 31
    %v949 = vpop.permute.xlu0 %948
    %950 = vrot.lane.b32.xlu0 %v912, 31
    %v951 = vpop.permute.xlu0 %950
    %952 = vrot.lane.b32.xlu0 %v913, 31
    %v953 = vpop.permute.xlu0 %952
    %954 = vrot.lane.b32.xlu0 %v914, 31
    %v955 = vpop.permute.xlu0 %954
    %956 = vrot.lane.b32.xlu0 %v915, 31
    %v957 = vpop.permute.xlu0 %956
    %958 = vrot.lane.b32.xlu0 %v916, 31
    %v959 = vpop.permute.xlu0 %958
    %vm960 = vcmask 252928
    %v961 = vsel %vm960, %v943, %v945
    %v962 = vsel %vm960, %v945, %v947
    %v963 = vsel %vm960, %v947, %v949
    %v964 = vsel %vm960, %v949, %v951
    %v965 = vsel %vm960, %v951, %v953
    %v966 = vsel %vm960, %v953, %v955
    %v967 = vsel %vm960, %v955, %v957
    %v968 = vsel %vm960, %v957, %v959
    %v977 = vsel %vm925, %v961, 0.0
    %v978 = vsel %vm926, %v962, 0.0
    %v979 = vsel %vm927, %v963, 0.0
    %v980 = vsel %vm928, %v964, 0.0
    %v981 = vsel %vm929, %v965, 0.0
    %v982 = vsel %vm930, %v966, 0.0
    %v983 = vsel %vm931, %v967, 0.0
    %v984 = vsel %vm932, %v968, 0.0
    %985 = vst [vmem:[#allocation3 + $0x80] sm:$0xf] %v977
    %986 = vst [vmem:[#allocation3 + $0x88] sm:$0xf] %v978
    %987 = vst [vmem:[#allocation3 + $0x90] sm:$0xf] %v979
    %988 = vst [vmem:[#allocation3 + $0x98] sm:$0xf] %v980
    %989 = vst [vmem:[#allocation3 + $0xa0] sm:$0xf] %v981
    %990 = vst [vmem:[#allocation3 + $0xa8] sm:$0xf] %v982
    %991 = vst [vmem:[#allocation3 + $0xb0] sm:$0xf] %v983
    %992 = vst [vmem:[#allocation3 + $0xb8] sm:$0xf] %v984
    %v993 = vld [vmem:[#allocation2] sm:$0xf]
    %v994 = vld [vmem:[#allocation2 + $0x8] sm:$0xf]
    %v995 = vld [vmem:[#allocation2 + $0x10] sm:$0xf]
    %v996 = vld [vmem:[#allocation2 + $0x18] sm:$0xf]
    %v997 = vld [vmem:[#allocation2 + $0x20] sm:$0xf]
    %v998 = vld [vmem:[#allocation2 + $0x28] sm:$0xf]
    %v999 = vld [vmem:[#allocation2 + $0x30] sm:$0xf]
    %v1000 = vld [vmem:[#allocation2 + $0x38] sm:$0xf]
    %v1001 = vld [vmem:[#allocation2 + $0x40] sm:$0xf]
    %1011 = vrot.lane.b32.xlu0 %v993, 1
    %v1012 = vpop.permute.xlu0 %1011
    %1013 = vrot.lane.b32.xlu0 %v994, 1
    %v1014 = vpop.permute.xlu0 %1013
    %1015 = vrot.lane.b32.xlu0 %v995, 1
    %v1016 = vpop.permute.xlu0 %1015
    %1017 = vrot.lane.b32.xlu0 %v996, 1
    %v1018 = vpop.permute.xlu0 %1017
    %1019 = vrot.lane.b32.xlu0 %v997, 1
    %v1020 = vpop.permute.xlu0 %1019
    %1021 = vrot.lane.b32.xlu0 %v998, 1
    %v1022 = vpop.permute.xlu0 %1021
    %1023 = vrot.lane.b32.xlu0 %v999, 1
    %v1024 = vpop.permute.xlu0 %1023
    %1025 = vrot.lane.b32.xlu0 %v1000, 1
    %v1026 = vpop.permute.xlu0 %1025
    %1027 = vrot.lane.b32.xlu0 %v1001, 1
    %v1028 = vpop.permute.xlu0 %1027
    %vm1029 = vcmask 7168
    %v1030 = vsel %vm1029, %v1012, %v1014
    %v1031 = vsel %vm1029, %v1014, %v1016
    %v1032 = vsel %vm1029, %v1016, %v1018
    %v1033 = vsel %vm1029, %v1018, %v1020
    %v1034 = vsel %vm1029, %v1020, %v1022
    %v1035 = vsel %vm1029, %v1022, %v1024
    %v1036 = vsel %vm1029, %v1024, %v1026
    %v1037 = vsel %vm1029, %v1026, %v1028
    %v1046 = vsel %vm770, %v1030, 0.0
    %v1047 = vsel %vm771, %v1031, 0.0
    %v1048 = vsel %vm772, %v1032, 0.0
    %v1049 = vsel %vm773, %v1033, 0.0
    %v1050 = vsel %vm774, %v1034, 0.0
    %v1051 = vsel %vm775, %v1035, 0.0
    %v1052 = vsel %vm776, %v1036, 0.0
    %v1053 = vsel %vm777, %v1037, 0.0
    %v1062 = vrot.slane %v1046, 4
    %v1063 = vrot.slane %v1047, 4
    %v1064 = vrot.slane %v1048, 4
    %v1065 = vrot.slane %v1049, 4
    %v1066 = vrot.slane %v1050, 4
    %v1067 = vrot.slane %v1051, 4
    %v1068 = vrot.slane %v1052, 4
    %v1069 = vrot.slane %v1053, 4
    %1078 = vst [vmem:[#allocation3 + $0x80] sm:$0xf0] %v1062
    %1079 = vst [vmem:[#allocation3 + $0x88] sm:$0xf0] %v1063
    %1080 = vst [vmem:[#allocation3 + $0x90] sm:$0xf0] %v1064
    %1081 = vst [vmem:[#allocation3 + $0x98] sm:$0xf0] %v1065
    %1082 = vst [vmem:[#allocation3 + $0xa0] sm:$0xf0] %v1066
    %1083 = vst [vmem:[#allocation3 + $0xa8] sm:$0xf0] %v1067
    %1084 = vst [vmem:[#allocation3 + $0xb0] sm:$0xf0] %v1068
    %1085 = vst [vmem:[#allocation3 + $0xb8] sm:$0xf0] %v1069
    %v1086 = vld [vmem:[#allocation2 + $0x8] sm:$0xf]
    %v1087 = vld [vmem:[#allocation2 + $0x10] sm:$0xf]
    %v1088 = vld [vmem:[#allocation2 + $0x18] sm:$0xf]
    %v1089 = vld [vmem:[#allocation2 + $0x20] sm:$0xf]
    %v1090 = vld [vmem:[#allocation2 + $0x28] sm:$0xf]
    %v1091 = vld [vmem:[#allocation2 + $0x30] sm:$0xf]
    %v1092 = vld [vmem:[#allocation2 + $0x38] sm:$0xf]
    %v1093 = vld [vmem:[#allocation2 + $0x40] sm:$0xf]
    %1094 = vst [vmem:[#allocation3 + $0x100] sm:$0xf] %v1086
    %1095 = vst [vmem:[#allocation3 + $0x108] sm:$0xf] %v1087
    %1096 = vst [vmem:[#allocation3 + $0x110] sm:$0xf] %v1088
    %1097 = vst [vmem:[#allocation3 + $0x118] sm:$0xf] %v1089
    %1098 = vst [vmem:[#allocation3 + $0x120] sm:$0xf] %v1090
    %1099 = vst [vmem:[#allocation3 + $0x128] sm:$0xf] %v1091
    %1100 = vst [vmem:[#allocation3 + $0x130] sm:$0xf] %v1092
    %1101 = vst [vmem:[#allocation3 + $0x138] sm:$0xf] %v1093
    %v1102 = vld [vmem:[#allocation2 + $0x8] sm:$0xf]
    %v1103 = vld [vmem:[#allocation2 + $0x10] sm:$0xf]
    %v1104 = vld [vmem:[#allocation2 + $0x18] sm:$0xf]
    %v1105 = vld [vmem:[#allocation2 + $0x20] sm:$0xf]
    %v1106 = vld [vmem:[#allocation2 + $0x28] sm:$0xf]
    %v1107 = vld [vmem:[#allocation2 + $0x30] sm:$0xf]
    %v1108 = vld [vmem:[#allocation2 + $0x38] sm:$0xf]
    %v1109 = vld [vmem:[#allocation2 + $0x40] sm:$0xf]
    %v1110 = vld [vmem:[#allocation2 + $0x48] sm:$0xf]
    %1120 = vrot.lane.b32.xlu0 %v1102, 127
    %v1121 = vpop.permute.xlu0 %1120
    %1122 = vrot.lane.b32.xlu0 %v1103, 127
    %v1123 = vpop.permute.xlu0 %1122
    %1124 = vrot.lane.b32.xlu0 %v1104, 127
    %v1125 = vpop.permute.xlu0 %1124
    %1126 = vrot.lane.b32.xlu0 %v1105, 127
    %v1127 = vpop.permute.xlu0 %1126
    %1128 = vrot.lane.b32.xlu0 %v1106, 127
    %v1129 = vpop.permute.xlu0 %1128
    %1130 = vrot.lane.b32.xlu0 %v1107, 127
    %v1131 = vpop.permute.xlu0 %1130
    %1132 = vrot.lane.b32.xlu0 %v1108, 127
    %v1133 = vpop.permute.xlu0 %1132
    %1134 = vrot.lane.b32.xlu0 %v1109, 127
    %v1135 = vpop.permute.xlu0 %1134
    %1136 = vrot.lane.b32.xlu0 %v1110, 127
    %v1137 = vpop.permute.xlu0 %1136
    %vm1138 = vcmask 1039360
    %v1139 = vsel %vm1138, %v1121, %v1123
    %v1140 = vsel %vm1138, %v1123, %v1125
    %v1141 = vsel %vm1138, %v1125, %v1127
    %v1142 = vsel %vm1138, %v1127, %v1129
    %v1143 = vsel %vm1138, %v1129, %v1131
    %v1144 = vsel %vm1138, %v1131, %v1133
    %v1145 = vsel %vm1138, %v1133, %v1135
    %v1146 = vsel %vm1138, %v1135, %v1137
    %v1155 = vsel %vm925, %v1139, 0.0
    %v1156 = vsel %vm926, %v1140, 0.0
    %v1157 = vsel %vm927, %v1141, 0.0
    %v1158 = vsel %vm928, %v1142, 0.0
    %v1159 = vsel %vm929, %v1143, 0.0
    %v1160 = vsel %vm930, %v1144, 0.0
    %v1161 = vsel %vm931, %v1145, 0.0
    %v1162 = vsel %vm932, %v1146, 0.0
    %v1171 = vrot.slane %v1155, 4
    %v1172 = vrot.slane %v1156, 4
    %v1173 = vrot.slane %v1157, 4
    %v1174 = vrot.slane %v1158, 4
    %v1175 = vrot.slane %v1159, 4
    %v1176 = vrot.slane %v1160, 4
    %v1177 = vrot.slane %v1161, 4
    %v1178 = vrot.slane %v1162, 4
    %1187 = vst [vmem:[#allocation3 + $0x100] sm:$0xf0] %v1171
    %1188 = vst [vmem:[#allocation3 + $0x108] sm:$0xf0] %v1172
    %1189 = vst [vmem:[#allocation3 + $0x110] sm:$0xf0] %v1173
    %1190 = vst [vmem:[#allocation3 + $0x118] sm:$0xf0] %v1174
    %1191 = vst [vmem:[#allocation3 + $0x120] sm:$0xf0] %v1175
    %1192 = vst [vmem:[#allocation3 + $0x128] sm:$0xf0] %v1176
    %1193 = vst [vmem:[#allocation3 + $0x130] sm:$0xf0] %v1177
    %1194 = vst [vmem:[#allocation3 + $0x138] sm:$0xf0] %v1178
    %v1195 = vld [vmem:[#allocation2 + $0x8] sm:$0xf]
    %v1196 = vld [vmem:[#allocation2 + $0x10] sm:$0xf]
    %v1197 = vld [vmem:[#allocation2 + $0x18] sm:$0xf]
    %v1198 = vld [vmem:[#allocation2 + $0x20] sm:$0xf]
    %v1199 = vld [vmem:[#allocation2 + $0x28] sm:$0xf]
    %v1200 = vld [vmem:[#allocation2 + $0x30] sm:$0xf]
    %v1201 = vld [vmem:[#allocation2 + $0x38] sm:$0xf]
    %v1202 = vld [vmem:[#allocation2 + $0x40] sm:$0xf]
    %v1203 = vld [vmem:[#allocation2 + $0x48] sm:$0xf]
    %1213 = vrot.lane.b32.xlu0 %v1195, 97
    %v1214 = vpop.permute.xlu0 %1213
    %1215 = vrot.lane.b32.xlu0 %v1196, 97
    %v1216 = vpop.permute.xlu0 %1215
    %1217 = vrot.lane.b32.xlu0 %v1197, 97
    %v1218 = vpop.permute.xlu0 %1217
    %1219 = vrot.lane.b32.xlu0 %v1198, 97
    %v1220 = vpop.permute.xlu0 %1219
    %1221 = vrot.lane.b32.xlu0 %v1199, 97
    %v1222 = vpop.permute.xlu0 %1221
    %1223 = vrot.lane.b32.xlu0 %v1200, 97
    %v1224 = vpop.permute.xlu0 %1223
    %1225 = vrot.lane.b32.xlu0 %v1201, 97
    %v1226 = vpop.permute.xlu0 %1225
    %1227 = vrot.lane.b32.xlu0 %v1202, 97
    %v1228 = vpop.permute.xlu0 %1227
    %1229 = vrot.lane.b32.xlu0 %v1203, 97
    %v1230 = vpop.permute.xlu0 %1229
    %vm1231 = vcmask 793600
    %v1232 = vsel %vm1231, %v1214, %v1216
    %v1233 = vsel %vm1231, %v1216, %v1218
    %v1234 = vsel %vm1231, %v1218, %v1220
    %v1235 = vsel %vm1231, %v1220, %v1222
    %v1236 = vsel %vm1231, %v1222, %v1224
    %v1237 = vsel %vm1231, %v1224, %v1226
    %v1238 = vsel %vm1231, %v1226, %v1228
    %v1239 = vsel %vm1231, %v1228, %v1230
    %v1248 = vsel %vm770, %v1232, 0.0
    %v1249 = vsel %vm771, %v1233, 0.0
    %v1250 = vsel %vm772, %v1234, 0.0
    %v1251 = vsel %vm773, %v1235, 0.0
    %v1252 = vsel %vm774, %v1236, 0.0
    %v1253 = vsel %vm775, %v1237, 0.0
    %v1254 = vsel %vm776, %v1238, 0.0
    %v1255 = vsel %vm777, %v1239, 0.0
    %1256 = vst [vmem:[#allocation3 + $0x180] sm:$0xf] %v1248
    %1257 = vst [vmem:[#allocation3 + $0x188] sm:$0xf] %v1249
    %1258 = vst [vmem:[#allocation3 + $0x190] sm:$0xf] %v1250
    %1259 = vst [vmem:[#allocation3 + $0x198] sm:$0xf] %v1251
    %1260 = vst [vmem:[#allocation3 + $0x1a0] sm:$0xf] %v1252
    %1261 = vst [vmem:[#allocation3 + $0x1a8] sm:$0xf] %v1253
    %1262 = vst [vmem:[#allocation3 + $0x1b0] sm:$0xf] %v1254
    %1263 = vst [vmem:[#allocation3 + $0x1b8] sm:$0xf] %v1255
    %v1264 = vld [vmem:[#allocation2 + $0x8] sm:$0xf]
    %v1265 = vld [vmem:[#allocation2 + $0x10] sm:$0xf]
    %v1266 = vld [vmem:[#allocation2 + $0x18] sm:$0xf]
    %v1267 = vld [vmem:[#allocation2 + $0x20] sm:$0xf]
    %v1268 = vld [vmem:[#allocation2 + $0x28] sm:$0xf]
    %v1269 = vld [vmem:[#allocation2 + $0x30] sm:$0xf]
    %v1270 = vld [vmem:[#allocation2 + $0x38] sm:$0xf]
    %v1271 = vld [vmem:[#allocation2 + $0x40] sm:$0xf]
    %v1272 = vld [vmem:[#allocation2 + $0x48] sm:$0xf]
    %v1282 = vrot.slane %v1264, 4
    %v1283 = vrot.slane %v1265, 4
    %v1284 = vrot.slane %v1266, 4
    %v1285 = vrot.slane %v1267, 4
    %v1286 = vrot.slane %v1268, 4
    %v1287 = vrot.slane %v1269, 4
    %v1288 = vrot.slane %v1270, 4
    %v1289 = vrot.slane %v1271, 4
    %v1290 = vrot.slane %v1272, 4
    %1291 = vrot.lane.b32.xlu0 %v1282, 96
    %v1292 = vpop.permute.xlu0 %1291
    %1293 = vrot.lane.b32.xlu0 %v1283, 96
    %v1294 = vpop.permute.xlu0 %1293
    %1295 = vrot.lane.b32.xlu0 %v1284, 96
    %v1296 = vpop.permute.xlu0 %1295
    %1297 = vrot.lane.b32.xlu0 %v1285, 96
    %v1298 = vpop.permute.xlu0 %1297
    %1299 = vrot.lane.b32.xlu0 %v1286, 96
    %v1300 = vpop.permute.xlu0 %1299
    %1301 = vrot.lane.b32.xlu0 %v1287, 96
    %v1302 = vpop.permute.xlu0 %1301
    %1303 = vrot.lane.b32.xlu0 %v1288, 96
    %v1304 = vpop.permute.xlu0 %1303
    %1305 = vrot.lane.b32.xlu0 %v1289, 96
    %v1306 = vpop.permute.xlu0 %1305
    %1307 = vrot.lane.b32.xlu0 %v1290, 96
    %v1308 = vpop.permute.xlu0 %1307
    %vm1309 = vcmask 785408
    %v1310 = vsel %vm1309, %v1292, %v1294
    %v1311 = vsel %vm1309, %v1294, %v1296
    %v1312 = vsel %vm1309, %v1296, %v1298
    %v1313 = vsel %vm1309, %v1298, %v1300
    %v1314 = vsel %vm1309, %v1300, %v1302
    %v1315 = vsel %vm1309, %v1302, %v1304
    %v1316 = vsel %vm1309, %v1304, %v1306
    %v1317 = vsel %vm1309, %v1306, %v1308
    %1326 = vst [vmem:[#allocation3 + $0x180] sm:$0xf0] %v1310
    %1327 = vst [vmem:[#allocation3 + $0x188] sm:$0xf0] %v1311
    %1328 = vst [vmem:[#allocation3 + $0x190] sm:$0xf0] %v1312
    %1329 = vst [vmem:[#allocation3 + $0x198] sm:$0xf0] %v1313
    %1330 = vst [vmem:[#allocation3 + $0x1a0] sm:$0xf0] %v1314
    %1331 = vst [vmem:[#allocation3 + $0x1a8] sm:$0xf0] %v1315
    %1332 = vst [vmem:[#allocation3 + $0x1b0] sm:$0xf0] %v1316
    %1333 = vst [vmem:[#allocation3 + $0x1b8] sm:$0xf0] %v1317
    %v1334 = vld [vmem:[#allocation2 + $0x8] sm:$0xf]
    %v1335 = vld [vmem:[#allocation2 + $0x10] sm:$0xf]
    %v1336 = vld [vmem:[#allocation2 + $0x18] sm:$0xf]
    %v1337 = vld [vmem:[#allocation2 + $0x20] sm:$0xf]
    %v1338 = vld [vmem:[#allocation2 + $0x28] sm:$0xf]
    %v1339 = vld [vmem:[#allocation2 + $0x30] sm:$0xf]
    %v1340 = vld [vmem:[#allocation2 + $0x38] sm:$0xf]
    %v1341 = vld [vmem:[#allocation2 + $0x40] sm:$0xf]
    %v1342 = vld [vmem:[#allocation2 + $0x48] sm:$0xf]
    %1352 = vrot.lane.b32.xlu0 %v1334, 95
    %v1353 = vpop.permute.xlu0 %1352
    %1354 = vrot.lane.b32.xlu0 %v1335, 95
    %v1355 = vpop.permute.xlu0 %1354
    %1356 = vrot.lane.b32.xlu0 %v1336, 95
    %v1357 = vpop.permute.xlu0 %1356
    %1358 = vrot.lane.b32.xlu0 %v1337, 95
    %v1359 = vpop.permute.xlu0 %1358
    %1360 = vrot.lane.b32.xlu0 %v1338, 95
    %v1361 = vpop.permute.xlu0 %1360
    %1362 = vrot.lane.b32.xlu0 %v1339, 95
    %v1363 = vpop.permute.xlu0 %1362
    %1364 = vrot.lane.b32.xlu0 %v1340, 95
    %v1365 = vpop.permute.xlu0 %1364
    %1366 = vrot.lane.b32.xlu0 %v1341, 95
    %v1367 = vpop.permute.xlu0 %1366
    %1368 = vrot.lane.b32.xlu0 %v1342, 95
    %v1369 = vpop.permute.xlu0 %1368
    %vm1370 = vcmask 777216
    %v1371 = vsel %vm1370, %v1353, %v1355
    %v1372 = vsel %vm1370, %v1355, %v1357
    %v1373 = vsel %vm1370, %v1357, %v1359
    %v1374 = vsel %vm1370, %v1359, %v1361
    %v1375 = vsel %vm1370, %v1361, %v1363
    %v1376 = vsel %vm1370, %v1363, %v1365
    %v1377 = vsel %vm1370, %v1365, %v1367
    %v1378 = vsel %vm1370, %v1367, %v1369
    %v1387 = vsel %vm925, %v1371, 0.0
    %v1388 = vsel %vm926, %v1372, 0.0
    %v1389 = vsel %vm927, %v1373, 0.0
    %v1390 = vsel %vm928, %v1374, 0.0
    %v1391 = vsel %vm929, %v1375, 0.0
    %v1392 = vsel %vm930, %v1376, 0.0
    %v1393 = vsel %vm931, %v1377, 0.0
    %v1394 = vsel %vm932, %v1378, 0.0
    %1395 = vst [vmem:[#allocation3 + $0x200] sm:$0xf] %v1387
    %1396 = vst [vmem:[#allocation3 + $0x208] sm:$0xf] %v1388
    %1397 = vst [vmem:[#allocation3 + $0x210] sm:$0xf] %v1389
    %1398 = vst [vmem:[#allocation3 + $0x218] sm:$0xf] %v1390
    %1399 = vst [vmem:[#allocation3 + $0x220] sm:$0xf] %v1391
    %1400 = vst [vmem:[#allocation3 + $0x228] sm:$0xf] %v1392
    %1401 = vst [vmem:[#allocation3 + $0x230] sm:$0xf] %v1393
    %1402 = vst [vmem:[#allocation3 + $0x238] sm:$0xf] %v1394
    %s1403 = scalar_lea.vmem [#allocation4], 8
    %v1404 = vld [vmem:[%s1403] sm:$0xff]
    %v1405 = vld [vmem:[#allocation7] sm:$0xff]
    %v1406 = vld [vmem:[#allocation7 + $0x8] sm:$0xff]
    %v1407 = vld [vmem:[#allocation7 + $0x10] sm:$0xff]
    %v1408 = vld [vmem:[#allocation7 + $0x18] sm:$0xff]
    %v1409 = vld [vmem:[#allocation7 + $0x20] sm:$0xff]
    %v1410 = vld [vmem:[#allocation7 + $0x28] sm:$0xff]
    %v1411 = vld [vmem:[#allocation7 + $0x30] sm:$0xff]
    %v1412 = vld [vmem:[#allocation7 + $0x38] sm:$0xff]
    %v1413 = vld [vmem:[#allocation7 + $0x40] sm:$0xff]
    %v1414 = vld [vmem:[#allocation7 + $0x48] sm:$0xff]
    %v1415 = vld [vmem:[#allocation7 + $0x50] sm:$0xff]
    %v1416 = vld [vmem:[#allocation7 + $0x58] sm:$0xff]
    %v1417 = vld [vmem:[#allocation7 + $0x60] sm:$0xff]
    %v1418 = vld [vmem:[#allocation7 + $0x68] sm:$0xff]
    %v1419 = vld [vmem:[#allocation7 + $0x70] sm:$0xff]
    %v1420 = vld [vmem:[#allocation7 + $0x78] sm:$0xff]
    %v1421 = vld [vmem:[#allocation7 + $0x80] sm:$0xff]
    %v1422 = vld [vmem:[#allocation7 + $0x88] sm:$0xff]
    %v1423 = vld [vmem:[#allocation7 + $0x90] sm:$0xff]
    %v1424 = vld [vmem:[#allocation7 + $0x98] sm:$0xff]
    %v1425 = vld [vmem:[#allocation7 + $0xa0] sm:$0xff]
    %v1426 = vld [vmem:[#allocation7 + $0xa8] sm:$0xff]
    %v1427 = vld [vmem:[#allocation7 + $0xb0] sm:$0xff]
    %v1428 = vld [vmem:[#allocation7 + $0xb8] sm:$0xff]
    %v1429 = vld [vmem:[#allocation7 + $0xc0] sm:$0xff]
    %v1430 = vld [vmem:[#allocation7 + $0xc8] sm:$0xff]
    %v1431 = vld [vmem:[#allocation7 + $0xd0] sm:$0xff]
    %v1432 = vld [vmem:[#allocation7 + $0xd8] sm:$0xff]
    %v1433 = vld [vmem:[#allocation7 + $0xe0] sm:$0xff]
    %v1434 = vld [vmem:[#allocation7 + $0xe8] sm:$0xff]
    %v1435 = vld [vmem:[#allocation7 + $0xf0] sm:$0xff]
    %v1436 = vld [vmem:[#allocation7 + $0xf8] sm:$0xff]
    %v1437 = vld [vmem:[#allocation7 + $0x100] sm:$0xff]
    %v1438 = vld [vmem:[#allocation7 + $0x108] sm:$0xff]
    %v1439 = vld [vmem:[#allocation7 + $0x110] sm:$0xff]
    %v1440 = vld [vmem:[#allocation7 + $0x118] sm:$0xff]
    %v1441 = vld [vmem:[#allocation7 + $0x120] sm:$0xff]
    %v1442 = vld [vmem:[#allocation7 + $0x128] sm:$0xff]
    %v1443 = vld [vmem:[#allocation7 + $0x130] sm:$0xff]
    %v1444 = vld [vmem:[#allocation7 + $0x138] sm:$0xff]
    %v1445 = vld [vmem:[#allocation7 + $0x140] sm:$0xff]
    %v1446 = vld [vmem:[#allocation7 + $0x148] sm:$0xff]
    %v1447 = vld [vmem:[#allocation7 + $0x150] sm:$0xff]
    %v1448 = vld [vmem:[#allocation7 + $0x158] sm:$0xff]
    %v1449 = vld [vmem:[#allocation7 + $0x160] sm:$0xff]
    %v1450 = vld [vmem:[#allocation7 + $0x168] sm:$0xff]
    %v1451 = vld [vmem:[#allocation7 + $0x170] sm:$0xff]
    %v1452 = vld [vmem:[#allocation7 + $0x178] sm:$0xff]
    %v1453 = vld [vmem:[#allocation7 + $0x180] sm:$0xff]
    %v1454 = vld [vmem:[#allocation7 + $0x188] sm:$0xff]
    %v1455 = vld [vmem:[#allocation7 + $0x190] sm:$0xff]
    %v1456 = vld [vmem:[#allocation7 + $0x198] sm:$0xff]
    %v1457 = vld [vmem:[#allocation7 + $0x1a0] sm:$0xff]
    %v1458 = vld [vmem:[#allocation7 + $0x1a8] sm:$0xff]
    %v1459 = vld [vmem:[#allocation7 + $0x1b0] sm:$0xff]
    %v1460 = vld [vmem:[#allocation7 + $0x1b8] sm:$0xff]
    %v1461 = vld [vmem:[#allocation7 + $0x1c0] sm:$0xff]
    %v1462 = vld [vmem:[#allocation7 + $0x1c8] sm:$0xff]
    %v1463 = vld [vmem:[#allocation7 + $0x1d0] sm:$0xff]
    %v1464 = vld [vmem:[#allocation7 + $0x1d8] sm:$0xff]
    %v1465 = vld [vmem:[#allocation7 + $0x1e0] sm:$0xff]
    %v1466 = vld [vmem:[#allocation7 + $0x1e8] sm:$0xff]
    %v1467 = vld [vmem:[#allocation7 + $0x1f0] sm:$0xff]
    %v1468 = vld [vmem:[#allocation7 + $0x1f8] sm:$0xff]
    %v1469 = vld [vmem:[#allocation7 + $0x200] sm:$0xff]
    %v1470 = vld [vmem:[#allocation7 + $0x208] sm:$0xff]
    %v1471 = vld [vmem:[#allocation7 + $0x210] sm:$0xff]
    %v1472 = vld [vmem:[#allocation7 + $0x218] sm:$0xff]
    %v1473 = vld [vmem:[#allocation7 + $0x220] sm:$0xff]
    %v1474 = vld [vmem:[#allocation7 + $0x228] sm:$0xff]
    %v1475 = vld [vmem:[#allocation7 + $0x230] sm:$0xff]
    %v1476 = vld [vmem:[#allocation7 + $0x238] sm:$0xff]
    %v1477 = vld [vmem:[#allocation7 + $0x240] sm:$0xff]
    %v1478 = vld [vmem:[#allocation7 + $0x248] sm:$0xff]
    %v1479 = vld [vmem:[#allocation7 + $0x250] sm:$0xff]
    %v1480 = vld [vmem:[#allocation7 + $0x258] sm:$0xff]
    %v1481 = vld [vmem:[#allocation7 + $0x260] sm:$0xff]
    %v1482 = vld [vmem:[#allocation7 + $0x268] sm:$0xff]
    %v1483 = vld [vmem:[#allocation7 + $0x270] sm:$0xff]
    %v1484 = vld [vmem:[#allocation7 + $0x278] sm:$0xff]
    %v1485 = vld [vmem:[#allocation7 + $0x280] sm:$0xff]
    %v1486 = vld [vmem:[#allocation7 + $0x288] sm:$0xff]
    %v1487 = vld [vmem:[#allocation7 + $0x290] sm:$0xff]
    %v1488 = vld [vmem:[#allocation7 + $0x298] sm:$0xff]
    %v1489 = vld [vmem:[#allocation7 + $0x2a0] sm:$0xff]
    %v1490 = vld [vmem:[#allocation7 + $0x2a8] sm:$0xff]
    %v1491 = vld [vmem:[#allocation7 + $0x2b0] sm:$0xff]
    %v1492 = vld [vmem:[#allocation7 + $0x2b8] sm:$0xff]
    %v1493 = vld [vmem:[#allocation7 + $0x2c0] sm:$0xff]
    %v1494 = vld [vmem:[#allocation7 + $0x2c8] sm:$0xff]
    %v1495 = vld [vmem:[#allocation7 + $0x2d0] sm:$0xff]
    %v1496 = vld [vmem:[#allocation7 + $0x2d8] sm:$0xff]
    %v1497 = vld [vmem:[#allocation7 + $0x2e0] sm:$0xff]
    %v1498 = vld [vmem:[#allocation7 + $0x2e8] sm:$0xff]
    %v1499 = vld [vmem:[#allocation7 + $0x2f0] sm:$0xff]
    %v1500 = vld [vmem:[#allocation7 + $0x2f8] sm:$0xff]
    %v1501 = vld [vmem:[#allocation7 + $0x300] sm:$0xff]
    %v1502 = vld [vmem:[#allocation7 + $0x308] sm:$0xff]
    %v1503 = vld [vmem:[#allocation7 + $0x310] sm:$0xff]
    %v1504 = vld [vmem:[#allocation7 + $0x318] sm:$0xff]
    %v1505 = vld [vmem:[#allocation7 + $0x320] sm:$0xff]
    %v1506 = vld [vmem:[#allocation7 + $0x328] sm:$0xff]
    %v1507 = vld [vmem:[#allocation7 + $0x330] sm:$0xff]
    %v1508 = vld [vmem:[#allocation7 + $0x338] sm:$0xff]
    %v1509 = vld [vmem:[#allocation7 + $0x340] sm:$0xff]
    %v1510 = vld [vmem:[#allocation7 + $0x348] sm:$0xff]
    %v1511 = vld [vmem:[#allocation7 + $0x350] sm:$0xff]
    %v1512 = vld [vmem:[#allocation7 + $0x358] sm:$0xff]
    %v1513 = vld [vmem:[#allocation7 + $0x360] sm:$0xff]
    %v1514 = vld [vmem:[#allocation7 + $0x368] sm:$0xff]
    %v1515 = vld [vmem:[#allocation7 + $0x370] sm:$0xff]
    %v1516 = vld [vmem:[#allocation7 + $0x378] sm:$0xff]
    %v1517 = vld [vmem:[#allocation7 + $0x380] sm:$0xff]
    %v1518 = vld [vmem:[#allocation7 + $0x388] sm:$0xff]
    %v1519 = vld [vmem:[#allocation7 + $0x390] sm:$0xff]
    %v1520 = vld [vmem:[#allocation7 + $0x398] sm:$0xff]
    %v1521 = vld [vmem:[#allocation7 + $0x3a0] sm:$0xff]
    %v1522 = vld [vmem:[#allocation7 + $0x3a8] sm:$0xff]
    %v1523 = vld [vmem:[#allocation7 + $0x3b0] sm:$0xff]
    %v1524 = vld [vmem:[#allocation7 + $0x3b8] sm:$0xff]
    %v1525 = vld [vmem:[#allocation7 + $0x3c0] sm:$0xff]
    %v1526 = vld [vmem:[#allocation7 + $0x3c8] sm:$0xff]
    %v1527 = vld [vmem:[#allocation7 + $0x3d0] sm:$0xff]
    %v1528 = vld [vmem:[#allocation7 + $0x3d8] sm:$0xff]
    %v1529 = vld [vmem:[#allocation7 + $0x3e0] sm:$0xff]
    %v1530 = vld [vmem:[#allocation7 + $0x3e8] sm:$0xff]
    %v1531 = vld [vmem:[#allocation7 + $0x3f0] sm:$0xff]
    %v1532 = vld [vmem:[#allocation7 + $0x3f8] sm:$0xff]
    %v1533 = vld [vmem:[#allocation7 + $0x400] sm:$0xff]
    %v1534 = vld [vmem:[#allocation7 + $0x408] sm:$0xff]
    %v1535 = vld [vmem:[#allocation7 + $0x410] sm:$0xff]
    %v1536 = vld [vmem:[#allocation7 + $0x418] sm:$0xff]
    %v1537 = vld [vmem:[#allocation7 + $0x420] sm:$0xff]
    %v1538 = vld [vmem:[#allocation7 + $0x428] sm:$0xff]
    %v1539 = vld [vmem:[#allocation7 + $0x430] sm:$0xff]
    %v1540 = vld [vmem:[#allocation7 + $0x438] sm:$0xff]
    %v1541 = vld [vmem:[#allocation7 + $0x440] sm:$0xff]
    %v1542 = vld [vmem:[#allocation7 + $0x448] sm:$0xff]
    %v1543 = vld [vmem:[#allocation7 + $0x450] sm:$0xff]
    %v1544 = vld [vmem:[#allocation7 + $0x458] sm:$0xff]
    %v1545 = vld [vmem:[#allocation7 + $0x460] sm:$0xff]
    %v1546 = vld [vmem:[#allocation7 + $0x468] sm:$0xff]
    %v1547 = vld [vmem:[#allocation7 + $0x470] sm:$0xff]
    %v1548 = vld [vmem:[#allocation7 + $0x478] sm:$0xff]
    %v1549 = vld [vmem:[#allocation7 + $0x480] sm:$0xff]
    %v1550 = vld [vmem:[#allocation7 + $0x488] sm:$0xff]
    %v1551 = vld [vmem:[#allocation7 + $0x490] sm:$0xff]
    %v1552 = vld [vmem:[#allocation7 + $0x498] sm:$0xff]
    %v1553 = vld [vmem:[#allocation7 + $0x4a0] sm:$0xff]
    %v1554 = vld [vmem:[#allocation7 + $0x4a8] sm:$0xff]
    %v1555 = vld [vmem:[#allocation7 + $0x4b0] sm:$0xff]
    %v1556 = vld [vmem:[#allocation7 + $0x4b8] sm:$0xff]
    %v1557 = vld [vmem:[#allocation7 + $0x4c0] sm:$0xff]
    %v1558 = vld [vmem:[#allocation7 + $0x4c8] sm:$0xff]
    %v1559 = vld [vmem:[#allocation7 + $0x4d0] sm:$0xff]
    %v1560 = vld [vmem:[#allocation7 + $0x4d8] sm:$0xff]
    %v1561 = vld [vmem:[#allocation7 + $0x4e0] sm:$0xff]
    %v1562 = vld [vmem:[#allocation7 + $0x4e8] sm:$0xff]
    %v1563 = vld [vmem:[#allocation7 + $0x4f0] sm:$0xff]
    %v1564 = vld [vmem:[#allocation7 + $0x4f8] sm:$0xff]
    %v1565 = vld [vmem:[#allocation7 + $0x500] sm:$0xff]
    %v1566 = vld [vmem:[#allocation7 + $0x508] sm:$0xff]
    %v1567 = vld [vmem:[#allocation7 + $0x510] sm:$0xff]
    %v1568 = vld [vmem:[#allocation7 + $0x518] sm:$0xff]
    %v1569 = vld [vmem:[#allocation7 + $0x520] sm:$0xff]
    %v1570 = vld [vmem:[#allocation7 + $0x528] sm:$0xff]
    %v1571 = vld [vmem:[#allocation7 + $0x530] sm:$0xff]
    %v1572 = vld [vmem:[#allocation7 + $0x538] sm:$0xff]
    %v1573 = vld [vmem:[#allocation7 + $0x540] sm:$0xff]
    %v1574 = vld [vmem:[#allocation7 + $0x548] sm:$0xff]
    %v1575 = vld [vmem:[#allocation7 + $0x550] sm:$0xff]
    %v1576 = vld [vmem:[#allocation7 + $0x558] sm:$0xff]
    %v1577 = vld [vmem:[#allocation7 + $0x560] sm:$0xff]
    %v1578 = vld [vmem:[#allocation7 + $0x568] sm:$0xff]
    %v1579 = vld [vmem:[#allocation7 + $0x570] sm:$0xff]
    %v1580 = vld [vmem:[#allocation7 + $0x578] sm:$0xff]
    %v1581 = vld [vmem:[#allocation7 + $0x580] sm:$0xff]
    %v1582 = vld [vmem:[#allocation7 + $0x588] sm:$0xff]
    %v1583 = vld [vmem:[#allocation7 + $0x590] sm:$0xff]
    %v1584 = vld [vmem:[#allocation7 + $0x598] sm:$0xff]
    %v1585 = vld [vmem:[#allocation7 + $0x5a0] sm:$0xff]
    %v1586 = vld [vmem:[#allocation7 + $0x5a8] sm:$0xff]
    %v1587 = vld [vmem:[#allocation7 + $0x5b0] sm:$0xff]
    %v1588 = vld [vmem:[#allocation7 + $0x5b8] sm:$0xff]
    %v1589 = vld [vmem:[#allocation7 + $0x5c0] sm:$0xff]
    %v1590 = vld [vmem:[#allocation7 + $0x5c8] sm:$0xff]
    %v1591 = vld [vmem:[#allocation7 + $0x5d0] sm:$0xff]
    %v1592 = vld [vmem:[#allocation7 + $0x5d8] sm:$0xff]
    %v1593 = vld [vmem:[#allocation7 + $0x5e0] sm:$0xff]
    %v1594 = vld [vmem:[#allocation7 + $0x5e8] sm:$0xff]
    %v1595 = vld [vmem:[#allocation7 + $0x5f0] sm:$0xff]
    %v1596 = vld [vmem:[#allocation7 + $0x5f8] sm:$0xff]
    %v1597 = vld [vmem:[#allocation7 + $0x600] sm:$0xff]
    %v1598 = vld [vmem:[#allocation7 + $0x608] sm:$0xff]
    %v1599 = vld [vmem:[#allocation7 + $0x610] sm:$0xff]
    %v1600 = vld [vmem:[#allocation7 + $0x618] sm:$0xff]
    %v1601 = vld [vmem:[#allocation7 + $0x620] sm:$0xff]
    %v1602 = vld [vmem:[#allocation7 + $0x628] sm:$0xff]
    %v1603 = vld [vmem:[#allocation7 + $0x630] sm:$0xff]
    %v1604 = vld [vmem:[#allocation7 + $0x638] sm:$0xff]
    %v1605 = vld [vmem:[#allocation7 + $0x640] sm:$0xff]
    %v1606 = vld [vmem:[#allocation7 + $0x648] sm:$0xff]
    %v1607 = vld [vmem:[#allocation7 + $0x650] sm:$0xff]
    %v1608 = vld [vmem:[#allocation7 + $0x658] sm:$0xff]
    %v1609 = vld [vmem:[#allocation7 + $0x660] sm:$0xff]
    %v1610 = vld [vmem:[#allocation7 + $0x668] sm:$0xff]
    %v1611 = vld [vmem:[#allocation7 + $0x670] sm:$0xff]
    %v1612 = vld [vmem:[#allocation7 + $0x678] sm:$0xff]
    %v1613 = vld [vmem:[#allocation7 + $0x680] sm:$0xff]
    %v1614 = vld [vmem:[#allocation7 + $0x688] sm:$0xff]
    %v1615 = vld [vmem:[#allocation7 + $0x690] sm:$0xff]
    %v1616 = vld [vmem:[#allocation7 + $0x698] sm:$0xff]
    %v1617 = vld [vmem:[#allocation7 + $0x6a0] sm:$0xff]
    %v1618 = vld [vmem:[#allocation7 + $0x6a8] sm:$0xff]
    %v1619 = vld [vmem:[#allocation7 + $0x6b0] sm:$0xff]
    %v1620 = vld [vmem:[#allocation7 + $0x6b8] sm:$0xff]
    %v1621 = vld [vmem:[#allocation7 + $0x6c0] sm:$0xff]
    %v1622 = vld [vmem:[#allocation7 + $0x6c8] sm:$0xff]
    %v1623 = vld [vmem:[#allocation7 + $0x6d0] sm:$0xff]
    %v1624 = vld [vmem:[#allocation7 + $0x6d8] sm:$0xff]
    %v1625 = vld [vmem:[#allocation7 + $0x6e0] sm:$0xff]
    %v1626 = vld [vmem:[#allocation7 + $0x6e8] sm:$0xff]
    %v1627 = vld [vmem:[#allocation7 + $0x6f0] sm:$0xff]
    %v1628 = vld [vmem:[#allocation7 + $0x6f8] sm:$0xff]
    %v1629 = vld [vmem:[#allocation7 + $0x700] sm:$0xff]
    %v1630 = vld [vmem:[#allocation7 + $0x708] sm:$0xff]
    %v1631 = vld [vmem:[#allocation7 + $0x710] sm:$0xff]
    %v1632 = vld [vmem:[#allocation7 + $0x718] sm:$0xff]
    %v1633 = vld [vmem:[#allocation7 + $0x720] sm:$0xff]
    %v1634 = vld [vmem:[#allocation7 + $0x728] sm:$0xff]
    %v1635 = vld [vmem:[#allocation7 + $0x730] sm:$0xff]
    %v1636 = vld [vmem:[#allocation7 + $0x738] sm:$0xff]
    %v1637 = vld [vmem:[#allocation7 + $0x740] sm:$0xff]
    %v1638 = vld [vmem:[#allocation7 + $0x748] sm:$0xff]
    %v1639 = vld [vmem:[#allocation7 + $0x750] sm:$0xff]
    %v1640 = vld [vmem:[#allocation7 + $0x758] sm:$0xff]
    %v1641 = vld [vmem:[#allocation7 + $0x760] sm:$0xff]
    %v1642 = vld [vmem:[#allocation7 + $0x768] sm:$0xff]
    %v1643 = vld [vmem:[#allocation7 + $0x770] sm:$0xff]
    %v1644 = vld [vmem:[#allocation7 + $0x778] sm:$0xff]
    %v1645 = vld [vmem:[#allocation7 + $0x780] sm:$0xff]
    %v1646 = vld [vmem:[#allocation7 + $0x788] sm:$0xff]
    %v1647 = vld [vmem:[#allocation7 + $0x790] sm:$0xff]
    %v1648 = vld [vmem:[#allocation7 + $0x798] sm:$0xff]
    %v1649 = vld [vmem:[#allocation7 + $0x7a0] sm:$0xff]
    %v1650 = vld [vmem:[#allocation7 + $0x7a8] sm:$0xff]
    %v1651 = vld [vmem:[#allocation7 + $0x7b0] sm:$0xff]
    %v1652 = vld [vmem:[#allocation7 + $0x7b8] sm:$0xff]
    %v1653 = vld [vmem:[#allocation7 + $0x7c0] sm:$0xff]
    %v1654 = vld [vmem:[#allocation7 + $0x7c8] sm:$0xff]
    %v1655 = vld [vmem:[#allocation7 + $0x7d0] sm:$0xff]
    %v1656 = vld [vmem:[#allocation7 + $0x7d8] sm:$0xff]
    %v1657 = vld [vmem:[#allocation7 + $0x7e0] sm:$0xff]
    %v1658 = vld [vmem:[#allocation7 + $0x7e8] sm:$0xff]
    %v1659 = vld [vmem:[#allocation7 + $0x7f0] sm:$0xff]
    %v1660 = vld [vmem:[#allocation7 + $0x7f8] sm:$0xff]
    %v1662 = vcombine.high %v1404, %v1404
    %1664 = vmatprep.subr.mxu0 %v1526
    %1665 = vmatpush1.msra.mxu0 %v1525
    %1666 = vmatprep.subr.mxu0 %v1518
    %1667 = vmatpush1.msra.mxu0 %v1517
    %1668 = vmatprep.subr.mxu0 %v1510
    %1669 = vmatpush1.msra.mxu0 %v1509
    %1670 = vmatprep.subr.mxu0 %v1502
    %1671 = vmatpush1.msra.mxu0 %v1501
    %1672 = vmatprep.subr.mxu0 %v1494
    %1673 = vmatpush1.msra.mxu0 %v1493
    %1674 = vmatprep.subr.mxu0 %v1486
    %1675 = vmatpush1.msra.mxu0 %v1485
    %1676 = vmatprep.subr.mxu0 %v1478
    %1677 = vmatpush1.msra.mxu0 %v1477
    %1678 = vmatprep.subr.mxu0 %v1470
    %1679 = vmatpush1.msra.mxu0 %v1469
    %1680 = vmatprep.subr.mxu0 %v1462
    %1681 = vmatpush1.msra.mxu0 %v1461
    %1682 = vmatprep.subr.mxu0 %v1454
    %1683 = vmatpush1.msra.mxu0 %v1453
    %1684 = vmatprep.subr.mxu0 %v1446
    %1685 = vmatpush1.msra.mxu0 %v1445
    %1686 = vmatprep.subr.mxu0 %v1438
    %1687 = vmatpush1.msra.mxu0 %v1437
    %1688 = vmatprep.subr.mxu0 %v1430
    %1689 = vmatpush1.msra.mxu0 %v1429
    %1690 = vmatprep.subr.mxu0 %v1422
    %1691 = vmatpush1.msra.mxu0 %v1421
    %1692 = vmatprep.subr.mxu0 %v1414
    %1693 = vmatpush1.msra.mxu0 %v1413
    %1694 = vmatprep.subr.mxu0 %v1406
    %1695 = vmatpush1.msra.mxu0 %v1405
    %1696 = vmatprep.subr.mxu0 %v1654
    %1697 = vmatpush2.msra.mxu0 %v1653
    %1698 = vmatprep.subr.mxu0 %v1646
    %1699 = vmatpush2.msra.mxu0 %v1645
    %1700 = vmatprep.subr.mxu0 %v1638
    %1701 = vmatpush2.msra.mxu0 %v1637
    %1702 = vmatprep.subr.mxu0 %v1630
    %1703 = vmatpush2.msra.mxu0 %v1629
    %1704 = vmatprep.subr.mxu0 %v1622
    %1705 = vmatpush2.msra.mxu0 %v1621
    %1706 = vmatprep.subr.mxu0 %v1614
    %1707 = vmatpush2.msra.mxu0 %v1613
    %1708 = vmatprep.subr.mxu0 %v1606
    %1709 = vmatpush2.msra.mxu0 %v1605
    %1710 = vmatprep.subr.mxu0 %v1598
    %1711 = vmatpush2.msra.mxu0 %v1597
    %1712 = vmatprep.subr.mxu0 %v1590
    %1713 = vmatpush2.msra.mxu0 %v1589
    %1714 = vmatprep.subr.mxu0 %v1582
    %1715 = vmatpush2.msra.mxu0 %v1581
    %1716 = vmatprep.subr.mxu0 %v1574
    %1717 = vmatpush2.msra.mxu0 %v1573
    %1718 = vmatprep.subr.mxu0 %v1566
    %1719 = vmatpush2.msra.mxu0 %v1565
    %1720 = vmatprep.subr.mxu0 %v1558
    %1721 = vmatpush2.msra.mxu0 %v1557
    %1722 = vmatprep.subr.mxu0 %v1550
    %1723 = vmatpush2.msra.mxu0 %v1549
    %1724 = vmatprep.subr.mxu0 %v1542
    %1725 = vmatpush2.msra.mxu0 %v1541
    %1726 = vmatprep.subr.mxu0 %v1534
    %1727 = vmatpush2.msra.mxu0 %v1533
    %1728 = vmatprep.mubr.f32.mxu0 %v1662
    %1729 = vmatmul.mubr.f32.gmra.mxu0 %v1404
    %v1730 = vpop.f32.mrf.mxu0
    %v1731 = vadd.f32 0.0, %v1730
    %v1732 = vpop.f32.mrf.mxu0
    %v1733 = vadd.f32 0.0, %v1732
    %1734 = vdwg.mxu0
    %1735 = vmatprep.subr.mxu0 %v1528
    %1736 = vmatpush1.msra.mxu0 %v1527
    %1737 = vmatprep.subr.mxu0 %v1520
    %1738 = vmatpush1.msra.mxu0 %v1519
    %1739 = vmatprep.subr.mxu0 %v1512
    %1740 = vmatpush1.msra.mxu0 %v1511
    %1741 = vmatprep.subr.mxu0 %v1504
    %1742 = vmatpush1.msra.mxu0 %v1503
    %1743 = vmatprep.subr.mxu0 %v1496
    %1744 = vmatpush1.msra.mxu0 %v1495
    %1745 = vmatprep.subr.mxu0 %v1488
    %1746 = vmatpush1.msra.mxu0 %v1487
    %1747 = vmatprep.subr.mxu0 %v1480
    %1748 = vmatpush1.msra.mxu0 %v1479
    %1749 = vmatprep.subr.mxu0 %v1472
    %1750 = vmatpush1.msra.mxu0 %v1471
    %1751 = vmatprep.subr.mxu0 %v1464
    %1752 = vmatpush1.msra.mxu0 %v1463
    %1753 = vmatprep.subr.mxu0 %v1456
    %1754 = vmatpush1.msra.mxu0 %v1455
    %1755 = vmatprep.subr.mxu0 %v1448
    %1756 = vmatpush1.msra.mxu0 %v1447
    %1757 = vmatprep.subr.mxu0 %v1440
    %1758 = vmatpush1.msra.mxu0 %v1439
    %1759 = vmatprep.subr.mxu0 %v1432
    %1760 = vmatpush1.msra.mxu0 %v1431
    %1761 = vmatprep.subr.mxu0 %v1424
    %1762 = vmatpush1.msra.mxu0 %v1423
    %1763 = vmatprep.subr.mxu0 %v1416
    %1764 = vmatpush1.msra.mxu0 %v1415
    %1765 = vmatprep.subr.mxu0 %v1408
    %1766 = vmatpush1.msra.mxu0 %v1407
    %1767 = vmatprep.subr.mxu0 %v1656
    %1768 = vmatpush2.msra.mxu0 %v1655
    %1769 = vmatprep.subr.mxu0 %v1648
    %1770 = vmatpush2.msra.mxu0 %v1647
    %1771 = vmatprep.subr.mxu0 %v1640
    %1772 = vmatpush2.msra.mxu0 %v1639
    %1773 = vmatprep.subr.mxu0 %v1632
    %1774 = vmatpush2.msra.mxu0 %v1631
    %1775 = vmatprep.subr.mxu0 %v1624
    %1776 = vmatpush2.msra.mxu0 %v1623
    %1777 = vmatprep.subr.mxu0 %v1616
    %1778 = vmatpush2.msra.mxu0 %v1615
    %1779 = vmatprep.subr.mxu0 %v1608
    %1780 = vmatpush2.msra.mxu0 %v1607
    %1781 = vmatprep.subr.mxu0 %v1600
    %1782 = vmatpush2.msra.mxu0 %v1599
    %1783 = vmatprep.subr.mxu0 %v1592
    %1784 = vmatpush2.msra.mxu0 %v1591
    %1785 = vmatprep.subr.mxu0 %v1584
    %1786 = vmatpush2.msra.mxu0 %v1583
    %1787 = vmatprep.subr.mxu0 %v1576
    %1788 = vmatpush2.msra.mxu0 %v1575
    %1789 = vmatprep.subr.mxu0 %v1568
    %1790 = vmatpush2.msra.mxu0 %v1567
    %1791 = vmatprep.subr.mxu0 %v1560
    %1792 = vmatpush2.msra.mxu0 %v1559
    %1793 = vmatprep.subr.mxu0 %v1552
    %1794 = vmatpush2.msra.mxu0 %v1551
    %1795 = vmatprep.subr.mxu0 %v1544
    %1796 = vmatpush2.msra.mxu0 %v1543
    %1797 = vmatprep.subr.mxu0 %v1536
    %1798 = vmatpush2.msra.mxu0 %v1535
    %1799 = vmatprep.mubr.f32.mxu0 %v1662
    %1800 = vmatmul.mubr.f32.gmra.mxu0 %v1404
    %v1801 = vpop.f32.mrf.mxu0
    %v1802 = vadd.f32 0.0, %v1801
    %v1803 = vpop.f32.mrf.mxu0
    %v1804 = vadd.f32 0.0, %v1803
    %1805 = vdwg.mxu0
    %1806 = vmatprep.subr.mxu0 %v1530
    %1807 = vmatpush1.msra.mxu0 %v1529
    %1808 = vmatprep.subr.mxu0 %v1522
    %1809 = vmatpush1.msra.mxu0 %v1521
    %1810 = vmatprep.subr.mxu0 %v1514
    %1811 = vmatpush1.msra.mxu0 %v1513
    %1812 = vmatprep.subr.mxu0 %v1506
    %1813 = vmatpush1.msra.mxu0 %v1505
    %1814 = vmatprep.subr.mxu0 %v1498
    %1815 = vmatpush1.msra.mxu0 %v1497
    %1816 = vmatprep.subr.mxu0 %v1490
    %1817 = vmatpush1.msra.mxu0 %v1489
    %1818 = vmatprep.subr.mxu0 %v1482
    %1819 = vmatpush1.msra.mxu0 %v1481
    %1820 = vmatprep.subr.mxu0 %v1474
    %1821 = vmatpush1.msra.mxu0 %v1473
    %1822 = vmatprep.subr.mxu0 %v1466
    %1823 = vmatpush1.msra.mxu0 %v1465
    %1824 = vmatprep.subr.mxu0 %v1458
    %1825 = vmatpush1.msra.mxu0 %v1457
    %1826 = vmatprep.subr.mxu0 %v1450
    %1827 = vmatpush1.msra.mxu0 %v1449
    %1828 = vmatprep.subr.mxu0 %v1442
    %1829 = vmatpush1.msra.mxu0 %v1441
    %1830 = vmatprep.subr.mxu0 %v1434
    %1831 = vmatpush1.msra.mxu0 %v1433
    %1832 = vmatprep.subr.mxu0 %v1426
    %1833 = vmatpush1.msra.mxu0 %v1425
    %1834 = vmatprep.subr.mxu0 %v1418
    %1835 = vmatpush1.msra.mxu0 %v1417
    %1836 = vmatprep.subr.mxu0 %v1410
    %1837 = vmatpush1.msra.mxu0 %v1409
    %1838 = vmatprep.subr.mxu0 %v1658
    %1839 = vmatpush2.msra.mxu0 %v1657
    %1840 = vmatprep.subr.mxu0 %v1650
    %1841 = vmatpush2.msra.mxu0 %v1649
    %1842 = vmatprep.subr.mxu0 %v1642
    %1843 = vmatpush2.msra.mxu0 %v1641
    %1844 = vmatprep.subr.mxu0 %v1634
    %1845 = vmatpush2.msra.mxu0 %v1633
    %1846 = vmatprep.subr.mxu0 %v1626
    %1847 = vmatpush2.msra.mxu0 %v1625
    %1848 = vmatprep.subr.mxu0 %v1618
    %1849 = vmatpush2.msra.mxu0 %v1617
    %1850 = vmatprep.subr.mxu0 %v1610
    %1851 = vmatpush2.msra.mxu0 %v1609
    %1852 = vmatprep.subr.mxu0 %v1602
    %1853 = vmatpush2.msra.mxu0 %v1601
    %1854 = vmatprep.subr.mxu0 %v1594
    %1855 = vmatpush2.msra.mxu0 %v1593
    %1856 = vmatprep.subr.mxu0 %v1586
    %1857 = vmatpush2.msra.mxu0 %v1585
    %1858 = vmatprep.subr.mxu0 %v1578
    %1859 = vmatpush2.msra.mxu0 %v1577
    %1860 = vmatprep.subr.mxu0 %v1570
    %1861 = vmatpush2.msra.mxu0 %v1569
    %1862 = vmatprep.subr.mxu0 %v1562
    %1863 = vmatpush2.msra.mxu0 %v1561
    %1864 = vmatprep.subr.mxu0 %v1554
    %1865 = vmatpush2.msra.mxu0 %v1553
    %1866 = vmatprep.subr.mxu0 %v1546
    %1867 = vmatpush2.msra.mxu0 %v1545
    %1868 = vmatprep.subr.mxu0 %v1538
    %1869 = vmatpush2.msra.mxu0 %v1537
    %1870 = vmatprep.mubr.f32.mxu0 %v1662
    %1871 = vmatmul.mubr.f32.gmra.mxu0 %v1404
    %v1872 = vpop.f32.mrf.mxu0
    %v1873 = vadd.f32 0.0, %v1872
    %v1874 = vpop.f32.mrf.mxu0
    %v1875 = vadd.f32 0.0, %v1874
    %1876 = vdwg.mxu0
    %1877 = vmatprep.subr.mxu0 %v1532
    %1878 = vmatpush1.msra.mxu0 %v1531
    %1879 = vmatprep.subr.mxu0 %v1524
    %1880 = vmatpush1.msra.mxu0 %v1523
    %1881 = vmatprep.subr.mxu0 %v1516
    %1882 = vmatpush1.msra.mxu0 %v1515
    %1883 = vmatprep.subr.mxu0 %v1508
    %1884 = vmatpush1.msra.mxu0 %v1507
    %1885 = vmatprep.subr.mxu0 %v1500
    %1886 = vmatpush1.msra.mxu0 %v1499
    %1887 = vmatprep.subr.mxu0 %v1492
    %1888 = vmatpush1.msra.mxu0 %v1491
    %1889 = vmatprep.subr.mxu0 %v1484
    %1890 = vmatpush1.msra.mxu0 %v1483
    %1891 = vmatprep.subr.mxu0 %v1476
    %1892 = vmatpush1.msra.mxu0 %v1475
    %1893 = vmatprep.subr.mxu0 %v1468
    %1894 = vmatpush1.msra.mxu0 %v1467
    %1895 = vmatprep.subr.mxu0 %v1460
    %1896 = vmatpush1.msra.mxu0 %v1459
    %1897 = vmatprep.subr.mxu0 %v1452
    %1898 = vmatpush1.msra.mxu0 %v1451
    %1899 = vmatprep.subr.mxu0 %v1444
    %1900 = vmatpush1.msra.mxu0 %v1443
    %1901 = vmatprep.subr.mxu0 %v1436
    %1902 = vmatpush1.msra.mxu0 %v1435
    %1903 = vmatprep.subr.mxu0 %v1428
    %1904 = vmatpush1.msra.mxu0 %v1427
    %1905 = vmatprep.subr.mxu0 %v1420
    %1906 = vmatpush1.msra.mxu0 %v1419
    %1907 = vmatprep.subr.mxu0 %v1412
    %1908 = vmatpush1.msra.mxu0 %v1411
    %1909 = vmatprep.subr.mxu0 %v1660
    %1910 = vmatpush2.msra.mxu0 %v1659
    %1911 = vmatprep.subr.mxu0 %v1652
    %1912 = vmatpush2.msra.mxu0 %v1651
    %1913 = vmatprep.subr.mxu0 %v1644
    %1914 = vmatpush2.msra.mxu0 %v1643
    %1915 = vmatprep.subr.mxu0 %v1636
    %1916 = vmatpush2.msra.mxu0 %v1635
    %1917 = vmatprep.subr.mxu0 %v1628
    %1918 = vmatpush2.msra.mxu0 %v1627
    %1919 = vmatprep.subr.mxu0 %v1620
    %1920 = vmatpush2.msra.mxu0 %v1619
    %1921 = vmatprep.subr.mxu0 %v1612
    %1922 = vmatpush2.msra.mxu0 %v1611
    %1923 = vmatprep.subr.mxu0 %v1604
    %1924 = vmatpush2.msra.mxu0 %v1603
    %1925 = vmatprep.subr.mxu0 %v1596
    %1926 = vmatpush2.msra.mxu0 %v1595
    %1927 = vmatprep.subr.mxu0 %v1588
    %1928 = vmatpush2.msra.mxu0 %v1587
    %1929 = vmatprep.subr.mxu0 %v1580
    %1930 = vmatpush2.msra.mxu0 %v1579
    %1931 = vmatprep.subr.mxu0 %v1572
    %1932 = vmatpush2.msra.mxu0 %v1571
    %1933 = vmatprep.subr.mxu0 %v1564
    %1934 = vmatpush2.msra.mxu0 %v1563
    %1935 = vmatprep.subr.mxu0 %v1556
    %1936 = vmatpush2.msra.mxu0 %v1555
    %1937 = vmatprep.subr.mxu0 %v1548
    %1938 = vmatpush2.msra.mxu0 %v1547
    %1939 = vmatprep.subr.mxu0 %v1540
    %1940 = vmatpush2.msra.mxu0 %v1539
    %1941 = vmatprep.mubr.f32.mxu0 %v1662
    %1942 = vmatmul.mubr.f32.gmra.mxu0 %v1404
    %v1943 = vpop.f32.mrf.mxu0
    %v1944 = vadd.f32 0.0, %v1943
    %v1945 = vpop.f32.mrf.mxu0
    %v1946 = vadd.f32 0.0, %v1945
    %1947 = vdwg.mxu0
    %v1956 = vrot.slane %v1731, 4
    %v1957 = vrot.slane %v1733, 4
    %v1958 = vrot.slane %v1802, 4
    %v1959 = vrot.slane %v1804, 4
    %v1960 = vrot.slane %v1873, 4
    %v1961 = vrot.slane %v1875, 4
    %v1962 = vrot.slane %v1944, 4
    %v1963 = vrot.slane %v1946, 4
    %1972 = vst [vmem:[#allocation2 + $0x8] sm:$0xf0] %v1956
    %1973 = vst [vmem:[#allocation2 + $0x10] sm:$0xf0] %v1957
    %1974 = vst [vmem:[#allocation2 + $0x18] sm:$0xf0] %v1958
    %1975 = vst [vmem:[#allocation2 + $0x20] sm:$0xf0] %v1959
    %1976 = vst [vmem:[#allocation2 + $0x28] sm:$0xf0] %v1960
    %1977 = vst [vmem:[#allocation2 + $0x30] sm:$0xf0] %v1961
    %1978 = vst [vmem:[#allocation2 + $0x38] sm:$0xf0] %v1962
    %1979 = vst [vmem:[#allocation2 + $0x40] sm:$0xf0] %v1963
    %v1980 = vld [vmem:[#allocation2] sm:$0xf0]
    %v1981 = vld [vmem:[#allocation2 + $0x8] sm:$0xf0]
    %v1982 = vld [vmem:[#allocation2 + $0x10] sm:$0xf0]
    %v1983 = vld [vmem:[#allocation2 + $0x18] sm:$0xf0]
    %v1984 = vld [vmem:[#allocation2 + $0x20] sm:$0xf0]
    %v1985 = vld [vmem:[#allocation2 + $0x28] sm:$0xf0]
    %v1986 = vld [vmem:[#allocation2 + $0x30] sm:$0xf0]
    %v1987 = vld [vmem:[#allocation2 + $0x38] sm:$0xf0]
    %v1988 = vld [vmem:[#allocation2 + $0x40] sm:$0xf0]
    %v1998 = vrot.slane %v1980, 4
    %v1999 = vrot.slane %v1981, 4
    %v2000 = vrot.slane %v1982, 4
    %v2001 = vrot.slane %v1983, 4
    %v2002 = vrot.slane %v1984, 4
    %v2003 = vrot.slane %v1985, 4
    %v2004 = vrot.slane %v1986, 4
    %v2005 = vrot.slane %v1987, 4
    %v2006 = vrot.slane %v1988, 4
    %2007 = vrot.lane.b32.xlu0 %v1998, 33
    %v2008 = vpop.permute.xlu0 %2007
    %2009 = vrot.lane.b32.xlu0 %v1999, 33
    %v2010 = vpop.permute.xlu0 %2009
    %2011 = vrot.lane.b32.xlu0 %v2000, 33
    %v2012 = vpop.permute.xlu0 %2011
    %2013 = vrot.lane.b32.xlu0 %v2001, 33
    %v2014 = vpop.permute.xlu0 %2013
    %2015 = vrot.lane.b32.xlu0 %v2002, 33
    %v2016 = vpop.permute.xlu0 %2015
    %2017 = vrot.lane.b32.xlu0 %v2003, 33
    %v2018 = vpop.permute.xlu0 %2017
    %2019 = vrot.lane.b32.xlu0 %v2004, 33
    %v2020 = vpop.permute.xlu0 %2019
    %2021 = vrot.lane.b32.xlu0 %v2005, 33
    %v2022 = vpop.permute.xlu0 %2021
    %2023 = vrot.lane.b32.xlu0 %v2006, 33
    %v2024 = vpop.permute.xlu0 %2023
    %v2025 = vsel %vm805, %v2008, %v2010
    %v2026 = vsel %vm805, %v2010, %v2012
    %v2027 = vsel %vm805, %v2012, %v2014
    %v2028 = vsel %vm805, %v2014, %v2016
    %v2029 = vsel %vm805, %v2016, %v2018
    %v2030 = vsel %vm805, %v2018, %v2020
    %v2031 = vsel %vm805, %v2020, %v2022
    %v2032 = vsel %vm805, %v2022, %v2024
    %v2041 = vsel %vm770, %v2025, 0.0
    %v2042 = vsel %vm771, %v2026, 0.0
    %v2043 = vsel %vm772, %v2027, 0.0
    %v2044 = vsel %vm773, %v2028, 0.0
    %v2045 = vsel %vm774, %v2029, 0.0
    %v2046 = vsel %vm775, %v2030, 0.0
    %v2047 = vsel %vm776, %v2031, 0.0
    %v2048 = vsel %vm777, %v2032, 0.0
    %2049 = vst [vmem:[#allocation3 + $0x40] sm:$0xf] %v2041
    %2050 = vst [vmem:[#allocation3 + $0x48] sm:$0xf] %v2042
    %2051 = vst [vmem:[#allocation3 + $0x50] sm:$0xf] %v2043
    %2052 = vst [vmem:[#allocation3 + $0x58] sm:$0xf] %v2044
    %2053 = vst [vmem:[#allocation3 + $0x60] sm:$0xf] %v2045
    %2054 = vst [vmem:[#allocation3 + $0x68] sm:$0xf] %v2046
    %2055 = vst [vmem:[#allocation3 + $0x70] sm:$0xf] %v2047
    %2056 = vst [vmem:[#allocation3 + $0x78] sm:$0xf] %v2048
    %v2057 = vld [vmem:[#allocation2] sm:$0xf0]
    %v2058 = vld [vmem:[#allocation2 + $0x8] sm:$0xf0]
    %v2059 = vld [vmem:[#allocation2 + $0x10] sm:$0xf0]
    %v2060 = vld [vmem:[#allocation2 + $0x18] sm:$0xf0]
    %v2061 = vld [vmem:[#allocation2 + $0x20] sm:$0xf0]
    %v2062 = vld [vmem:[#allocation2 + $0x28] sm:$0xf0]
    %v2063 = vld [vmem:[#allocation2 + $0x30] sm:$0xf0]
    %v2064 = vld [vmem:[#allocation2 + $0x38] sm:$0xf0]
    %v2065 = vld [vmem:[#allocation2 + $0x40] sm:$0xf0]
    %2075 = vrot.lane.b32.xlu0 %v2057, 32
    %v2076 = vpop.permute.xlu0 %2075
    %2077 = vrot.lane.b32.xlu0 %v2058, 32
    %v2078 = vpop.permute.xlu0 %2077
    %2079 = vrot.lane.b32.xlu0 %v2059, 32
    %v2080 = vpop.permute.xlu0 %2079
    %2081 = vrot.lane.b32.xlu0 %v2060, 32
    %v2082 = vpop.permute.xlu0 %2081
    %2083 = vrot.lane.b32.xlu0 %v2061, 32
    %v2084 = vpop.permute.xlu0 %2083
    %2085 = vrot.lane.b32.xlu0 %v2062, 32
    %v2086 = vpop.permute.xlu0 %2085
    %2087 = vrot.lane.b32.xlu0 %v2063, 32
    %v2088 = vpop.permute.xlu0 %2087
    %2089 = vrot.lane.b32.xlu0 %v2064, 32
    %v2090 = vpop.permute.xlu0 %2089
    %2091 = vrot.lane.b32.xlu0 %v2065, 32
    %v2092 = vpop.permute.xlu0 %2091
    %v2093 = vsel %vm883, %v2076, %v2078
    %v2094 = vsel %vm883, %v2078, %v2080
    %v2095 = vsel %vm883, %v2080, %v2082
    %v2096 = vsel %vm883, %v2082, %v2084
    %v2097 = vsel %vm883, %v2084, %v2086
    %v2098 = vsel %vm883, %v2086, %v2088
    %v2099 = vsel %vm883, %v2088, %v2090
    %v2100 = vsel %vm883, %v2090, %v2092
    %2109 = vst [vmem:[#allocation3 + $0x40] sm:$0xf0] %v2093
    %2110 = vst [vmem:[#allocation3 + $0x48] sm:$0xf0] %v2094
    %2111 = vst [vmem:[#allocation3 + $0x50] sm:$0xf0] %v2095
    %2112 = vst [vmem:[#allocation3 + $0x58] sm:$0xf0] %v2096
    %2113 = vst [vmem:[#allocation3 + $0x60] sm:$0xf0] %v2097
    %2114 = vst [vmem:[#allocation3 + $0x68] sm:$0xf0] %v2098
    %2115 = vst [vmem:[#allocation3 + $0x70] sm:$0xf0] %v2099
    %2116 = vst [vmem:[#allocation3 + $0x78] sm:$0xf0] %v2100
    %v2117 = vld [vmem:[#allocation2] sm:$0xf0]
    %v2118 = vld [vmem:[#allocation2 + $0x8] sm:$0xf0]
    %v2119 = vld [vmem:[#allocation2 + $0x10] sm:$0xf0]
    %v2120 = vld [vmem:[#allocation2 + $0x18] sm:$0xf0]
    %v2121 = vld [vmem:[#allocation2 + $0x20] sm:$0xf0]
    %v2122 = vld [vmem:[#allocation2 + $0x28] sm:$0xf0]
    %v2123 = vld [vmem:[#allocation2 + $0x30] sm:$0xf0]
    %v2124 = vld [vmem:[#allocation2 + $0x38] sm:$0xf0]
    %v2125 = vld [vmem:[#allocation2 + $0x40] sm:$0xf0]
    %v2135 = vrot.slane %v2117, 4
    %v2136 = vrot.slane %v2118, 4
    %v2137 = vrot.slane %v2119, 4
    %v2138 = vrot.slane %v2120, 4
    %v2139 = vrot.slane %v2121, 4
    %v2140 = vrot.slane %v2122, 4
    %v2141 = vrot.slane %v2123, 4
    %v2142 = vrot.slane %v2124, 4
    %v2143 = vrot.slane %v2125, 4
    %2144 = vrot.lane.b32.xlu0 %v2135, 31
    %v2145 = vpop.permute.xlu0 %2144
    %2146 = vrot.lane.b32.xlu0 %v2136, 31
    %v2147 = vpop.permute.xlu0 %2146
    %2148 = vrot.lane.b32.xlu0 %v2137, 31
    %v2149 = vpop.permute.xlu0 %2148
    %2150 = vrot.lane.b32.xlu0 %v2138, 31
    %v2151 = vpop.permute.xlu0 %2150
    %2152 = vrot.lane.b32.xlu0 %v2139, 31
    %v2153 = vpop.permute.xlu0 %2152
    %2154 = vrot.lane.b32.xlu0 %v2140, 31
    %v2155 = vpop.permute.xlu0 %2154
    %2156 = vrot.lane.b32.xlu0 %v2141, 31
    %v2157 = vpop.permute.xlu0 %2156
    %2158 = vrot.lane.b32.xlu0 %v2142, 31
    %v2159 = vpop.permute.xlu0 %2158
    %2160 = vrot.lane.b32.xlu0 %v2143, 31
    %v2161 = vpop.permute.xlu0 %2160
    %v2162 = vsel %vm960, %v2145, %v2147
    %v2163 = vsel %vm960, %v2147, %v2149
    %v2164 = vsel %vm960, %v2149, %v2151
    %v2165 = vsel %vm960, %v2151, %v2153
    %v2166 = vsel %vm960, %v2153, %v2155
    %v2167 = vsel %vm960, %v2155, %v2157
    %v2168 = vsel %vm960, %v2157, %v2159
    %v2169 = vsel %vm960, %v2159, %v2161
    %v2178 = vsel %vm925, %v2162, 0.0
    %v2179 = vsel %vm926, %v2163, 0.0
    %v2180 = vsel %vm927, %v2164, 0.0
    %v2181 = vsel %vm928, %v2165, 0.0
    %v2182 = vsel %vm929, %v2166, 0.0
    %v2183 = vsel %vm930, %v2167, 0.0
    %v2184 = vsel %vm931, %v2168, 0.0
    %v2185 = vsel %vm932, %v2169, 0.0
    %2186 = vst [vmem:[#allocation3 + $0xc0] sm:$0xf] %v2178
    %2187 = vst [vmem:[#allocation3 + $0xc8] sm:$0xf] %v2179
    %2188 = vst [vmem:[#allocation3 + $0xd0] sm:$0xf] %v2180
    %2189 = vst [vmem:[#allocation3 + $0xd8] sm:$0xf] %v2181
    %2190 = vst [vmem:[#allocation3 + $0xe0] sm:$0xf] %v2182
    %2191 = vst [vmem:[#allocation3 + $0xe8] sm:$0xf] %v2183
    %2192 = vst [vmem:[#allocation3 + $0xf0] sm:$0xf] %v2184
    %2193 = vst [vmem:[#allocation3 + $0xf8] sm:$0xf] %v2185
    %v2194 = vld [vmem:[#allocation2] sm:$0xf0]
    %v2195 = vld [vmem:[#allocation2 + $0x8] sm:$0xf0]
    %v2196 = vld [vmem:[#allocation2 + $0x10] sm:$0xf0]
    %v2197 = vld [vmem:[#allocation2 + $0x18] sm:$0xf0]
    %v2198 = vld [vmem:[#allocation2 + $0x20] sm:$0xf0]
    %v2199 = vld [vmem:[#allocation2 + $0x28] sm:$0xf0]
    %v2200 = vld [vmem:[#allocation2 + $0x30] sm:$0xf0]
    %v2201 = vld [vmem:[#allocation2 + $0x38] sm:$0xf0]
    %v2202 = vld [vmem:[#allocation2 + $0x40] sm:$0xf0]
    %v2212 = vrot.slane %v2194, 4
    %v2213 = vrot.slane %v2195, 4
    %v2214 = vrot.slane %v2196, 4
    %v2215 = vrot.slane %v2197, 4
    %v2216 = vrot.slane %v2198, 4
    %v2217 = vrot.slane %v2199, 4
    %v2218 = vrot.slane %v2200, 4
    %v2219 = vrot.slane %v2201, 4
    %v2220 = vrot.slane %v2202, 4
    %2221 = vrot.lane.b32.xlu0 %v2212, 1
    %v2222 = vpop.permute.xlu0 %2221
    %2223 = vrot.lane.b32.xlu0 %v2213, 1
    %v2224 = vpop.permute.xlu0 %2223
    %2225 = vrot.lane.b32.xlu0 %v2214, 1
    %v2226 = vpop.permute.xlu0 %2225
    %2227 = vrot.lane.b32.xlu0 %v2215, 1
    %v2228 = vpop.permute.xlu0 %2227
    %2229 = vrot.lane.b32.xlu0 %v2216, 1
    %v2230 = vpop.permute.xlu0 %2229
    %2231 = vrot.lane.b32.xlu0 %v2217, 1
    %v2232 = vpop.permute.xlu0 %2231
    %2233 = vrot.lane.b32.xlu0 %v2218, 1
    %v2234 = vpop.permute.xlu0 %2233
    %2235 = vrot.lane.b32.xlu0 %v2219, 1
    %v2236 = vpop.permute.xlu0 %2235
    %2237 = vrot.lane.b32.xlu0 %v2220, 1
    %v2238 = vpop.permute.xlu0 %2237
    %v2239 = vsel %vm1029, %v2222, %v2224
    %v2240 = vsel %vm1029, %v2224, %v2226
    %v2241 = vsel %vm1029, %v2226, %v2228
    %v2242 = vsel %vm1029, %v2228, %v2230
    %v2243 = vsel %vm1029, %v2230, %v2232
    %v2244 = vsel %vm1029, %v2232, %v2234
    %v2245 = vsel %vm1029, %v2234, %v2236
    %v2246 = vsel %vm1029, %v2236, %v2238
    %v2255 = vsel %vm770, %v2239, 0.0
    %v2256 = vsel %vm771, %v2240, 0.0
    %v2257 = vsel %vm772, %v2241, 0.0
    %v2258 = vsel %vm773, %v2242, 0.0
    %v2259 = vsel %vm774, %v2243, 0.0
    %v2260 = vsel %vm775, %v2244, 0.0
    %v2261 = vsel %vm776, %v2245, 0.0
    %v2262 = vsel %vm777, %v2246, 0.0
    %v2271 = vrot.slane %v2255, 4
    %v2272 = vrot.slane %v2256, 4
    %v2273 = vrot.slane %v2257, 4
    %v2274 = vrot.slane %v2258, 4
    %v2275 = vrot.slane %v2259, 4
    %v2276 = vrot.slane %v2260, 4
    %v2277 = vrot.slane %v2261, 4
    %v2278 = vrot.slane %v2262, 4
    %2287 = vst [vmem:[#allocation3 + $0xc0] sm:$0xf0] %v2271
    %2288 = vst [vmem:[#allocation3 + $0xc8] sm:$0xf0] %v2272
    %2289 = vst [vmem:[#allocation3 + $0xd0] sm:$0xf0] %v2273
    %2290 = vst [vmem:[#allocation3 + $0xd8] sm:$0xf0] %v2274
    %2291 = vst [vmem:[#allocation3 + $0xe0] sm:$0xf0] %v2275
    %2292 = vst [vmem:[#allocation3 + $0xe8] sm:$0xf0] %v2276
    %2293 = vst [vmem:[#allocation3 + $0xf0] sm:$0xf0] %v2277
    %2294 = vst [vmem:[#allocation3 + $0xf8] sm:$0xf0] %v2278
    %v2295 = vld [vmem:[#allocation2 + $0x8] sm:$0xf0]
    %v2296 = vld [vmem:[#allocation2 + $0x10] sm:$0xf0]
    %v2297 = vld [vmem:[#allocation2 + $0x18] sm:$0xf0]
    %v2298 = vld [vmem:[#allocation2 + $0x20] sm:$0xf0]
    %v2299 = vld [vmem:[#allocation2 + $0x28] sm:$0xf0]
    %v2300 = vld [vmem:[#allocation2 + $0x30] sm:$0xf0]
    %v2301 = vld [vmem:[#allocation2 + $0x38] sm:$0xf0]
    %v2302 = vld [vmem:[#allocation2 + $0x40] sm:$0xf0]
    %v2311 = vrot.slane %v2295, 4
    %v2312 = vrot.slane %v2296, 4
    %v2313 = vrot.slane %v2297, 4
    %v2314 = vrot.slane %v2298, 4
    %v2315 = vrot.slane %v2299, 4
    %v2316 = vrot.slane %v2300, 4
    %v2317 = vrot.slane %v2301, 4
    %v2318 = vrot.slane %v2302, 4
    %2327 = vst [vmem:[#allocation3 + $0x140] sm:$0xf] %v2311
    %2328 = vst [vmem:[#allocation3 + $0x148] sm:$0xf] %v2312
    %2329 = vst [vmem:[#allocation3 + $0x150] sm:$0xf] %v2313
    %2330 = vst [vmem:[#allocation3 + $0x158] sm:$0xf] %v2314
    %2331 = vst [vmem:[#allocation3 + $0x160] sm:$0xf] %v2315
    %2332 = vst [vmem:[#allocation3 + $0x168] sm:$0xf] %v2316
    %2333 = vst [vmem:[#allocation3 + $0x170] sm:$0xf] %v2317
    %2334 = vst [vmem:[#allocation3 + $0x178] sm:$0xf] %v2318
    %v2335 = vld [vmem:[#allocation2 + $0x8] sm:$0xf0]
    %v2336 = vld [vmem:[#allocation2 + $0x10] sm:$0xf0]
    %v2337 = vld [vmem:[#allocation2 + $0x18] sm:$0xf0]
    %v2338 = vld [vmem:[#allocation2 + $0x20] sm:$0xf0]
    %v2339 = vld [vmem:[#allocation2 + $0x28] sm:$0xf0]
    %v2340 = vld [vmem:[#allocation2 + $0x30] sm:$0xf0]
    %v2341 = vld [vmem:[#allocation2 + $0x38] sm:$0xf0]
    %v2342 = vld [vmem:[#allocation2 + $0x40] sm:$0xf0]
    %v2343 = vld [vmem:[#allocation2 + $0x48] sm:$0xf0]
    %v2353 = vrot.slane %v2335, 4
    %v2354 = vrot.slane %v2336, 4
    %v2355 = vrot.slane %v2337, 4
    %v2356 = vrot.slane %v2338, 4
    %v2357 = vrot.slane %v2339, 4
    %v2358 = vrot.slane %v2340, 4
    %v2359 = vrot.slane %v2341, 4
    %v2360 = vrot.slane %v2342, 4
    %v2361 = vrot.slane %v2343, 4
    %2362 = vrot.lane.b32.xlu0 %v2353, 127
    %v2363 = vpop.permute.xlu0 %2362
    %2364 = vrot.lane.b32.xlu0 %v2354, 127
    %v2365 = vpop.permute.xlu0 %2364
    %2366 = vrot.lane.b32.xlu0 %v2355, 127
    %v2367 = vpop.permute.xlu0 %2366
    %2368 = vrot.lane.b32.xlu0 %v2356, 127
    %v2369 = vpop.permute.xlu0 %2368
    %2370 = vrot.lane.b32.xlu0 %v2357, 127
    %v2371 = vpop.permute.xlu0 %2370
    %2372 = vrot.lane.b32.xlu0 %v2358, 127
    %v2373 = vpop.permute.xlu0 %2372
    %2374 = vrot.lane.b32.xlu0 %v2359, 127
    %v2375 = vpop.permute.xlu0 %2374
    %2376 = vrot.lane.b32.xlu0 %v2360, 127
    %v2377 = vpop.permute.xlu0 %2376
    %2378 = vrot.lane.b32.xlu0 %v2361, 127
    %v2379 = vpop.permute.xlu0 %2378
    %v2380 = vsel %vm1138, %v2363, %v2365
    %v2381 = vsel %vm1138, %v2365, %v2367
    %v2382 = vsel %vm1138, %v2367, %v2369
    %v2383 = vsel %vm1138, %v2369, %v2371
    %v2384 = vsel %vm1138, %v2371, %v2373
    %v2385 = vsel %vm1138, %v2373, %v2375
    %v2386 = vsel %vm1138, %v2375, %v2377
    %v2387 = vsel %vm1138, %v2377, %v2379
    %v2396 = vsel %vm925, %v2380, 0.0
    %v2397 = vsel %vm926, %v2381, 0.0
    %v2398 = vsel %vm927, %v2382, 0.0
    %v2399 = vsel %vm928, %v2383, 0.0
    %v2400 = vsel %vm929, %v2384, 0.0
    %v2401 = vsel %vm930, %v2385, 0.0
    %v2402 = vsel %vm931, %v2386, 0.0
    %v2403 = vsel %vm932, %v2387, 0.0
    %v2412 = vrot.slane %v2396, 4
    %v2413 = vrot.slane %v2397, 4
    %v2414 = vrot.slane %v2398, 4
    %v2415 = vrot.slane %v2399, 4
    %v2416 = vrot.slane %v2400, 4
    %v2417 = vrot.slane %v2401, 4
    %v2418 = vrot.slane %v2402, 4
    %v2419 = vrot.slane %v2403, 4
    %2428 = vst [vmem:[#allocation3 + $0x140] sm:$0xf0] %v2412
    %2429 = vst [vmem:[#allocation3 + $0x148] sm:$0xf0] %v2413
    %2430 = vst [vmem:[#allocation3 + $0x150] sm:$0xf0] %v2414
    %2431 = vst [vmem:[#allocation3 + $0x158] sm:$0xf0] %v2415
    %2432 = vst [vmem:[#allocation3 + $0x160] sm:$0xf0] %v2416
    %2433 = vst [vmem:[#allocation3 + $0x168] sm:$0xf0] %v2417
    %2434 = vst [vmem:[#allocation3 + $0x170] sm:$0xf0] %v2418
    %2435 = vst [vmem:[#allocation3 + $0x178] sm:$0xf0] %v2419
    %v2436 = vld [vmem:[#allocation2 + $0x8] sm:$0xf0]
    %v2437 = vld [vmem:[#allocation2 + $0x10] sm:$0xf0]
    %v2438 = vld [vmem:[#allocation2 + $0x18] sm:$0xf0]
    %v2439 = vld [vmem:[#allocation2 + $0x20] sm:$0xf0]
    %v2440 = vld [vmem:[#allocation2 + $0x28] sm:$0xf0]
    %v2441 = vld [vmem:[#allocation2 + $0x30] sm:$0xf0]
    %v2442 = vld [vmem:[#allocation2 + $0x38] sm:$0xf0]
    %v2443 = vld [vmem:[#allocation2 + $0x40] sm:$0xf0]
    %v2444 = vld [vmem:[#allocation2 + $0x48] sm:$0xf0]
    %v2454 = vrot.slane %v2436, 4
    %v2455 = vrot.slane %v2437, 4
    %v2456 = vrot.slane %v2438, 4
    %v2457 = vrot.slane %v2439, 4
    %v2458 = vrot.slane %v2440, 4
    %v2459 = vrot.slane %v2441, 4
    %v2460 = vrot.slane %v2442, 4
    %v2461 = vrot.slane %v2443, 4
    %v2462 = vrot.slane %v2444, 4
    %2463 = vrot.lane.b32.xlu0 %v2454, 97
    %v2464 = vpop.permute.xlu0 %2463
    %2465 = vrot.lane.b32.xlu0 %v2455, 97
    %v2466 = vpop.permute.xlu0 %2465
    %2467 = vrot.lane.b32.xlu0 %v2456, 97
    %v2468 = vpop.permute.xlu0 %2467
    %2469 = vrot.lane.b32.xlu0 %v2457, 97
    %v2470 = vpop.permute.xlu0 %2469
    %2471 = vrot.lane.b32.xlu0 %v2458, 97
    %v2472 = vpop.permute.xlu0 %2471
    %2473 = vrot.lane.b32.xlu0 %v2459, 97
    %v2474 = vpop.permute.xlu0 %2473
    %2475 = vrot.lane.b32.xlu0 %v2460, 97
    %v2476 = vpop.permute.xlu0 %2475
    %2477 = vrot.lane.b32.xlu0 %v2461, 97
    %v2478 = vpop.permute.xlu0 %2477
    %2479 = vrot.lane.b32.xlu0 %v2462, 97
    %v2480 = vpop.permute.xlu0 %2479
    %v2481 = vsel %vm1231, %v2464, %v2466
    %v2482 = vsel %vm1231, %v2466, %v2468
    %v2483 = vsel %vm1231, %v2468, %v2470
    %v2484 = vsel %vm1231, %v2470, %v2472
    %v2485 = vsel %vm1231, %v2472, %v2474
    %v2486 = vsel %vm1231, %v2474, %v2476
    %v2487 = vsel %vm1231, %v2476, %v2478
    %v2488 = vsel %vm1231, %v2478, %v2480
    %v2497 = vsel %vm770, %v2481, 0.0
    %v2498 = vsel %vm771, %v2482, 0.0
    %v2499 = vsel %vm772, %v2483, 0.0
    %v2500 = vsel %vm773, %v2484, 0.0
    %v2501 = vsel %vm774, %v2485, 0.0
    %v2502 = vsel %vm775, %v2486, 0.0
    %v2503 = vsel %vm776, %v2487, 0.0
    %v2504 = vsel %vm777, %v2488, 0.0
    %2505 = vst [vmem:[#allocation3 + $0x1c0] sm:$0xf] %v2497
    %2506 = vst [vmem:[#allocation3 + $0x1c8] sm:$0xf] %v2498
    %2507 = vst [vmem:[#allocation3 + $0x1d0] sm:$0xf] %v2499
    %2508 = vst [vmem:[#allocation3 + $0x1d8] sm:$0xf] %v2500
    %2509 = vst [vmem:[#allocation3 + $0x1e0] sm:$0xf] %v2501
    %2510 = vst [vmem:[#allocation3 + $0x1e8] sm:$0xf] %v2502
    %2511 = vst [vmem:[#allocation3 + $0x1f0] sm:$0xf] %v2503
    %2512 = vst [vmem:[#allocation3 + $0x1f8] sm:$0xf] %v2504
    %v2513 = vld [vmem:[#allocation2 + $0x8] sm:$0xf0]
    %v2514 = vld [vmem:[#allocation2 + $0x10] sm:$0xf0]
    %v2515 = vld [vmem:[#allocation2 + $0x18] sm:$0xf0]
    %v2516 = vld [vmem:[#allocation2 + $0x20] sm:$0xf0]
    %v2517 = vld [vmem:[#allocation2 + $0x28] sm:$0xf0]
    %v2518 = vld [vmem:[#allocation2 + $0x30] sm:$0xf0]
    %v2519 = vld [vmem:[#allocation2 + $0x38] sm:$0xf0]
    %v2520 = vld [vmem:[#allocation2 + $0x40] sm:$0xf0]
    %v2521 = vld [vmem:[#allocation2 + $0x48] sm:$0xf0]
    %2531 = vrot.lane.b32.xlu0 %v2513, 96
    %v2532 = vpop.permute.xlu0 %2531
    %2533 = vrot.lane.b32.xlu0 %v2514, 96
    %v2534 = vpop.permute.xlu0 %2533
    %2535 = vrot.lane.b32.xlu0 %v2515, 96
    %v2536 = vpop.permute.xlu0 %2535
    %2537 = vrot.lane.b32.xlu0 %v2516, 96
    %v2538 = vpop.permute.xlu0 %2537
    %2539 = vrot.lane.b32.xlu0 %v2517, 96
    %v2540 = vpop.permute.xlu0 %2539
    %2541 = vrot.lane.b32.xlu0 %v2518, 96
    %v2542 = vpop.permute.xlu0 %2541
    %2543 = vrot.lane.b32.xlu0 %v2519, 96
    %v2544 = vpop.permute.xlu0 %2543
    %2545 = vrot.lane.b32.xlu0 %v2520, 96
    %v2546 = vpop.permute.xlu0 %2545
    %2547 = vrot.lane.b32.xlu0 %v2521, 96
    %v2548 = vpop.permute.xlu0 %2547
    %v2549 = vsel %vm1309, %v2532, %v2534
    %v2550 = vsel %vm1309, %v2534, %v2536
    %v2551 = vsel %vm1309, %v2536, %v2538
    %v2552 = vsel %vm1309, %v2538, %v2540
    %v2553 = vsel %vm1309, %v2540, %v2542
    %v2554 = vsel %vm1309, %v2542, %v2544
    %v2555 = vsel %vm1309, %v2544, %v2546
    %v2556 = vsel %vm1309, %v2546, %v2548
    %2565 = vst [vmem:[#allocation3 + $0x1c0] sm:$0xf0] %v2549
    %2566 = vst [vmem:[#allocation3 + $0x1c8] sm:$0xf0] %v2550
    %2567 = vst [vmem:[#allocation3 + $0x1d0] sm:$0xf0] %v2551
    %2568 = vst [vmem:[#allocation3 + $0x1d8] sm:$0xf0] %v2552
    %2569 = vst [vmem:[#allocation3 + $0x1e0] sm:$0xf0] %v2553
    %2570 = vst [vmem:[#allocation3 + $0x1e8] sm:$0xf0] %v2554
    %2571 = vst [vmem:[#allocation3 + $0x1f0] sm:$0xf0] %v2555
    %2572 = vst [vmem:[#allocation3 + $0x1f8] sm:$0xf0] %v2556
    %v2573 = vld [vmem:[#allocation2 + $0x8] sm:$0xf0]
    %v2574 = vld [vmem:[#allocation2 + $0x10] sm:$0xf0]
    %v2575 = vld [vmem:[#allocation2 + $0x18] sm:$0xf0]
    %v2576 = vld [vmem:[#allocation2 + $0x20] sm:$0xf0]
    %v2577 = vld [vmem:[#allocation2 + $0x28] sm:$0xf0]
    %v2578 = vld [vmem:[#allocation2 + $0x30] sm:$0xf0]
    %v2579 = vld [vmem:[#allocation2 + $0x38] sm:$0xf0]
    %v2580 = vld [vmem:[#allocation2 + $0x40] sm:$0xf0]
    %v2581 = vld [vmem:[#allocation2 + $0x48] sm:$0xf0]
    %v2591 = vrot.slane %v2573, 4
    %v2592 = vrot.slane %v2574, 4
    %v2593 = vrot.slane %v2575, 4
    %v2594 = vrot.slane %v2576, 4
    %v2595 = vrot.slane %v2577, 4
    %v2596 = vrot.slane %v2578, 4
    %v2597 = vrot.slane %v2579, 4
    %v2598 = vrot.slane %v2580, 4
    %v2599 = vrot.slane %v2581, 4
    %2600 = vrot.lane.b32.xlu0 %v2591, 95
    %v2601 = vpop.permute.xlu0 %2600
    %2602 = vrot.lane.b32.xlu0 %v2592, 95
    %v2603 = vpop.permute.xlu0 %2602
    %2604 = vrot.lane.b32.xlu0 %v2593, 95
    %v2605 = vpop.permute.xlu0 %2604
    %2606 = vrot.lane.b32.xlu0 %v2594, 95
    %v2607 = vpop.permute.xlu0 %2606
    %2608 = vrot.lane.b32.xlu0 %v2595, 95
    %v2609 = vpop.permute.xlu0 %2608
    %2610 = vrot.lane.b32.xlu0 %v2596, 95
    %v2611 = vpop.permute.xlu0 %2610
    %2612 = vrot.lane.b32.xlu0 %v2597, 95
    %v2613 = vpop.permute.xlu0 %2612
    %2614 = vrot.lane.b32.xlu0 %v2598, 95
    %v2615 = vpop.permute.xlu0 %2614
    %2616 = vrot.lane.b32.xlu0 %v2599, 95
    %v2617 = vpop.permute.xlu0 %2616
    %v2618 = vsel %vm1370, %v2601, %v2603
    %v2619 = vsel %vm1370, %v2603, %v2605
    %v2620 = vsel %vm1370, %v2605, %v2607
    %v2621 = vsel %vm1370, %v2607, %v2609
    %v2622 = vsel %vm1370, %v2609, %v2611
    %v2623 = vsel %vm1370, %v2611, %v2613
    %v2624 = vsel %vm1370, %v2613, %v2615
    %v2625 = vsel %vm1370, %v2615, %v2617
    %v2634 = vsel %vm925, %v2618, 0.0
    %v2635 = vsel %vm926, %v2619, 0.0
    %v2636 = vsel %vm927, %v2620, 0.0
    %v2637 = vsel %vm928, %v2621, 0.0
    %v2638 = vsel %vm929, %v2622, 0.0
    %v2639 = vsel %vm930, %v2623, 0.0
    %v2640 = vsel %vm931, %v2624, 0.0
    %v2641 = vsel %vm932, %v2625, 0.0
    %2642 = vst [vmem:[#allocation3 + $0x240] sm:$0xf] %v2634
    %2643 = vst [vmem:[#allocation3 + $0x248] sm:$0xf] %v2635
    %2644 = vst [vmem:[#allocation3 + $0x250] sm:$0xf] %v2636
    %2645 = vst [vmem:[#allocation3 + $0x258] sm:$0xf] %v2637
    %2646 = vst [vmem:[#allocation3 + $0x260] sm:$0xf] %v2638
    %2647 = vst [vmem:[#allocation3 + $0x268] sm:$0xf] %v2639
    %2648 = vst [vmem:[#allocation3 + $0x270] sm:$0xf] %v2640
    %2649 = vst [vmem:[#allocation3 + $0x278] sm:$0xf] %v2641
    %v2650 = vld [vmem:[%s1] sm:$0xff]
    %v2651 = vld [vmem:[#allocation3] sm:$0xff]
    %v2652 = vld [vmem:[#allocation3 + $0x8] sm:$0xff]
    %v2653 = vld [vmem:[#allocation3 + $0x10] sm:$0xff]
    %v2654 = vld [vmem:[#allocation3 + $0x18] sm:$0xff]
    %v2655 = vld [vmem:[#allocation3 + $0x20] sm:$0xff]
    %v2656 = vld [vmem:[#allocation3 + $0x28] sm:$0xff]
    %v2657 = vld [vmem:[#allocation3 + $0x30] sm:$0xff]
    %v2658 = vld [vmem:[#allocation3 + $0x38] sm:$0xff]
    %v2659 = vld [vmem:[#allocation3 + $0x40] sm:$0xff]
    %v2660 = vld [vmem:[#allocation3 + $0x48] sm:$0xff]
    %v2661 = vld [vmem:[#allocation3 + $0x50] sm:$0xff]
    %v2662 = vld [vmem:[#allocation3 + $0x58] sm:$0xff]
    %v2663 = vld [vmem:[#allocation3 + $0x60] sm:$0xff]
    %v2664 = vld [vmem:[#allocation3 + $0x68] sm:$0xff]
    %v2665 = vld [vmem:[#allocation3 + $0x70] sm:$0xff]
    %v2666 = vld [vmem:[#allocation3 + $0x78] sm:$0xff]
    %v2667 = vld [vmem:[#allocation3 + $0x80] sm:$0xff]
    %v2668 = vld [vmem:[#allocation3 + $0x88] sm:$0xff]
    %v2669 = vld [vmem:[#allocation3 + $0x90] sm:$0xff]
    %v2670 = vld [vmem:[#allocation3 + $0x98] sm:$0xff]
    %v2671 = vld [vmem:[#allocation3 + $0xa0] sm:$0xff]
    %v2672 = vld [vmem:[#allocation3 + $0xa8] sm:$0xff]
    %v2673 = vld [vmem:[#allocation3 + $0xb0] sm:$0xff]
    %v2674 = vld [vmem:[#allocation3 + $0xb8] sm:$0xff]
    %v2675 = vld [vmem:[#allocation3 + $0xc0] sm:$0xff]
    %v2676 = vld [vmem:[#allocation3 + $0xc8] sm:$0xff]
    %v2677 = vld [vmem:[#allocation3 + $0xd0] sm:$0xff]
    %v2678 = vld [vmem:[#allocation3 + $0xd8] sm:$0xff]
    %v2679 = vld [vmem:[#allocation3 + $0xe0] sm:$0xff]
    %v2680 = vld [vmem:[#allocation3 + $0xe8] sm:$0xff]
    %v2681 = vld [vmem:[#allocation3 + $0xf0] sm:$0xff]
    %v2682 = vld [vmem:[#allocation3 + $0xf8] sm:$0xff]
    %v2683 = vld [vmem:[#allocation3 + $0x100] sm:$0xff]
    %v2684 = vld [vmem:[#allocation3 + $0x108] sm:$0xff]
    %v2685 = vld [vmem:[#allocation3 + $0x110] sm:$0xff]
    %v2686 = vld [vmem:[#allocation3 + $0x118] sm:$0xff]
    %v2687 = vld [vmem:[#allocation3 + $0x120] sm:$0xff]
    %v2688 = vld [vmem:[#allocation3 + $0x128] sm:$0xff]
    %v2689 = vld [vmem:[#allocation3 + $0x130] sm:$0xff]
    %v2690 = vld [vmem:[#allocation3 + $0x138] sm:$0xff]
    %v2691 = vld [vmem:[#allocation3 + $0x140] sm:$0xff]
    %v2692 = vld [vmem:[#allocation3 + $0x148] sm:$0xff]
    %v2693 = vld [vmem:[#allocation3 + $0x150] sm:$0xff]
    %v2694 = vld [vmem:[#allocation3 + $0x158] sm:$0xff]
    %v2695 = vld [vmem:[#allocation3 + $0x160] sm:$0xff]
    %v2696 = vld [vmem:[#allocation3 + $0x168] sm:$0xff]
    %v2697 = vld [vmem:[#allocation3 + $0x170] sm:$0xff]
    %v2698 = vld [vmem:[#allocation3 + $0x178] sm:$0xff]
    %v2699 = vld [vmem:[#allocation3 + $0x180] sm:$0xff]
    %v2700 = vld [vmem:[#allocation3 + $0x188] sm:$0xff]
    %v2701 = vld [vmem:[#allocation3 + $0x190] sm:$0xff]
    %v2702 = vld [vmem:[#allocation3 + $0x198] sm:$0xff]
    %v2703 = vld [vmem:[#allocation3 + $0x1a0] sm:$0xff]
    %v2704 = vld [vmem:[#allocation3 + $0x1a8] sm:$0xff]
    %v2705 = vld [vmem:[#allocation3 + $0x1b0] sm:$0xff]
    %v2706 = vld [vmem:[#allocation3 + $0x1b8] sm:$0xff]
    %v2707 = vld [vmem:[#allocation3 + $0x1c0] sm:$0xff]
    %v2708 = vld [vmem:[#allocation3 + $0x1c8] sm:$0xff]
    %v2709 = vld [vmem:[#allocation3 + $0x1d0] sm:$0xff]
    %v2710 = vld [vmem:[#allocation3 + $0x1d8] sm:$0xff]
    %v2711 = vld [vmem:[#allocation3 + $0x1e0] sm:$0xff]
    %v2712 = vld [vmem:[#allocation3 + $0x1e8] sm:$0xff]
    %v2713 = vld [vmem:[#allocation3 + $0x1f0] sm:$0xff]
    %v2714 = vld [vmem:[#allocation3 + $0x1f8] sm:$0xff]
    %v2715 = vld [vmem:[#allocation3 + $0x200] sm:$0xf]
    %v2716 = vld [vmem:[#allocation3 + $0x208] sm:$0xf]
    %v2717 = vld [vmem:[#allocation3 + $0x210] sm:$0xf]
    %v2718 = vld [vmem:[#allocation3 + $0x218] sm:$0xf]
    %v2719 = vld [vmem:[#allocation3 + $0x220] sm:$0xf]
    %v2720 = vld [vmem:[#allocation3 + $0x228] sm:$0xf]
    %v2721 = vld [vmem:[#allocation3 + $0x230] sm:$0xf]
    %v2722 = vld [vmem:[#allocation3 + $0x238] sm:$0xf]
    %v2723 = vld [vmem:[#allocation3 + $0x240] sm:$0xf]
    %v2724 = vld [vmem:[#allocation3 + $0x248] sm:$0xf]
    %v2725 = vld [vmem:[#allocation3 + $0x250] sm:$0xf]
    %v2726 = vld [vmem:[#allocation3 + $0x258] sm:$0xf]
    %v2727 = vld [vmem:[#allocation3 + $0x260] sm:$0xf]
    %v2728 = vld [vmem:[#allocation3 + $0x268] sm:$0xf]
    %v2729 = vld [vmem:[#allocation3 + $0x270] sm:$0xf]
    %v2730 = vld [vmem:[#allocation3 + $0x278] sm:$0xf]
    %v2731 = vld [vmem:[%s2] sm:$0xff]
    %2733 = vset.pattern.permute.xlu0 0
    %2734 = vperm.xlu0 %2733, %v2731
    %v2735 = vpop.permute.xlu0 %2734
    %vm2737 = vcmask 293888
    %v2739 = vsel %vm2737, %v2650, 0
    %vm2741 = vcmask 1043456
    %v2743 = vsel %vm2741, %v2715, 0
    %v2746 = vsel %vm2741, %v2716, 0
    %v2749 = vsel %vm2741, %v2717, 0
    %v2752 = vsel %vm2741, %v2718, 0
    %v2755 = vsel %vm2741, %v2719, 0
    %v2758 = vsel %vm2741, %v2720, 0
    %v2761 = vsel %vm2741, %v2721, 0
    %v2764 = vsel %vm2741, %v2722, 0
    %v2767 = vsel %vm2741, %v2723, 0
    %v2770 = vsel %vm2741, %v2724, 0
    %v2773 = vsel %vm2741, %v2725, 0
    %v2776 = vsel %vm2741, %v2726, 0
    %v2779 = vsel %vm2741, %v2727, 0
    %v2782 = vsel %vm2741, %v2728, 0
    %v2785 = vsel %vm2741, %v2729, 0
    %v2788 = vsel %vm2741, %v2730, 0
    %2790 = vmatprep.subr.mxu0 0.0
    %2791 = vmatpush1.msra.mxu0 0.0
    %2792 = vmatprep.subr.mxu0 0.0
    %2793 = vmatpush1.msra.mxu0 0.0
    %2794 = vmatprep.subr.mxu0 0.0
    %2795 = vmatpush1.msra.mxu0 0.0
    %2796 = vmatprep.subr.mxu0 0.0
    %2797 = vmatpush1.msra.mxu0 0.0
    %2798 = vmatprep.subr.mxu0 0.0
    %2799 = vmatpush1.msra.mxu0 0.0
    %2800 = vmatprep.subr.mxu0 0.0
    %2801 = vmatpush1.msra.mxu0 0.0
    %2802 = vmatprep.subr.mxu0 0.0
    %2803 = vmatpush1.msra.mxu0 0.0
    %2804 = vmatprep.subr.mxu0 0.0
    %2805 = vmatpush1.msra.mxu0 0.0
    %2806 = vmatprep.subr.mxu0 0.0
    %2807 = vmatpush1.msra.mxu0 0.0
    %2808 = vmatprep.subr.mxu0 0.0
    %2809 = vmatpush1.msra.mxu0 0.0
    %2810 = vmatprep.subr.mxu0 0.0
    %2811 = vmatpush1.msra.mxu0 0.0
    %2812 = vmatprep.subr.mxu0 %v2746
    %2813 = vmatpush1.msra.mxu0 %v2743
    %2814 = vmatprep.subr.mxu0 %v2700
    %2815 = vmatpush1.msra.mxu0 %v2699
    %2816 = vmatprep.subr.mxu0 %v2684
    %2817 = vmatpush1.msra.mxu0 %v2683
    %2818 = vmatprep.subr.mxu0 %v2668
    %2819 = vmatpush1.msra.mxu0 %v2667
    %2820 = vmatprep.subr.mxu0 %v2652
    %2821 = vmatpush1.msra.mxu0 %v2651
    %2822 = vmatprep.subr.mxu0 0.0
    %2823 = vmatpush2.msra.mxu0 0.0
    %2824 = vmatprep.subr.mxu0 0.0
    %2825 = vmatpush2.msra.mxu0 0.0
    %2826 = vmatprep.subr.mxu0 0.0
    %2827 = vmatpush2.msra.mxu0 0.0
    %2828 = vmatprep.subr.mxu0 0.0
    %2829 = vmatpush2.msra.mxu0 0.0
    %2830 = vmatprep.subr.mxu0 0.0
    %2831 = vmatpush2.msra.mxu0 0.0
    %2832 = vmatprep.subr.mxu0 0.0
    %2833 = vmatpush2.msra.mxu0 0.0
    %2834 = vmatprep.subr.mxu0 0.0
    %2835 = vmatpush2.msra.mxu0 0.0
    %2836 = vmatprep.subr.mxu0 0.0
    %2837 = vmatpush2.msra.mxu0 0.0
    %2838 = vmatprep.subr.mxu0 0.0
    %2839 = vmatpush2.msra.mxu0 0.0
    %2840 = vmatprep.subr.mxu0 0.0
    %2841 = vmatpush2.msra.mxu0 0.0
    %2842 = vmatprep.subr.mxu0 0.0
    %2843 = vmatpush2.msra.mxu0 0.0
    %2844 = vmatprep.subr.mxu0 0.0
    %2845 = vmatpush2.msra.mxu0 0.0
    %2846 = vmatprep.subr.mxu0 0.0
    %2847 = vmatpush2.msra.mxu0 0.0
    %2848 = vmatprep.subr.mxu0 0.0
    %2849 = vmatpush2.msra.mxu0 0.0
    %2850 = vmatprep.subr.mxu0 0.0
    %2851 = vmatpush2.msra.mxu0 0.0
    %2852 = vmatprep.subr.mxu0 0.0
    %2853 = vmatpush2.msra.mxu0 0.0
    %2854 = vmatprep.mubr.f32.mxu0 0.0
    %2855 = vmatmul.mubr.f32.gmra.mxu0 %v2739
    %v2856 = vpop.f32.mrf.mxu0
    %v2857 = vadd.f32 %v2735, %v2856
    %v2858 = vpop.f32.mrf.mxu0
    %v2859 = vadd.f32 %v2735, %v2858
    %2860 = vdwg.mxu0
    %2861 = vmatprep.subr.mxu0 0.0
    %2862 = vmatpush1.msra.mxu0 0.0
    %2863 = vmatprep.subr.mxu0 0.0
    %2864 = vmatpush1.msra.mxu0 0.0
    %2865 = vmatprep.subr.mxu0 0.0
    %2866 = vmatpush1.msra.mxu0 0.0
    %2867 = vmatprep.subr.mxu0 0.0
    %2868 = vmatpush1.msra.mxu0 0.0
    %2869 = vmatprep.subr.mxu0 0.0
    %2870 = vmatpush1.msra.mxu0 0.0
    %2871 = vmatprep.subr.mxu0 0.0
    %2872 = vmatpush1.msra.mxu0 0.0
    %2873 = vmatprep.subr.mxu0 0.0
    %2874 = vmatpush1.msra.mxu0 0.0
    %2875 = vmatprep.subr.mxu0 0.0
    %2876 = vmatpush1.msra.mxu0 0.0
    %2877 = vmatprep.subr.mxu0 0.0
    %2878 = vmatpush1.msra.mxu0 0.0
    %2879 = vmatprep.subr.mxu0 0.0
    %2880 = vmatpush1.msra.mxu0 0.0
    %2881 = vmatprep.subr.mxu0 0.0
    %2882 = vmatpush1.msra.mxu0 0.0
    %2883 = vmatprep.subr.mxu0 %v2752
    %2884 = vmatpush1.msra.mxu0 %v2749
    %2885 = vmatprep.subr.mxu0 %v2702
    %2886 = vmatpush1.msra.mxu0 %v2701
    %2887 = vmatprep.subr.mxu0 %v2686
    %2888 = vmatpush1.msra.mxu0 %v2685
    %2889 = vmatprep.subr.mxu0 %v2670
    %2890 = vmatpush1.msra.mxu0 %v2669
    %2891 = vmatprep.subr.mxu0 %v2654
    %2892 = vmatpush1.msra.mxu0 %v2653
    %2893 = vmatprep.subr.mxu0 0.0
    %2894 = vmatpush2.msra.mxu0 0.0
    %2895 = vmatprep.subr.mxu0 0.0
    %2896 = vmatpush2.msra.mxu0 0.0
    %2897 = vmatprep.subr.mxu0 0.0
    %2898 = vmatpush2.msra.mxu0 0.0
    %2899 = vmatprep.subr.mxu0 0.0
    %2900 = vmatpush2.msra.mxu0 0.0
    %2901 = vmatprep.subr.mxu0 0.0
    %2902 = vmatpush2.msra.mxu0 0.0
    %2903 = vmatprep.subr.mxu0 0.0
    %2904 = vmatpush2.msra.mxu0 0.0
    %2905 = vmatprep.subr.mxu0 0.0
    %2906 = vmatpush2.msra.mxu0 0.0
    %2907 = vmatprep.subr.mxu0 0.0
    %2908 = vmatpush2.msra.mxu0 0.0
    %2909 = vmatprep.subr.mxu0 0.0
    %2910 = vmatpush2.msra.mxu0 0.0
    %2911 = vmatprep.subr.mxu0 0.0
    %2912 = vmatpush2.msra.mxu0 0.0
    %2913 = vmatprep.subr.mxu0 0.0
    %2914 = vmatpush2.msra.mxu0 0.0
    %2915 = vmatprep.subr.mxu0 0.0
    %2916 = vmatpush2.msra.mxu0 0.0
    %2917 = vmatprep.subr.mxu0 0.0
    %2918 = vmatpush2.msra.mxu0 0.0
    %2919 = vmatprep.subr.mxu0 0.0
    %2920 = vmatpush2.msra.mxu0 0.0
    %2921 = vmatprep.subr.mxu0 0.0
    %2922 = vmatpush2.msra.mxu0 0.0
    %2923 = vmatprep.subr.mxu0 0.0
    %2924 = vmatpush2.msra.mxu0 0.0
    %2925 = vmatprep.mubr.f32.mxu0 0.0
    %2926 = vmatmul.mubr.f32.gmra.mxu0 %v2739
    %v2927 = vpop.f32.mrf.mxu0
    %v2928 = vadd.f32 %v2735, %v2927
    %v2929 = vpop.f32.mrf.mxu0
    %v2930 = vadd.f32 %v2735, %v2929
    %2931 = vdwg.mxu0
    %2932 = vmatprep.subr.mxu0 0.0
    %2933 = vmatpush1.msra.mxu0 0.0
    %2934 = vmatprep.subr.mxu0 0.0
    %2935 = vmatpush1.msra.mxu0 0.0
    %2936 = vmatprep.subr.mxu0 0.0
    %2937 = vmatpush1.msra.mxu0 0.0
    %2938 = vmatprep.subr.mxu0 0.0
    %2939 = vmatpush1.msra.mxu0 0.0
    %2940 = vmatprep.subr.mxu0 0.0
    %2941 = vmatpush1.msra.mxu0 0.0
    %2942 = vmatprep.subr.mxu0 0.0
    %2943 = vmatpush1.msra.mxu0 0.0
    %2944 = vmatprep.subr.mxu0 0.0
    %2945 = vmatpush1.msra.mxu0 0.0
    %2946 = vmatprep.subr.mxu0 0.0
    %2947 = vmatpush1.msra.mxu0 0.0
    %2948 = vmatprep.subr.mxu0 0.0
    %2949 = vmatpush1.msra.mxu0 0.0
    %2950 = vmatprep.subr.mxu0 0.0
    %2951 = vmatpush1.msra.mxu0 0.0
    %2952 = vmatprep.subr.mxu0 0.0
    %2953 = vmatpush1.msra.mxu0 0.0
    %2954 = vmatprep.subr.mxu0 %v2758
    %2955 = vmatpush1.msra.mxu0 %v2755
    %2956 = vmatprep.subr.mxu0 %v2704
    %2957 = vmatpush1.msra.mxu0 %v2703
    %2958 = vmatprep.subr.mxu0 %v2688
    %2959 = vmatpush1.msra.mxu0 %v2687
    %2960 = vmatprep.subr.mxu0 %v2672
    %2961 = vmatpush1.msra.mxu0 %v2671
    %2962 = vmatprep.subr.mxu0 %v2656
    %2963 = vmatpush1.msra.mxu0 %v2655
    %2964 = vmatprep.subr.mxu0 0.0
    %2965 = vmatpush2.msra.mxu0 0.0
    %2966 = vmatprep.subr.mxu0 0.0
    %2967 = vmatpush2.msra.mxu0 0.0
    %2968 = vmatprep.subr.mxu0 0.0
    %2969 = vmatpush2.msra.mxu0 0.0
    %2970 = vmatprep.subr.mxu0 0.0
    %2971 = vmatpush2.msra.mxu0 0.0
    %2972 = vmatprep.subr.mxu0 0.0
    %2973 = vmatpush2.msra.mxu0 0.0
    %2974 = vmatprep.subr.mxu0 0.0
    %2975 = vmatpush2.msra.mxu0 0.0
    %2976 = vmatprep.subr.mxu0 0.0
    %2977 = vmatpush2.msra.mxu0 0.0
    %2978 = vmatprep.subr.mxu0 0.0
    %2979 = vmatpush2.msra.mxu0 0.0
    %2980 = vmatprep.subr.mxu0 0.0
    %2981 = vmatpush2.msra.mxu0 0.0
    %2982 = vmatprep.subr.mxu0 0.0
    %2983 = vmatpush2.msra.mxu0 0.0
    %2984 = vmatprep.subr.mxu0 0.0
    %2985 = vmatpush2.msra.mxu0 0.0
    %2986 = vmatprep.subr.mxu0 0.0
    %2987 = vmatpush2.msra.mxu0 0.0
    %2988 = vmatprep.subr.mxu0 0.0
    %2989 = vmatpush2.msra.mxu0 0.0
    %2990 = vmatprep.subr.mxu0 0.0
    %2991 = vmatpush2.msra.mxu0 0.0
    %2992 = vmatprep.subr.mxu0 0.0
    %2993 = vmatpush2.msra.mxu0 0.0
    %2994 = vmatprep.subr.mxu0 0.0
    %2995 = vmatpush2.msra.mxu0 0.0
    %2996 = vmatprep.mubr.f32.mxu0 0.0
    %2997 = vmatmul.mubr.f32.gmra.mxu0 %v2739
    %v2998 = vpop.f32.mrf.mxu0
    %v2999 = vadd.f32 %v2735, %v2998
    %v3000 = vpop.f32.mrf.mxu0
    %v3001 = vadd.f32 %v2735, %v3000
    %3002 = vdwg.mxu0
    %3003 = vmatprep.subr.mxu0 0.0
    %3004 = vmatpush1.msra.mxu0 0.0
    %3005 = vmatprep.subr.mxu0 0.0
    %3006 = vmatpush1.msra.mxu0 0.0
    %3007 = vmatprep.subr.mxu0 0.0
    %3008 = vmatpush1.msra.mxu0 0.0
    %3009 = vmatprep.subr.mxu0 0.0
    %3010 = vmatpush1.msra.mxu0 0.0
    %3011 = vmatprep.subr.mxu0 0.0
    %3012 = vmatpush1.msra.mxu0 0.0
    %3013 = vmatprep.subr.mxu0 0.0
    %3014 = vmatpush1.msra.mxu0 0.0
    %3015 = vmatprep.subr.mxu0 0.0
    %3016 = vmatpush1.msra.mxu0 0.0
    %3017 = vmatprep.subr.mxu0 0.0
    %3018 = vmatpush1.msra.mxu0 0.0
    %3019 = vmatprep.subr.mxu0 0.0
    %3020 = vmatpush1.msra.mxu0 0.0
    %3021 = vmatprep.subr.mxu0 0.0
    %3022 = vmatpush1.msra.mxu0 0.0
    %3023 = vmatprep.subr.mxu0 0.0
    %3024 = vmatpush1.msra.mxu0 0.0
    %3025 = vmatprep.subr.mxu0 %v2764
    %3026 = vmatpush1.msra.mxu0 %v2761
    %3027 = vmatprep.subr.mxu0 %v2706
    %3028 = vmatpush1.msra.mxu0 %v2705
    %3029 = vmatprep.subr.mxu0 %v2690
    %3030 = vmatpush1.msra.mxu0 %v2689
    %3031 = vmatprep.subr.mxu0 %v2674
    %3032 = vmatpush1.msra.mxu0 %v2673
    %3033 = vmatprep.subr.mxu0 %v2658
    %3034 = vmatpush1.msra.mxu0 %v2657
    %3035 = vmatprep.subr.mxu0 0.0
    %3036 = vmatpush2.msra.mxu0 0.0
    %3037 = vmatprep.subr.mxu0 0.0
    %3038 = vmatpush2.msra.mxu0 0.0
    %3039 = vmatprep.subr.mxu0 0.0
    %3040 = vmatpush2.msra.mxu0 0.0
    %3041 = vmatprep.subr.mxu0 0.0
    %3042 = vmatpush2.msra.mxu0 0.0
    %3043 = vmatprep.subr.mxu0 0.0
    %3044 = vmatpush2.msra.mxu0 0.0
    %3045 = vmatprep.subr.mxu0 0.0
    %3046 = vmatpush2.msra.mxu0 0.0
    %3047 = vmatprep.subr.mxu0 0.0
    %3048 = vmatpush2.msra.mxu0 0.0
    %3049 = vmatprep.subr.mxu0 0.0
    %3050 = vmatpush2.msra.mxu0 0.0
    %3051 = vmatprep.subr.mxu0 0.0
    %3052 = vmatpush2.msra.mxu0 0.0
    %3053 = vmatprep.subr.mxu0 0.0
    %3054 = vmatpush2.msra.mxu0 0.0
    %3055 = vmatprep.subr.mxu0 0.0
    %3056 = vmatpush2.msra.mxu0 0.0
    %3057 = vmatprep.subr.mxu0 0.0
    %3058 = vmatpush2.msra.mxu0 0.0
    %3059 = vmatprep.subr.mxu0 0.0
    %3060 = vmatpush2.msra.mxu0 0.0
    %3061 = vmatprep.subr.mxu0 0.0
    %3062 = vmatpush2.msra.mxu0 0.0
    %3063 = vmatprep.subr.mxu0 0.0
    %3064 = vmatpush2.msra.mxu0 0.0
    %3065 = vmatprep.subr.mxu0 0.0
    %3066 = vmatpush2.msra.mxu0 0.0
    %3067 = vmatprep.mubr.f32.mxu0 0.0
    %3068 = vmatmul.mubr.f32.gmra.mxu0 %v2739
    %v3069 = vpop.f32.mrf.mxu0
    %v3070 = vadd.f32 %v2735, %v3069
    %v3071 = vpop.f32.mrf.mxu0
    %v3072 = vadd.f32 %v2735, %v3071
    %3073 = vdwg.mxu0
    %3074 = vmatprep.subr.mxu0 0.0
    %3075 = vmatpush1.msra.mxu0 0.0
    %3076 = vmatprep.subr.mxu0 0.0
    %3077 = vmatpush1.msra.mxu0 0.0
    %3078 = vmatprep.subr.mxu0 0.0
    %3079 = vmatpush1.msra.mxu0 0.0
    %3080 = vmatprep.subr.mxu0 0.0
    %3081 = vmatpush1.msra.mxu0 0.0
    %3082 = vmatprep.subr.mxu0 0.0
    %3083 = vmatpush1.msra.mxu0 0.0
    %3084 = vmatprep.subr.mxu0 0.0
    %3085 = vmatpush1.msra.mxu0 0.0
    %3086 = vmatprep.subr.mxu0 0.0
    %3087 = vmatpush1.msra.mxu0 0.0
    %3088 = vmatprep.subr.mxu0 0.0
    %3089 = vmatpush1.msra.mxu0 0.0
    %3090 = vmatprep.subr.mxu0 0.0
    %3091 = vmatpush1.msra.mxu0 0.0
    %3092 = vmatprep.subr.mxu0 0.0
    %3093 = vmatpush1.msra.mxu0 0.0
    %3094 = vmatprep.subr.mxu0 0.0
    %3095 = vmatpush1.msra.mxu0 0.0
    %3096 = vmatprep.subr.mxu0 %v2770
    %3097 = vmatpush1.msra.mxu0 %v2767
    %3098 = vmatprep.subr.mxu0 %v2708
    %3099 = vmatpush1.msra.mxu0 %v2707
    %3100 = vmatprep.subr.mxu0 %v2692
    %3101 = vmatpush1.msra.mxu0 %v2691
    %3102 = vmatprep.subr.mxu0 %v2676
    %3103 = vmatpush1.msra.mxu0 %v2675
    %3104 = vmatprep.subr.mxu0 %v2660
    %3105 = vmatpush1.msra.mxu0 %v2659
    %3106 = vmatprep.subr.mxu0 0.0
    %3107 = vmatpush2.msra.mxu0 0.0
    %3108 = vmatprep.subr.mxu0 0.0
    %3109 = vmatpush2.msra.mxu0 0.0
    %3110 = vmatprep.subr.mxu0 0.0
    %3111 = vmatpush2.msra.mxu0 0.0
    %3112 = vmatprep.subr.mxu0 0.0
    %3113 = vmatpush2.msra.mxu0 0.0
    %3114 = vmatprep.subr.mxu0 0.0
    %3115 = vmatpush2.msra.mxu0 0.0
    %3116 = vmatprep.subr.mxu0 0.0
    %3117 = vmatpush2.msra.mxu0 0.0
    %3118 = vmatprep.subr.mxu0 0.0
    %3119 = vmatpush2.msra.mxu0 0.0
    %3120 = vmatprep.subr.mxu0 0.0
    %3121 = vmatpush2.msra.mxu0 0.0
    %3122 = vmatprep.subr.mxu0 0.0
    %3123 = vmatpush2.msra.mxu0 0.0
    %3124 = vmatprep.subr.mxu0 0.0
    %3125 = vmatpush2.msra.mxu0 0.0
    %3126 = vmatprep.subr.mxu0 0.0
    %3127 = vmatpush2.msra.mxu0 0.0
    %3128 = vmatprep.subr.mxu0 0.0
    %3129 = vmatpush2.msra.mxu0 0.0
    %3130 = vmatprep.subr.mxu0 0.0
    %3131 = vmatpush2.msra.mxu0 0.0
    %3132 = vmatprep.subr.mxu0 0.0
    %3133 = vmatpush2.msra.mxu0 0.0
    %3134 = vmatprep.subr.mxu0 0.0
    %3135 = vmatpush2.msra.mxu0 0.0
    %3136 = vmatprep.subr.mxu0 0.0
    %3137 = vmatpush2.msra.mxu0 0.0
    %3138 = vmatprep.mubr.f32.mxu0 0.0
    %3139 = vmatmul.mubr.f32.gmra.mxu0 %v2739
    %v3140 = vpop.f32.mrf.mxu0
    %v3141 = vadd.f32 %v2735, %v3140
    %v3142 = vpop.f32.mrf.mxu0
    %v3143 = vadd.f32 %v2735, %v3142
    %3144 = vdwg.mxu0
    %3145 = vmatprep.subr.mxu0 0.0
    %3146 = vmatpush1.msra.mxu0 0.0
    %3147 = vmatprep.subr.mxu0 0.0
    %3148 = vmatpush1.msra.mxu0 0.0
    %3149 = vmatprep.subr.mxu0 0.0
    %3150 = vmatpush1.msra.mxu0 0.0
    %3151 = vmatprep.subr.mxu0 0.0
    %3152 = vmatpush1.msra.mxu0 0.0
    %3153 = vmatprep.subr.mxu0 0.0
    %3154 = vmatpush1.msra.mxu0 0.0
    %3155 = vmatprep.subr.mxu0 0.0
    %3156 = vmatpush1.msra.mxu0 0.0
    %3157 = vmatprep.subr.mxu0 0.0
    %3158 = vmatpush1.msra.mxu0 0.0
    %3159 = vmatprep.subr.mxu0 0.0
    %3160 = vmatpush1.msra.mxu0 0.0
    %3161 = vmatprep.subr.mxu0 0.0
    %3162 = vmatpush1.msra.mxu0 0.0
    %3163 = vmatprep.subr.mxu0 0.0
    %3164 = vmatpush1.msra.mxu0 0.0
    %3165 = vmatprep.subr.mxu0 0.0
    %3166 = vmatpush1.msra.mxu0 0.0
    %3167 = vmatprep.subr.mxu0 %v2776
    %3168 = vmatpush1.msra.mxu0 %v2773
    %3169 = vmatprep.subr.mxu0 %v2710
    %3170 = vmatpush1.msra.mxu0 %v2709
    %3171 = vmatprep.subr.mxu0 %v2694
    %3172 = vmatpush1.msra.mxu0 %v2693
    %3173 = vmatprep.subr.mxu0 %v2678
    %3174 = vmatpush1.msra.mxu0 %v2677
    %3175 = vmatprep.subr.mxu0 %v2662
    %3176 = vmatpush1.msra.mxu0 %v2661
    %3177 = vmatprep.subr.mxu0 0.0
    %3178 = vmatpush2.msra.mxu0 0.0
    %3179 = vmatprep.subr.mxu0 0.0
    %3180 = vmatpush2.msra.mxu0 0.0
    %3181 = vmatprep.subr.mxu0 0.0
    %3182 = vmatpush2.msra.mxu0 0.0
    %3183 = vmatprep.subr.mxu0 0.0
    %3184 = vmatpush2.msra.mxu0 0.0
    %3185 = vmatprep.subr.mxu0 0.0
    %3186 = vmatpush2.msra.mxu0 0.0
    %3187 = vmatprep.subr.mxu0 0.0
    %3188 = vmatpush2.msra.mxu0 0.0
    %3189 = vmatprep.subr.mxu0 0.0
    %3190 = vmatpush2.msra.mxu0 0.0
    %3191 = vmatprep.subr.mxu0 0.0
    %3192 = vmatpush2.msra.mxu0 0.0
    %3193 = vmatprep.subr.mxu0 0.0
    %3194 = vmatpush2.msra.mxu0 0.0
    %3195 = vmatprep.subr.mxu0 0.0
    %3196 = vmatpush2.msra.mxu0 0.0
    %3197 = vmatprep.subr.mxu0 0.0
    %3198 = vmatpush2.msra.mxu0 0.0
    %3199 = vmatprep.subr.mxu0 0.0
    %3200 = vmatpush2.msra.mxu0 0.0
    %3201 = vmatprep.subr.mxu0 0.0
    %3202 = vmatpush2.msra.mxu0 0.0
    %3203 = vmatprep.subr.mxu0 0.0
    %3204 = vmatpush2.msra.mxu0 0.0
    %3205 = vmatprep.subr.mxu0 0.0
    %3206 = vmatpush2.msra.mxu0 0.0
    %3207 = vmatprep.subr.mxu0 0.0
    %3208 = vmatpush2.msra.mxu0 0.0
    %3209 = vmatprep.mubr.f32.mxu0 0.0
    %3210 = vmatmul.mubr.f32.gmra.mxu0 %v2739
    %v3211 = vpop.f32.mrf.mxu0
    %v3212 = vadd.f32 %v2735, %v3211
    %v3213 = vpop.f32.mrf.mxu0
    %v3214 = vadd.f32 %v2735, %v3213
    %3215 = vdwg.mxu0
    %3216 = vmatprep.subr.mxu0 0.0
    %3217 = vmatpush1.msra.mxu0 0.0
    %3218 = vmatprep.subr.mxu0 0.0
    %3219 = vmatpush1.msra.mxu0 0.0
    %3220 = vmatprep.subr.mxu0 0.0
    %3221 = vmatpush1.msra.mxu0 0.0
    %3222 = vmatprep.subr.mxu0 0.0
    %3223 = vmatpush1.msra.mxu0 0.0
    %3224 = vmatprep.subr.mxu0 0.0
    %3225 = vmatpush1.msra.mxu0 0.0
    %3226 = vmatprep.subr.mxu0 0.0
    %3227 = vmatpush1.msra.mxu0 0.0
    %3228 = vmatprep.subr.mxu0 0.0
    %3229 = vmatpush1.msra.mxu0 0.0
    %3230 = vmatprep.subr.mxu0 0.0
    %3231 = vmatpush1.msra.mxu0 0.0
    %3232 = vmatprep.subr.mxu0 0.0
    %3233 = vmatpush1.msra.mxu0 0.0
    %3234 = vmatprep.subr.mxu0 0.0
    %3235 = vmatpush1.msra.mxu0 0.0
    %3236 = vmatprep.subr.mxu0 0.0
    %3237 = vmatpush1.msra.mxu0 0.0
    %3238 = vmatprep.subr.mxu0 %v2782
    %3239 = vmatpush1.msra.mxu0 %v2779
    %3240 = vmatprep.subr.mxu0 %v2712
    %3241 = vmatpush1.msra.mxu0 %v2711
    %3242 = vmatprep.subr.mxu0 %v2696
    %3243 = vmatpush1.msra.mxu0 %v2695
    %3244 = vmatprep.subr.mxu0 %v2680
    %3245 = vmatpush1.msra.mxu0 %v2679
    %3246 = vmatprep.subr.mxu0 %v2664
    %3247 = vmatpush1.msra.mxu0 %v2663
    %3248 = vmatprep.subr.mxu0 0.0
    %3249 = vmatpush2.msra.mxu0 0.0
    %3250 = vmatprep.subr.mxu0 0.0
    %3251 = vmatpush2.msra.mxu0 0.0
    %3252 = vmatprep.subr.mxu0 0.0
    %3253 = vmatpush2.msra.mxu0 0.0
    %3254 = vmatprep.subr.mxu0 0.0
    %3255 = vmatpush2.msra.mxu0 0.0
    %3256 = vmatprep.subr.mxu0 0.0
    %3257 = vmatpush2.msra.mxu0 0.0
    %3258 = vmatprep.subr.mxu0 0.0
    %3259 = vmatpush2.msra.mxu0 0.0
    %3260 = vmatprep.subr.mxu0 0.0
    %3261 = vmatpush2.msra.mxu0 0.0
    %3262 = vmatprep.subr.mxu0 0.0
    %3263 = vmatpush2.msra.mxu0 0.0
    %3264 = vmatprep.subr.mxu0 0.0
    %3265 = vmatpush2.msra.mxu0 0.0
    %3266 = vmatprep.subr.mxu0 0.0
    %3267 = vmatpush2.msra.mxu0 0.0
    %3268 = vmatprep.subr.mxu0 0.0
    %3269 = vmatpush2.msra.mxu0 0.0
    %3270 = vmatprep.subr.mxu0 0.0
    %3271 = vmatpush2.msra.mxu0 0.0
    %3272 = vmatprep.subr.mxu0 0.0
    %3273 = vmatpush2.msra.mxu0 0.0
    %3274 = vmatprep.subr.mxu0 0.0
    %3275 = vmatpush2.msra.mxu0 0.0
    %3276 = vmatprep.subr.mxu0 0.0
    %3277 = vmatpush2.msra.mxu0 0.0
    %3278 = vmatprep.subr.mxu0 0.0
    %3279 = vmatpush2.msra.mxu0 0.0
    %3280 = vmatprep.mubr.f32.mxu0 0.0
    %3281 = vmatmul.mubr.f32.gmra.mxu0 %v2739
    %v3282 = vpop.f32.mrf.mxu0
    %v3283 = vadd.f32 %v2735, %v3282
    %v3284 = vpop.f32.mrf.mxu0
    %v3285 = vadd.f32 %v2735, %v3284
    %3286 = vdwg.mxu0
    %3287 = vmatprep.subr.mxu0 0.0
    %3288 = vmatpush1.msra.mxu0 0.0
    %3289 = vmatprep.subr.mxu0 0.0
    %3290 = vmatpush1.msra.mxu0 0.0
    %3291 = vmatprep.subr.mxu0 0.0
    %3292 = vmatpush1.msra.mxu0 0.0
    %3293 = vmatprep.subr.mxu0 0.0
    %3294 = vmatpush1.msra.mxu0 0.0
    %3295 = vmatprep.subr.mxu0 0.0
    %3296 = vmatpush1.msra.mxu0 0.0
    %3297 = vmatprep.subr.mxu0 0.0
    %3298 = vmatpush1.msra.mxu0 0.0
    %3299 = vmatprep.subr.mxu0 0.0
    %3300 = vmatpush1.msra.mxu0 0.0
    %3301 = vmatprep.subr.mxu0 0.0
    %3302 = vmatpush1.msra.mxu0 0.0
    %3303 = vmatprep.subr.mxu0 0.0
    %3304 = vmatpush1.msra.mxu0 0.0
    %3305 = vmatprep.subr.mxu0 0.0
    %3306 = vmatpush1.msra.mxu0 0.0
    %3307 = vmatprep.subr.mxu0 0.0
    %3308 = vmatpush1.msra.mxu0 0.0
    %3309 = vmatprep.subr.mxu0 %v2788
    %3310 = vmatpush1.msra.mxu0 %v2785
    %3311 = vmatprep.subr.mxu0 %v2714
    %3312 = vmatpush1.msra.mxu0 %v2713
    %3313 = vmatprep.subr.mxu0 %v2698
    %3314 = vmatpush1.msra.mxu0 %v2697
    %3315 = vmatprep.subr.mxu0 %v2682
    %3316 = vmatpush1.msra.mxu0 %v2681
    %3317 = vmatprep.subr.mxu0 %v2666
    %3318 = vmatpush1.msra.mxu0 %v2665
    %3319 = vmatprep.subr.mxu0 0.0
    %3320 = vmatpush2.msra.mxu0 0.0
    %3321 = vmatprep.subr.mxu0 0.0
    %3322 = vmatpush2.msra.mxu0 0.0
    %3323 = vmatprep.subr.mxu0 0.0
    %3324 = vmatpush2.msra.mxu0 0.0
    %3325 = vmatprep.subr.mxu0 0.0
    %3326 = vmatpush2.msra.mxu0 0.0
    %3327 = vmatprep.subr.mxu0 0.0
    %3328 = vmatpush2.msra.mxu0 0.0
    %3329 = vmatprep.subr.mxu0 0.0
    %3330 = vmatpush2.msra.mxu0 0.0
    %3331 = vmatprep.subr.mxu0 0.0
    %3332 = vmatpush2.msra.mxu0 0.0
    %3333 = vmatprep.subr.mxu0 0.0
    %3334 = vmatpush2.msra.mxu0 0.0
    %3335 = vmatprep.subr.mxu0 0.0
    %3336 = vmatpush2.msra.mxu0 0.0
    %3337 = vmatprep.subr.mxu0 0.0
    %3338 = vmatpush2.msra.mxu0 0.0
    %3339 = vmatprep.subr.mxu0 0.0
    %3340 = vmatpush2.msra.mxu0 0.0
    %3341 = vmatprep.subr.mxu0 0.0
    %3342 = vmatpush2.msra.mxu0 0.0
    %3343 = vmatprep.subr.mxu0 0.0
    %3344 = vmatpush2.msra.mxu0 0.0
    %3345 = vmatprep.subr.mxu0 0.0
    %3346 = vmatpush2.msra.mxu0 0.0
    %3347 = vmatprep.subr.mxu0 0.0
    %3348 = vmatpush2.msra.mxu0 0.0
    %3349 = vmatprep.subr.mxu0 0.0
    %3350 = vmatpush2.msra.mxu0 0.0
    %3351 = vmatprep.mubr.f32.mxu0 0.0
    %3352 = vmatmul.mubr.f32.gmra.mxu0 %v2739
    %v3353 = vpop.f32.mrf.mxu0
    %v3354 = vadd.f32 %v2735, %v3353
    %v3355 = vpop.f32.mrf.mxu0
    %v3356 = vadd.f32 %v2735, %v3355
    %3357 = vdwg.mxu0
    %3358 = vst [vmem:[#allocation9] sm:$0xff] %v2857
    %3359 = vst [vmem:[#allocation9 + $0x8] sm:$0xff] %v2859
    %3360 = vst [vmem:[#allocation9 + $0x10] sm:$0xff] %v2928
    %3361 = vst [vmem:[#allocation9 + $0x18] sm:$0xff] %v2930
    %3362 = vst [vmem:[#allocation9 + $0x20] sm:$0xff] %v2999
    %3363 = vst [vmem:[#allocation9 + $0x28] sm:$0xff] %v3001
    %3364 = vst [vmem:[#allocation9 + $0x30] sm:$0xff] %v3070
    %3365 = vst [vmem:[#allocation9 + $0x38] sm:$0xff] %v3072
    %s3366 = scalar_lea.vmem [#allocation9], 64
    %3367 = vst [vmem:[%s3366] sm:$0xff] %v3141
    %3368 = vst [vmem:[%s3366 + $0x8] sm:$0xff] %v3143
    %3369 = vst [vmem:[%s3366 + $0x10] sm:$0xff] %v3212
    %3370 = vst [vmem:[%s3366 + $0x18] sm:$0xff] %v3214
    %3371 = vst [vmem:[%s3366 + $0x20] sm:$0xff] %v3283
    %3372 = vst [vmem:[%s3366 + $0x28] sm:$0xff] %v3285
    %3373 = vst [vmem:[%s3366 + $0x30] sm:$0xff] %v3354
    %3374 = vst [vmem:[%s3366 + $0x38] sm:$0xff] %v3356
    // Predicated region
    $region26: #{tpu_custom_call.1} parent=1 // pred_check
      _
    $region27: #{tpu_custom_call.1} parent=1 // pred_check_branch
      %3376 = sbr.rel (0) target = $region29
    $region28: #{tpu_custom_call.1} parent=1 // pred_region
      %s3378 = ssub.s32 2048, 2048
      %3379 = vsyncadd [#allocation6], %s3378
      %s3380 = sshll.u32 [#allocation9], 4
      %s3381 = int_to_ptr.vmem [resolvable:$true] %s3380
      %3386 = dma.vmem_to_hbm [thread:$0]  %s3381, 2048, %s4, [#allocation6], 1024, 1024, 64
    $region29: #{tpu_custom_call.1} parent=1 // pred_fallthru
      _
    // Predicated region
    $region30: #{tpu_custom_call.1} parent=1 // pred_check
      _
    $region31: #{tpu_custom_call.1} parent=1 // pred_check_branch
      %3388 = sbr.rel (0) target = $region33
    $region32: #{tpu_custom_call.1} parent=1 // pred_region
      %3389 = dma.done [#allocation6], 2048
    $region33: #{tpu_custom_call.1} parent=1 // pred_fallthru
      _
    %3390 = vsyncpa [#allocation5], 1
    %3391 = vsyncpa [#allocation8], 1
    %3392 = vsyncpa [#allocation6], 1

</llo_original>
